<compile_context>
chip_gen: v6e
topology: v6e:2x2x1
jax: 0.10.0
libtpu: 0.0.40
codegen_flags: <defaults>
</compile_context>

<pallas_src>
import math
from functools import partial

import jax
import jax.numpy as jnp
from jax.experimental import pallas as pl
from jax.experimental.pallas import tpu as pltpu

# ------------------------- small model config -------------------------
N_VOCAB = 64
N_EMBD = 32          # hidden
N_HEAD = 4           # hidden % n_head == 0 -> head_dim = 8
N_LAYER = 2
CHUNK_SIZE = 16      # block_size (max sequence length)
WEIGHT_SPARSITY = 0.2
PERCENT_ON = 0.2
LN_EPS = 1e-5

BATCH = 2
SEQ = 8

HEAD_DIM = N_EMBD // N_HEAD
# KWinners k (training-mode / zero duty-cycle): k = round(n * percent_on)
K_MLP1 = int(round(4 * N_EMBD * PERCENT_ON))   # 26 of 128
K_MLP2 = int(round(N_EMBD * PERCENT_ON))       # 6 of 32

LANE = 128           # lane-dense padding width (>= C + V = 96, >= 3C = 96, = 4C)
NEG_INF = -1e30      # additive causal mask / suppression value

# Row layout of the per-layer packed vector bundle, shape (8, LANE):
ROW_LN1_G, ROW_LN1_B, ROW_LN2_G, ROW_LN2_B = 0, 1, 2, 3
ROW_BP, ROW_B2, ROW_B1, ROW_BQKV = 4, 5, 6, 7


# --------------------- shared math (kernel + JAX reference) ---------------------
def _layernorm(x, g, b):
    mu = jnp.mean(x, axis=-1, keepdims=True)
    var = jnp.mean((x - mu) ** 2, axis=-1, keepdims=True)
    return (x - mu) * jax.lax.rsqrt(var + LN_EPS) * g + b


def _gelu(x):
    # exact (erf-based) GELU, matching nn.GELU() default
    return 0.5 * x * (1.0 + jax.lax.erf(x / math.sqrt(2.0)))


def _kwinners_kernel(z, k):
    """Per-row top-k keep via a k-th-largest threshold (used INSIDE the kernel).

    Iterative max-suppress: k-1 cross-lane max reductions + selects replace the old
    O(M*N^2) rank trick (no (M,N,N) temp, ~15-20x less VALU/XLU work).
    NOTE: ties at the k-th value all survive (measure-zero with continuous data;
    PyTorch topk tie-breaking can differ).
    """
    zz = z
    for _ in range(k - 1):                                   # static unroll (k<=26)
        m = jnp.max(zz, axis=-1, keepdims=True)
        zz = jnp.where(zz >= m, NEG_INF, zz)
    t = jnp.max(zz, axis=-1, keepdims=True)                  # k-th largest per row
    return jnp.where(z >= t, z, 0.0)


def _kwinners_ref(z, k):
    """Reference-only KWinners (rank trick) -- keeps the pure-JAX check independent."""
    gt = (z[:, None, :] > z[:, :, None]).astype(jnp.float32)   # (M, N, N)
    counts = jnp.sum(gt, axis=-1)                              # (M, N)
    return jnp.where(counts < k, z, 0.0)


# ------------------------------ Pallas kernel ------------------------------
def _kernel_block(x, vecs, wqkv_t, wp_t, w1_t, w2_t, amask, *, B, T, n_head):
    """One SparseBlock on a flat (M, C) activation slab.

    vecs:   (8, LANE) packed LN params / biases (see ROW_* layout), f32
    wqkv_t: (C, LANE) = [Wq^T | Wk^T | Wv^T | 0]
    wp_t:   (C, C)    = Wproj^T
    w1_t:   (C, 4C),  w2_t: (4C, C)  (pre-transposed MLP weights)
    amask:  (1, T, T) additive causal mask (0 / -1e30), built once by the caller
    """
    M, C = x.shape
    Dh = C // n_head
    scale = 1.0 / math.sqrt(Dh)

    # --- causal multi-head self-attention ---
    h = _layernorm(x, vecs[ROW_LN1_G:ROW_LN1_G + 1, :C], vecs[ROW_LN1_B:ROW_LN1_B + 1, :C])
    # fused QKV: one (M,C)x(C,128) MXU push; padding columns are zero and unused.
    qkv = jnp.dot(h, wqkv_t, preferred_element_type=jnp.float32) \
        + vecs[ROW_BQKV:ROW_BQKV + 1, :]

    # Per-head scores/softmax/context are tiny ((B,T,T) with T=8); contexts are
    # lane-concatenated so the output projection is ONE full-depth (M,C)x(C,C) push.
    ctx_heads = []
    for hh in range(n_head):                     # static loop, n_head = 4
        lo = hh * Dh
        qh = qkv[:, lo:lo + Dh].reshape(B, T, Dh)
        kh = qkv[:, C + lo:C + lo + Dh].reshape(B, T, Dh)
        vh = qkv[:, 2 * C + lo:2 * C + lo + Dh].reshape(B, T, Dh)
        att = jnp.einsum('btd,bsd->bts', qh, kh,
                         preferred_element_type=jnp.float32) * scale + amask
        att = att - jnp.max(att, axis=-1, keepdims=True)
        p = jnp.exp(att)
        p = p / jnp.sum(p, axis=-1, keepdims=True)        # exact softmax (matches ref)
        ctx_heads.append(jnp.einsum('bts,bsd->btd', p, vh,
                                    preferred_element_type=jnp.float32).reshape(M, Dh))
    ctx = jnp.concatenate(ctx_heads, axis=-1)             # (M, C)
    x1 = x + jnp.dot(ctx, wp_t, preferred_element_type=jnp.float32) \
        + vecs[ROW_BP:ROW_BP + 1, :C]

    # --- MLP: SparseKWLinear -> GELU -> SparseKWLinear (dropout p=0) ---
    h2 = _layernorm(x1, vecs[ROW_LN2_G:ROW_LN2_G + 1, :C], vecs[ROW_LN2_B:ROW_LN2_B + 1, :C])
    z1 = jnp.dot(h2, w1_t, preferred_element_type=jnp.float32) + vecs[ROW_B1:ROW_B1 + 1, :]
    z1 = _gelu(_kwinners_kernel(z1, K_MLP1))
    z2 = jnp.dot(z1, w2_t, preferred_element_type=jnp.float32) + vecs[ROW_B2:ROW_B2 + 1, :C]
    z2 = _kwinners_kernel(z2, K_MLP2)
    return x1 + z2


def sparse_gpt_kernel(idx_ref, wte_ref, pos_ref, vecs_ref, wqkv_ref, wp_ref,
                      w1_ref, w2_ref, wout_ref, out_ref,
                      *, B, T, C, V, n_layer, n_head):
    """Fully fused forward: embedding + all blocks + final LN + packed head, one launch."""
    M = B * T

    # --- embedding folded in: one-hot token gather on the MXU + positional add ---
    tok_oh = (jax.lax.broadcasted_iota(jnp.int32, (M, V), 1)
              == idx_ref[...]).astype(jnp.float32)                       # (M, V)
    x = jnp.dot(tok_oh, wte_ref[...].astype(jnp.float32),
                preferred_element_type=jnp.float32)                      # (M, C)
    x = (x.reshape(B, T, C) + pos_ref[0:T, :]).reshape(M, C)

    # --- additive causal mask, built ONCE (hoisted out of the layer unroll) ---
    row = jax.lax.broadcasted_iota(jnp.int32, (T, T), 0)
    col = jax.lax.broadcasted_iota(jnp.int32, (T, T), 1)
    amask = jnp.where(col <= row, 0.0, NEG_INF)[None, :, :]              # (1, T, T)

    for l in range(n_layer):                     # static unroll over layers
        x = _kernel_block(
            x, vecs_ref[l],
            wqkv_ref[l].astype(jnp.float32), wp_ref[l].astype(jnp.float32),
            w1_ref[l].astype(jnp.float32), w2_ref[l].astype(jnp.float32),
            amask, B=B, T=T, n_head=n_head)

    lnf = vecs_ref[n_layer]
    z = _layernorm(x, lnf[ROW_LN1_G:ROW_LN1_G + 1, :C], lnf[ROW_LN1_B:ROW_LN1_B + 1, :C])
    # wout = [ I_C | W_head^T | 0 ]  ->  one unmasked lane-dense (M, 128) store carrying
    # both z (identity matmul) and the logits; the wrapper slices them apart.
    out_ref[...] = jnp.dot(z, wout_ref[...].astype(jnp.float32),
                           preferred_element_type=jnp.float32)


def _full_spec(shape):
    nd = len(shape)
    return pl.BlockSpec(shape, lambda i, _nd=nd: (0,) * _nd)


def sparse_gpt_forward(packed, idx):
    """Pallas-backed forward. Returns {'logits': (B,T,V), 'z': (B,T,C)}."""
    B, T = idx.shape
    C, V = N_EMBD, N_VOCAB
    assert T <= CHUNK_SIZE, "Cannot forward, model block size is exhausted."
    M = B * T
    idx2 = idx.reshape(M, 1).astype(jnp.int32)      # lane-1 int column for the kernel

    args = (idx2, packed['wte'], packed['pos'], packed['vecs'], packed['wqkv_t'],
            packed['wp_t'], packed['w1_t'], packed['w2_t'], packed['w_out'])
    out = pl.pallas_call(
        partial(sparse_gpt_kernel, B=B, T=T, C=C, V=V, n_layer=N_LAYER, n_head=N_HEAD),
        out_shape=jax.ShapeDtypeStruct((M, LANE), jnp.float32),
        # TODO(synk): if B*T grows beyond a few hundred rows, switch to a parallel grid
        # over M ((TILE_M, C)/(TILE_M, LANE) activation blocks, weights resident) so the
        # DMA pipeline and v7x's two TensorCores are used; at M=16 a single step is best.
        grid=(1,),
        in_specs=[_full_spec(a.shape) for a in args],
        out_specs=_full_spec((M, LANE)),
        compiler_params=pltpu.CompilerParams(dimension_semantics=("arbitrary",)),
    )(*args)

    z = out[:, :C].reshape(B, T, C)
    logits = out[:, C:C + V].reshape(B, T, V)
    return {'logits': logits, 'z': z}


# ------------------------------ parameters ------------------------------
def _bf16_round(w):
    """Round to bf16-representable values (so bf16 packing of weights is lossless)."""
    return w.astype(jnp.bfloat16).astype(jnp.float32)


def _sparse_linear_weight(key, out_f, in_f, sparsity):
    """SparseWeights(nn.Linear): zero `round(sparsity*fan_in)` weights per output unit."""
    kw, km = jax.random.split(key)
    w = jax.random.normal(kw, (out_f, in_f), jnp.float32) * 0.02
    n_zero = int(round(sparsity * in_f))
    scores = jax.random.uniform(km, (out_f, in_f))
    ranks = jnp.argsort(jnp.argsort(scores, axis=-1), axis=-1)
    mask = (ranks >= n_zero).astype(jnp.float32)
    return _bf16_round(w * mask)


def init_params(key):
    """PyTorch-layout params ([out,in] weights, (1,C) biases) — reference ground truth.
    Matmul weights are rounded to bf16-representable values at init (pure init choice;
    forward semantics are unchanged and the reference still computes in f32)."""
    keys = iter(jax.random.split(key, 128))
    nk = lambda: next(keys)
    C = N_EMBD
    params = {
        'wte': _bf16_round(jax.random.normal(nk(), (N_VOCAB, C), jnp.float32) * 0.02),
        'pos_emb': jnp.zeros((1, CHUNK_SIZE, C), jnp.float32),   # torch.zeros init
        'lnf_g': jnp.ones((1, C), jnp.float32),
        'lnf_b': jnp.zeros((1, C), jnp.float32),
        'w_head': _bf16_round(jax.random.normal(nk(), (N_VOCAB, C), jnp.float32) * 0.02),
        'blocks': [],
    }
    for _ in range(N_LAYER):
        blk = dict(
            ln1_g=jnp.ones((1, C), jnp.float32), ln1_b=jnp.zeros((1, C), jnp.float32),
            ln2_g=jnp.ones((1, C), jnp.float32), ln2_b=jnp.zeros((1, C), jnp.float32),
            wq=_sparse_linear_weight(nk(), C, C, WEIGHT_SPARSITY),
            bq=jax.random.normal(nk(), (1, C), jnp.float32) * 0.02,
            wk=_sparse_linear_weight(nk(), C, C, WEIGHT_SPARSITY),
            bk=jax.random.normal(nk(), (1, C), jnp.float32) * 0.02,
            wv=_sparse_linear_weight(nk(), C, C, WEIGHT_SPARSITY),
            bv=jax.random.normal(nk(), (1, C), jnp.float32) * 0.02,
            wp=_bf16_round(jax.random.normal(nk(), (C, C), jnp.float32) * 0.02),  # dense proj
            bp=jax.random.normal(nk(), (1, C), jnp.float32) * 0.02,
            w1=_sparse_linear_weight(nk(), 4 * C, C, WEIGHT_SPARSITY),
            b1=jax.random.normal(nk(), (1, 4 * C), jnp.float32) * 0.02,
            w2=_sparse_linear_weight(nk(), C, 4 * C, WEIGHT_SPARSITY),
            b2=jax.random.normal(nk(), (1, C), jnp.float32) * 0.02,
        )
        params['blocks'].append(blk)
    return params


def pack_params(params):
    """Host-side packing: pre-transpose weights, fuse QKV, bundle small vectors.
    Matmul weights are stored as bf16 (lossless after init rounding) to halve weight DMA;
    LN params / biases stay f32 in one lane-dense bundle."""
    C, V, L = N_EMBD, N_VOCAB, N_LAYER
    vecs = jnp.zeros((L + 1, 8, LANE), jnp.float32)
    wqkv_t = jnp.zeros((L, C, LANE), jnp.float32)
    wp_t = jnp.zeros((L, C, C), jnp.float32)
    w1_t = jnp.zeros((L, C, 4 * C), jnp.float32)
    w2_t = jnp.zeros((L, 4 * C, C), jnp.float32)
    for l, b in enumerate(params['blocks']):
        vecs = vecs.at[l, ROW_LN1_G, :C].set(b['ln1_g'].reshape(-1))
        vecs = vecs.at[l, ROW_LN1_B, :C].set(b['ln1_b'].reshape(-1))
        vecs = vecs.at[l, ROW_LN2_G, :C].set(b['ln2_g'].reshape(-1))
        vecs = vecs.at[l, ROW_LN2_B, :C].set(b['ln2_b'].reshape(-1))
        vecs = vecs.at[l, ROW_BP, :C].set(b['bp'].reshape(-1))
        vecs = vecs.at[l, ROW_B2, :C].set(b['b2'].reshape(-1))
        vecs = vecs.at[l, ROW_B1, :4 * C].set(b['b1'].reshape(-1))
        bqkv = jnp.concatenate([b['bq'].reshape(-1), b['bk'].reshape(-1), b['bv'].reshape(-1)])
        vecs = vecs.at[l, ROW_BQKV, :3 * C].set(bqkv)
        wqkv_t = wqkv_t.at[l, :, :3 * C].set(
            jnp.concatenate([b['wq'].T, b['wk'].T, b['wv'].T], axis=1))
        wp_t = wp_t.at[l].set(b['wp'].T)
        w1_t = w1_t.at[l].set(b['w1'].T)
        w2_t = w2_t.at[l].set(b['w2'].T)
    # final LN params ride in pseudo-layer L of the same bundle
    vecs = vecs.at[N_LAYER, ROW_LN1_G, :C].set(params['lnf_g'].reshape(-1))
    vecs = vecs.at[N_LAYER, ROW_LN1_B, :C].set(params['lnf_b'].reshape(-1))
    # packed head weight: [ I_C | W_head^T | 0 ] -> lane-dense (M,128) output slab
    w_out = jnp.zeros((C, LANE), jnp.float32)
    w_out = w_out.at[:, :C].set(jnp.eye(C, dtype=jnp.float32))
    w_out = w_out.at[:, C:C + V].set(params['w_head'].T)
    return dict(
        wte=params['wte'].astype(jnp.bfloat16),
        pos=params['pos_emb'][0],                       # (CHUNK_SIZE, C) f32
        vecs=vecs,
        wqkv_t=wqkv_t.astype(jnp.bfloat16),
        wp_t=wp_t.astype(jnp.bfloat16),
        w1_t=w1_t.astype(jnp.bfloat16),
        w2_t=w2_t.astype(jnp.bfloat16),
        w_out=w_out.astype(jnp.bfloat16),
    )


# ------------------------------ pure-JAX reference ------------------------------
def _ref_block(x, p, n_head):
    B, T, C = x.shape
    Dh = C // n_head
    M = B * T
    scale = 1.0 / math.sqrt(Dh)
    xf = x.reshape(M, C)

    h = _layernorm(xf, p['ln1_g'], p['ln1_b'])

    def split_heads(z):
        return z.reshape(B, T, n_head, Dh).transpose(0, 2, 1, 3)   # (B,H,T,Dh)

    q = split_heads(jnp.dot(h, p['wq'].T, preferred_element_type=jnp.float32) + p['bq'])
    k = split_heads(jnp.dot(h, p['wk'].T, preferred_element_type=jnp.float32) + p['bk'])
    v = split_heads(jnp.dot(h, p['wv'].T, preferred_element_type=jnp.float32) + p['bv'])
    att = jnp.einsum('bhtd,bhsd->bhts', q, k, preferred_element_type=jnp.float32) * scale
    row = jax.lax.broadcasted_iota(jnp.int32, (T, T), 0)
    col = jax.lax.broadcasted_iota(jnp.int32, (T, T), 1)
    causal = (col <= row)[None, None, :, :]
    att = jnp.where(causal, att, NEG_INF)
    p_att = jax.nn.softmax(att, axis=-1)
    y = jnp.einsum('bhts,bhsd->bhtd', p_att, v, preferred_element_type=jnp.float32)
    y = y.transpose(0, 2, 1, 3).reshape(M, C)
    x1 = xf + jnp.dot(y, p['wp'].T, preferred_element_type=jnp.float32) + p['bp']

    h2 = _layernorm(x1, p['ln2_g'], p['ln2_b'])
    z1 = jnp.dot(h2, p['w1'].T, preferred_element_type=jnp.float32) + p['b1']
    z1 = _gelu(_kwinners_ref(z1, K_MLP1))
    z2 = jnp.dot(z1, p['w2'].T, preferred_element_type=jnp.float32) + p['b2']
    z2 = _kwinners_ref(z2, K_MLP2)
    return (x1 + z2).reshape(B, T, C)


def reference_forward(params, idx):
    """Pure-JAX mirror from the original (unpacked, f32) params — independent check."""
    B, T = idx.shape
    C = N_EMBD
    x = params['wte'][idx] + params['pos_emb'][:, :T, :]
    for blk in params['blocks']:
        x = _ref_block(x, blk, N_HEAD)
    z = _layernorm(x.reshape(B * T, C), params['lnf_g'], params['lnf_b'])
    logits = jnp.dot(z, params['w_head'].T, preferred_element_type=jnp.float32)
    return {'logits': logits.reshape(B, T, -1), 'z': z.reshape(B, T, C)}


# ------------------------------------ main -----------------------------------
if __name__ == "__main__":
    key = jax.random.PRNGKey(0)
    pkey, ikey = jax.random.split(key)
    params = init_params(pkey)
    packed = pack_params(params)
    idx = jax.random.randint(ikey, (BATCH, SEQ), 0, N_VOCAB, dtype=jnp.int32)

    out = sparse_gpt_forward(packed, idx)
    logits = jax.block_until_ready(out['logits'])
    z = jax.block_until_ready(out['z'])

    assert logits.shape == (BATCH, SEQ, N_VOCAB)
    assert z.shape == (BATCH, SEQ, N_EMBD)
    assert bool(jnp.all(jnp.isfinite(logits)))

    ref = reference_forward(params, idx)
    ok = (jnp.allclose(logits, ref['logits'], atol=5e-3, rtol=5e-2) and
          jnp.allclose(z, ref['z'], atol=5e-3, rtol=5e-2))
    if not ok:
        raise AssertionError("Pallas output mismatch vs pure-JAX reference")

    print("KERNEL_OK")
</pallas_src>

<mosaic_0001>
module attributes {stable_mosaic.version = 11 : i64} {
  func.func @sparse_gpt_kernel(%arg0: i32, %arg1: memref<16x1xi32, #tpu.memory_space<vmem>>, %arg2: memref<64x32xbf16, #tpu.memory_space<vmem>>, %arg3: memref<16x32xf32, #tpu.memory_space<vmem>>, %arg4: memref<3x8x128xf32, #tpu.memory_space<vmem>>, %arg5: memref<2x32x128xbf16, #tpu.memory_space<vmem>>, %arg6: memref<2x32x32xbf16, #tpu.memory_space<vmem>>, %arg7: memref<2x32x128xbf16, #tpu.memory_space<vmem>>, %arg8: memref<2x128x32xbf16, #tpu.memory_space<vmem>>, %arg9: memref<32x128xbf16, #tpu.memory_space<vmem>>, %arg10: memref<16x128xf32, #tpu.memory_space<vmem>>) attributes {dimension_semantics = [#tpu.dimension_semantics<arbitrary>], iteration_bounds = array<i64: 1>, scalar_prefetch = 0 : i64, scratch_operands = 0 : i64, tpu.core_type = #tpu.core_type<tc>, window_params = [{pipeline_mode = #tpu.pipeline_mode<synchronous>, transform_indices = @transform_0, window_bounds = array<i64: 16, 1>}, {pipeline_mode = #tpu.pipeline_mode<synchronous>, transform_indices = @transform_1, window_bounds = array<i64: 64, 32>}, {pipeline_mode = #tpu.pipeline_mode<synchronous>, transform_indices = @transform_2, window_bounds = array<i64: 16, 32>}, {pipeline_mode = #tpu.pipeline_mode<synchronous>, transform_indices = @transform_3, window_bounds = array<i64: 3, 8, 128>}, {pipeline_mode = #tpu.pipeline_mode<synchronous>, transform_indices = @transform_4, window_bounds = array<i64: 2, 32, 128>}, {pipeline_mode = #tpu.pipeline_mode<synchronous>, transform_indices = @transform_5, window_bounds = array<i64: 2, 32, 32>}, {pipeline_mode = #tpu.pipeline_mode<synchronous>, transform_indices = @transform_6, window_bounds = array<i64: 2, 32, 128>}, {pipeline_mode = #tpu.pipeline_mode<synchronous>, transform_indices = @transform_7, window_bounds = array<i64: 2, 128, 32>}, {pipeline_mode = #tpu.pipeline_mode<synchronous>, transform_indices = @transform_8, window_bounds = array<i64: 32, 128>}, {pipeline_mode = #tpu.pipeline_mode<synchronous>, transform_indices = @transform_9, window_bounds = array<i64: 16, 128>}]} {
    %0 = tpu.iota {dimensions = array<i32: 1>} : vector<16x64xi32>
    %c0 = arith.constant 0 : index
    %c0_0 = arith.constant 0 : index
    %1 = vector.load %arg1[%c0, %c0_0] : memref<16x1xi32, #tpu.memory_space<vmem>>, vector<16x1xi32>
    %2 = vector.broadcast %1 : vector<16x1xi32> to vector<16x64xi32>
    %3 = arith.cmpi eq, %0, %2 : vector<16x64xi32>
    %4 = arith.extui %3 : vector<16x64xi1> to vector<16x64xi32>
    %5 = arith.sitofp %4 : vector<16x64xi32> to vector<16x64xf32>
    %c0_1 = arith.constant 0 : index
    %c0_2 = arith.constant 0 : index
    %6 = vector.load %arg2[%c0_1, %c0_2] : memref<64x32xbf16, #tpu.memory_space<vmem>>, vector<64x32xbf16>
    %7 = arith.extf %6 : vector<64x32xbf16> to vector<64x32xf32>
    %cst = arith.constant dense<0.000000e+00> : vector<16x32xf32>
    %8 = tpu.matmul %5, %7, %cst {dimension_numbers = #tpu.dot_dimension_numbers<[1], [0], [0], [1], [0, 0, 1, 1], [], []>} : vector<16x64xf32>, vector<64x32xf32>, vector<16x32xf32> -> vector<16x32xf32>
    %9 = vector.shape_cast %8 : vector<16x32xf32> to vector<2x8x32xf32>
    %c0_3 = arith.constant 0 : index
    %c0_4 = arith.constant 0 : index
    %10 = vector.load %arg3[%c0_3, %c0_4] : memref<16x32xf32, #tpu.memory_space<vmem>>, vector<8x32xf32>
    %11 = vector.shape_cast %10 : vector<8x32xf32> to vector<1x8x32xf32>
    %12 = vector.broadcast %11 : vector<1x8x32xf32> to vector<2x8x32xf32>
    %13 = arith.addf %9, %12 : vector<2x8x32xf32>
    %14 = vector.shape_cast %13 : vector<2x8x32xf32> to vector<16x32xf32>
    %15 = tpu.iota {dimensions = array<i32: 0>} : vector<8x8xi32>
    %16 = tpu.iota {dimensions = array<i32: 1>} : vector<8x8xi32>
    %17 = arith.cmpi sle, %16, %15 : vector<8x8xi32>
    %cst_5 = arith.constant 0.000000e+00 : f32
    %cst_6 = arith.constant -1.000000e+30 : f32
    %18 = vector.broadcast %cst_5 : f32 to vector<8x8xf32>
    %19 = vector.broadcast %cst_6 : f32 to vector<8x8xf32>
    %20 = arith.select %17, %18, %19 : vector<8x8xi1>, vector<8x8xf32>
    %21 = vector.shape_cast %20 : vector<8x8xf32> to vector<1x8x8xf32>
    %c0_7 = arith.constant 0 : index
    %c0_8 = arith.constant 0 : index
    %c0_9 = arith.constant 0 : index
    %22 = vector.load %arg4[%c0_7, %c0_8, %c0_9] : memref<3x8x128xf32, #tpu.memory_space<vmem>>, vector<1x8x128xf32>
    %23 = vector.shape_cast %22 : vector<1x8x128xf32> to vector<8x128xf32>
    %c0_10 = arith.constant 0 : index
    %c0_11 = arith.constant 0 : index
    %c0_12 = arith.constant 0 : index
    %24 = vector.load %arg5[%c0_10, %c0_11, %c0_12] : memref<2x32x128xbf16, #tpu.memory_space<vmem>>, vector<1x32x128xbf16>
    %25 = vector.shape_cast %24 : vector<1x32x128xbf16> to vector<32x128xbf16>
    %26 = arith.extf %25 : vector<32x128xbf16> to vector<32x128xf32>
    %c0_13 = arith.constant 0 : index
    %c0_14 = arith.constant 0 : index
    %c0_15 = arith.constant 0 : index
    %27 = vector.load %arg6[%c0_13, %c0_14, %c0_15] : memref<2x32x32xbf16, #tpu.memory_space<vmem>>, vector<1x32x32xbf16>
    %28 = vector.shape_cast %27 : vector<1x32x32xbf16> to vector<32x32xbf16>
    %29 = arith.extf %28 : vector<32x32xbf16> to vector<32x32xf32>
    %c0_16 = arith.constant 0 : index
    %c0_17 = arith.constant 0 : index
    %c0_18 = arith.constant 0 : index
    %30 = vector.load %arg7[%c0_16, %c0_17, %c0_18] : memref<2x32x128xbf16, #tpu.memory_space<vmem>>, vector<1x32x128xbf16>
    %31 = vector.shape_cast %30 : vector<1x32x128xbf16> to vector<32x128xbf16>
    %32 = arith.extf %31 : vector<32x128xbf16> to vector<32x128xf32>
    %c0_19 = arith.constant 0 : index
    %c0_20 = arith.constant 0 : index
    %c0_21 = arith.constant 0 : index
    %33 = vector.load %arg8[%c0_19, %c0_20, %c0_21] : memref<2x128x32xbf16, #tpu.memory_space<vmem>>, vector<1x128x32xbf16>
    %34 = vector.shape_cast %33 : vector<1x128x32xbf16> to vector<128x32xbf16>
    %35 = arith.extf %34 : vector<128x32xbf16> to vector<128x32xf32>
    %36 = vector.extract_strided_slice %23 {offsets = [0, 0], sizes = [1, 32], strides = [1, 1]} : vector<8x128xf32> to vector<1x32xf32>
    %37 = vector.extract_strided_slice %23 {offsets = [1, 0], sizes = [1, 32], strides = [1, 1]} : vector<8x128xf32> to vector<1x32xf32>
    %cst_22 = arith.constant dense<0.000000e+00> : vector<16xf32>
    %38 = vector.multi_reduction <add>, %14, %cst_22 [1] : vector<16x32xf32> to vector<16xf32>
    %39 = vector.shape_cast %38 : vector<16xf32> to vector<16x1xf32>
    %cst_23 = arith.constant 3.200000e+01 : f32
    %40 = vector.broadcast %cst_23 : f32 to vector<16x1xf32>
    %41 = arith.divf %39, %40 : vector<16x1xf32>
    %42 = vector.broadcast %41 : vector<16x1xf32> to vector<16x32xf32>
    %43 = arith.subf %14, %42 : vector<16x32xf32>
    %44 = arith.mulf %43, %43 : vector<16x32xf32>
    %cst_24 = arith.constant dense<0.000000e+00> : vector<16xf32>
    %45 = vector.multi_reduction <add>, %44, %cst_24 [1] : vector<16x32xf32> to vector<16xf32>
    %46 = vector.shape_cast %45 : vector<16xf32> to vector<16x1xf32>
    %cst_25 = arith.constant 3.200000e+01 : f32
    %47 = vector.broadcast %cst_25 : f32 to vector<16x1xf32>
    %48 = arith.divf %46, %47 : vector<16x1xf32>
    %49 = vector.broadcast %41 : vector<16x1xf32> to vector<16x32xf32>
    %50 = arith.subf %14, %49 : vector<16x32xf32>
    %cst_26 = arith.constant 9.99999974E-6 : f32
    %51 = vector.broadcast %cst_26 : f32 to vector<16x1xf32>
    %52 = arith.addf %48, %51 : vector<16x1xf32>
    %53 = math.rsqrt %52 : vector<16x1xf32>
    %54 = vector.broadcast %53 : vector<16x1xf32> to vector<16x32xf32>
    %55 = arith.mulf %50, %54 : vector<16x32xf32>
    %56 = vector.broadcast %36 : vector<1x32xf32> to vector<16x32xf32>
    %57 = arith.mulf %55, %56 : vector<16x32xf32>
    %58 = vector.broadcast %37 : vector<1x32xf32> to vector<16x32xf32>
    %59 = arith.addf %57, %58 : vector<16x32xf32>
    %cst_27 = arith.constant dense<0.000000e+00> : vector<16x128xf32>
    %60 = tpu.matmul %59, %26, %cst_27 {dimension_numbers = #tpu.dot_dimension_numbers<[1], [0], [0], [1], [0, 0, 1, 1], [], []>} : vector<16x32xf32>, vector<32x128xf32>, vector<16x128xf32> -> vector<16x128xf32>
    %61 = vector.extract_strided_slice %23 {offsets = [7, 0], sizes = [1, 128], strides = [1, 1]} : vector<8x128xf32> to vector<1x128xf32>
    %62 = vector.broadcast %61 : vector<1x128xf32> to vector<16x128xf32>
    %63 = arith.addf %60, %62 : vector<16x128xf32>
    %64 = vector.extract_strided_slice %63 {offsets = [0, 0], sizes = [16, 8], strides = [1, 1]} : vector<16x128xf32> to vector<16x8xf32>
    %65 = vector.shape_cast %64 : vector<16x8xf32> to vector<2x8x8xf32>
    %66 = vector.extract_strided_slice %63 {offsets = [0, 32], sizes = [16, 8], strides = [1, 1]} : vector<16x128xf32> to vector<16x8xf32>
    %67 = vector.shape_cast %66 : vector<16x8xf32> to vector<2x8x8xf32>
    %68 = vector.extract_strided_slice %63 {offsets = [0, 64], sizes = [16, 8], strides = [1, 1]} : vector<16x128xf32> to vector<16x8xf32>
    %69 = vector.shape_cast %68 : vector<16x8xf32> to vector<2x8x8xf32>
    "tpu.trace_start"() <{level = 10 : i32, message = "btd,bsd->bts"}> : () -> ()
    %cst_28 = arith.constant dense<0.000000e+00> : vector<2x8x8xf32>
    %70 = tpu.matmul %65, %67, %cst_28 {dimension_numbers = #tpu.dot_dimension_numbers<[2], [2], [1], [1], [0, 0, 0, 1, 1, 1], [0], [0]>} : vector<2x8x8xf32>, vector<2x8x8xf32>, vector<2x8x8xf32> -> vector<2x8x8xf32>
    "tpu.trace_stop"() : () -> ()
    %cst_29 = arith.constant 0.353553385 : f32
    %71 = vector.broadcast %cst_29 : f32 to vector<2x8x8xf32>
    %72 = arith.mulf %70, %71 : vector<2x8x8xf32>
    %73 = vector.broadcast %21 : vector<1x8x8xf32> to vector<2x8x8xf32>
    %74 = arith.addf %72, %73 : vector<2x8x8xf32>
    %cst_30 = arith.constant dense<0xFF800000> : vector<2x8xf32>
    %75 = vector.multi_reduction <maximumf>, %74, %cst_30 [2] : vector<2x8x8xf32> to vector<2x8xf32>
    %76 = vector.shape_cast %75 : vector<2x8xf32> to vector<2x8x1xf32>
    %77 = vector.broadcast %76 : vector<2x8x1xf32> to vector<2x8x8xf32>
    %78 = arith.subf %74, %77 : vector<2x8x8xf32>
    %79 = math.exp %78 : vector<2x8x8xf32>
    %cst_31 = arith.constant dense<0.000000e+00> : vector<2x8xf32>
    %80 = vector.multi_reduction <add>, %79, %cst_31 [2] : vector<2x8x8xf32> to vector<2x8xf32>
    %81 = vector.shape_cast %80 : vector<2x8xf32> to vector<2x8x1xf32>
    %82 = vector.broadcast %81 : vector<2x8x1xf32> to vector<2x8x8xf32>
    %83 = arith.divf %79, %82 : vector<2x8x8xf32>
    "tpu.trace_start"() <{level = 10 : i32, message = "bts,bsd->btd"}> : () -> ()
    %cst_32 = arith.constant dense<0.000000e+00> : vector<2x8x8xf32>
    %84 = tpu.matmul %83, %69, %cst_32 {dimension_numbers = #tpu.dot_dimension_numbers<[2], [1], [1], [2], [0, 0, 0, 1, 1, 2], [0], [0]>} : vector<2x8x8xf32>, vector<2x8x8xf32>, vector<2x8x8xf32> -> vector<2x8x8xf32>
    "tpu.trace_stop"() : () -> ()
    %85 = vector.shape_cast %84 : vector<2x8x8xf32> to vector<16x8xf32>
    %86 = vector.extract_strided_slice %63 {offsets = [0, 8], sizes = [16, 8], strides = [1, 1]} : vector<16x128xf32> to vector<16x8xf32>
    %87 = vector.shape_cast %86 : vector<16x8xf32> to vector<2x8x8xf32>
    %88 = vector.extract_strided_slice %63 {offsets = [0, 40], sizes = [16, 8], strides = [1, 1]} : vector<16x128xf32> to vector<16x8xf32>
    %89 = vector.shape_cast %88 : vector<16x8xf32> to vector<2x8x8xf32>
    %90 = vector.extract_strided_slice %63 {offsets = [0, 72], sizes = [16, 8], strides = [1, 1]} : vector<16x128xf32> to vector<16x8xf32>
    %91 = vector.shape_cast %90 : vector<16x8xf32> to vector<2x8x8xf32>
    "tpu.trace_start"() <{level = 10 : i32, message = "btd,bsd->bts"}> : () -> ()
    %cst_33 = arith.constant dense<0.000000e+00> : vector<2x8x8xf32>
    %92 = tpu.matmul %87, %89, %cst_33 {dimension_numbers = #tpu.dot_dimension_numbers<[2], [2], [1], [1], [0, 0, 0, 1, 1, 1], [0], [0]>} : vector<2x8x8xf32>, vector<2x8x8xf32>, vector<2x8x8xf32> -> vector<2x8x8xf32>
    "tpu.trace_stop"() : () -> ()
    %cst_34 = arith.constant 0.353553385 : f32
    %93 = vector.broadcast %cst_34 : f32 to vector<2x8x8xf32>
    %94 = arith.mulf %92, %93 : vector<2x8x8xf32>
    %95 = vector.broadcast %21 : vector<1x8x8xf32> to vector<2x8x8xf32>
    %96 = arith.addf %94, %95 : vector<2x8x8xf32>
    %cst_35 = arith.constant dense<0xFF800000> : vector<2x8xf32>
    %97 = vector.multi_reduction <maximumf>, %96, %cst_35 [2] : vector<2x8x8xf32> to vector<2x8xf32>
    %98 = vector.shape_cast %97 : vector<2x8xf32> to vector<2x8x1xf32>
    %99 = vector.broadcast %98 : vector<2x8x1xf32> to vector<2x8x8xf32>
    %100 = arith.subf %96, %99 : vector<2x8x8xf32>
    %101 = math.exp %100 : vector<2x8x8xf32>
    %cst_36 = arith.constant dense<0.000000e+00> : vector<2x8xf32>
    %102 = vector.multi_reduction <add>, %101, %cst_36 [2] : vector<2x8x8xf32> to vector<2x8xf32>
    %103 = vector.shape_cast %102 : vector<2x8xf32> to vector<2x8x1xf32>
    %104 = vector.broadcast %103 : vector<2x8x1xf32> to vector<2x8x8xf32>
    %105 = arith.divf %101, %104 : vector<2x8x8xf32>
    "tpu.trace_start"() <{level = 10 : i32, message = "bts,bsd->btd"}> : () -> ()
    %cst_37 = arith.constant dense<0.000000e+00> : vector<2x8x8xf32>
    %106 = tpu.matmul %105, %91, %cst_37 {dimension_numbers = #tpu.dot_dimension_numbers<[2], [1], [1], [2], [0, 0, 0, 1, 1, 2], [0], [0]>} : vector<2x8x8xf32>, vector<2x8x8xf32>, vector<2x8x8xf32> -> vector<2x8x8xf32>
    "tpu.trace_stop"() : () -> ()
    %107 = vector.shape_cast %106 : vector<2x8x8xf32> to vector<16x8xf32>
    %108 = vector.extract_strided_slice %63 {offsets = [0, 16], sizes = [16, 8], strides = [1, 1]} : vector<16x128xf32> to vector<16x8xf32>
    %109 = vector.shape_cast %108 : vector<16x8xf32> to vector<2x8x8xf32>
    %110 = vector.extract_strided_slice %63 {offsets = [0, 48], sizes = [16, 8], strides = [1, 1]} : vector<16x128xf32> to vector<16x8xf32>
    %111 = vector.shape_cast %110 : vector<16x8xf32> to vector<2x8x8xf32>
    %112 = vector.extract_strided_slice %63 {offsets = [0, 80], sizes = [16, 8], strides = [1, 1]} : vector<16x128xf32> to vector<16x8xf32>
    %113 = vector.shape_cast %112 : vector<16x8xf32> to vector<2x8x8xf32>
    "tpu.trace_start"() <{level = 10 : i32, message = "btd,bsd->bts"}> : () -> ()
    %cst_38 = arith.constant dense<0.000000e+00> : vector<2x8x8xf32>
    %114 = tpu.matmul %109, %111, %cst_38 {dimension_numbers = #tpu.dot_dimension_numbers<[2], [2], [1], [1], [0, 0, 0, 1, 1, 1], [0], [0]>} : vector<2x8x8xf32>, vector<2x8x8xf32>, vector<2x8x8xf32> -> vector<2x8x8xf32>
    "tpu.trace_stop"() : () -> ()
    %cst_39 = arith.constant 0.353553385 : f32
    %115 = vector.broadcast %cst_39 : f32 to vector<2x8x8xf32>
    %116 = arith.mulf %114, %115 : vector<2x8x8xf32>
    %117 = vector.broadcast %21 : vector<1x8x8xf32> to vector<2x8x8xf32>
    %118 = arith.addf %116, %117 : vector<2x8x8xf32>
    %cst_40 = arith.constant dense<0xFF800000> : vector<2x8xf32>
    %119 = vector.multi_reduction <maximumf>, %118, %cst_40 [2] : vector<2x8x8xf32> to vector<2x8xf32>
    %120 = vector.shape_cast %119 : vector<2x8xf32> to vector<2x8x1xf32>
    %121 = vector.broadcast %120 : vector<2x8x1xf32> to vector<2x8x8xf32>
    %122 = arith.subf %118, %121 : vector<2x8x8xf32>
    %123 = math.exp %122 : vector<2x8x8xf32>
    %cst_41 = arith.constant dense<0.000000e+00> : vector<2x8xf32>
    %124 = vector.multi_reduction <add>, %123, %cst_41 [2] : vector<2x8x8xf32> to vector<2x8xf32>
    %125 = vector.shape_cast %124 : vector<2x8xf32> to vector<2x8x1xf32>
    %126 = vector.broadcast %125 : vector<2x8x1xf32> to vector<2x8x8xf32>
    %127 = arith.divf %123, %126 : vector<2x8x8xf32>
    "tpu.trace_start"() <{level = 10 : i32, message = "bts,bsd->btd"}> : () -> ()
    %cst_42 = arith.constant dense<0.000000e+00> : vector<2x8x8xf32>
    %128 = tpu.matmul %127, %113, %cst_42 {dimension_numbers = #tpu.dot_dimension_numbers<[2], [1], [1], [2], [0, 0, 0, 1, 1, 2], [0], [0]>} : vector<2x8x8xf32>, vector<2x8x8xf32>, vector<2x8x8xf32> -> vector<2x8x8xf32>
    "tpu.trace_stop"() : () -> ()
    %129 = vector.shape_cast %128 : vector<2x8x8xf32> to vector<16x8xf32>
    %130 = vector.extract_strided_slice %63 {offsets = [0, 24], sizes = [16, 8], strides = [1, 1]} : vector<16x128xf32> to vector<16x8xf32>
    %131 = vector.shape_cast %130 : vector<16x8xf32> to vector<2x8x8xf32>
    %132 = vector.extract_strided_slice %63 {offsets = [0, 56], sizes = [16, 8], strides = [1, 1]} : vector<16x128xf32> to vector<16x8xf32>
    %133 = vector.shape_cast %132 : vector<16x8xf32> to vector<2x8x8xf32>
    %134 = vector.extract_strided_slice %63 {offsets = [0, 88], sizes = [16, 8], strides = [1, 1]} : vector<16x128xf32> to vector<16x8xf32>
    %135 = vector.shape_cast %134 : vector<16x8xf32> to vector<2x8x8xf32>
    "tpu.trace_start"() <{level = 10 : i32, message = "btd,bsd->bts"}> : () -> ()
    %cst_43 = arith.constant dense<0.000000e+00> : vector<2x8x8xf32>
    %136 = tpu.matmul %131, %133, %cst_43 {dimension_numbers = #tpu.dot_dimension_numbers<[2], [2], [1], [1], [0, 0, 0, 1, 1, 1], [0], [0]>} : vector<2x8x8xf32>, vector<2x8x8xf32>, vector<2x8x8xf32> -> vector<2x8x8xf32>
    "tpu.trace_stop"() : () -> ()
    %cst_44 = arith.constant 0.353553385 : f32
    %137 = vector.broadcast %cst_44 : f32 to vector<2x8x8xf32>
    %138 = arith.mulf %136, %137 : vector<2x8x8xf32>
    %139 = vector.broadcast %21 : vector<1x8x8xf32> to vector<2x8x8xf32>
    %140 = arith.addf %138, %139 : vector<2x8x8xf32>
    %cst_45 = arith.constant dense<0xFF800000> : vector<2x8xf32>
    %141 = vector.multi_reduction <maximumf>, %140, %cst_45 [2] : vector<2x8x8xf32> to vector<2x8xf32>
    %142 = vector.shape_cast %141 : vector<2x8xf32> to vector<2x8x1xf32>
    %143 = vector.broadcast %142 : vector<2x8x1xf32> to vector<2x8x8xf32>
    %144 = arith.subf %140, %143 : vector<2x8x8xf32>
    %145 = math.exp %144 : vector<2x8x8xf32>
    %cst_46 = arith.constant dense<0.000000e+00> : vector<2x8xf32>
    %146 = vector.multi_reduction <add>, %145, %cst_46 [2] : vector<2x8x8xf32> to vector<2x8xf32>
    %147 = vector.shape_cast %146 : vector<2x8xf32> to vector<2x8x1xf32>
    %148 = vector.broadcast %147 : vector<2x8x1xf32> to vector<2x8x8xf32>
    %149 = arith.divf %145, %148 : vector<2x8x8xf32>
    "tpu.trace_start"() <{level = 10 : i32, message = "bts,bsd->btd"}> : () -> ()
    %cst_47 = arith.constant dense<0.000000e+00> : vector<2x8x8xf32>
    %150 = tpu.matmul %149, %135, %cst_47 {dimension_numbers = #tpu.dot_dimension_numbers<[2], [1], [1], [2], [0, 0, 0, 1, 1, 2], [0], [0]>} : vector<2x8x8xf32>, vector<2x8x8xf32>, vector<2x8x8xf32> -> vector<2x8x8xf32>
    "tpu.trace_stop"() : () -> ()
    %151 = vector.shape_cast %150 : vector<2x8x8xf32> to vector<16x8xf32>
    %152 = tpu.concatenate %85, %107, %129, %151 in 1 : vector<16x8xf32>, vector<16x8xf32>, vector<16x8xf32>, vector<16x8xf32> -> vector<16x32xf32>
    %cst_48 = arith.constant dense<0.000000e+00> : vector<16x32xf32>
    %153 = tpu.matmul %152, %29, %cst_48 {dimension_numbers = #tpu.dot_dimension_numbers<[1], [0], [0], [1], [0, 0, 1, 1], [], []>} : vector<16x32xf32>, vector<32x32xf32>, vector<16x32xf32> -> vector<16x32xf32>
    %154 = arith.addf %14, %153 : vector<16x32xf32>
    %155 = vector.extract_strided_slice %23 {offsets = [4, 0], sizes = [1, 32], strides = [1, 1]} : vector<8x128xf32> to vector<1x32xf32>
    %156 = vector.broadcast %155 : vector<1x32xf32> to vector<16x32xf32>
    %157 = arith.addf %154, %156 : vector<16x32xf32>
    %158 = vector.extract_strided_slice %23 {offsets = [2, 0], sizes = [1, 32], strides = [1, 1]} : vector<8x128xf32> to vector<1x32xf32>
    %159 = vector.extract_strided_slice %23 {offsets = [3, 0], sizes = [1, 32], strides = [1, 1]} : vector<8x128xf32> to vector<1x32xf32>
    %cst_49 = arith.constant dense<0.000000e+00> : vector<16xf32>
    %160 = vector.multi_reduction <add>, %157, %cst_49 [1] : vector<16x32xf32> to vector<16xf32>
    %161 = vector.shape_cast %160 : vector<16xf32> to vector<16x1xf32>
    %cst_50 = arith.constant 3.200000e+01 : f32
    %162 = vector.broadcast %cst_50 : f32 to vector<16x1xf32>
    %163 = arith.divf %161, %162 : vector<16x1xf32>
    %164 = vector.broadcast %163 : vector<16x1xf32> to vector<16x32xf32>
    %165 = arith.subf %157, %164 : vector<16x32xf32>
    %166 = arith.mulf %165, %165 : vector<16x32xf32>
    %cst_51 = arith.constant dense<0.000000e+00> : vector<16xf32>
    %167 = vector.multi_reduction <add>, %166, %cst_51 [1] : vector<16x32xf32> to vector<16xf32>
    %168 = vector.shape_cast %167 : vector<16xf32> to vector<16x1xf32>
    %cst_52 = arith.constant 3.200000e+01 : f32
    %169 = vector.broadcast %cst_52 : f32 to vector<16x1xf32>
    %170 = arith.divf %168, %169 : vector<16x1xf32>
    %171 = vector.broadcast %163 : vector<16x1xf32> to vector<16x32xf32>
    %172 = arith.subf %157, %171 : vector<16x32xf32>
    %cst_53 = arith.constant 9.99999974E-6 : f32
    %173 = vector.broadcast %cst_53 : f32 to vector<16x1xf32>
    %174 = arith.addf %170, %173 : vector<16x1xf32>
    %175 = math.rsqrt %174 : vector<16x1xf32>
    %176 = vector.broadcast %175 : vector<16x1xf32> to vector<16x32xf32>
    %177 = arith.mulf %172, %176 : vector<16x32xf32>
    %178 = vector.broadcast %158 : vector<1x32xf32> to vector<16x32xf32>
    %179 = arith.mulf %177, %178 : vector<16x32xf32>
    %180 = vector.broadcast %159 : vector<1x32xf32> to vector<16x32xf32>
    %181 = arith.addf %179, %180 : vector<16x32xf32>
    %cst_54 = arith.constant dense<0.000000e+00> : vector<16x128xf32>
    %182 = tpu.matmul %181, %32, %cst_54 {dimension_numbers = #tpu.dot_dimension_numbers<[1], [0], [0], [1], [0, 0, 1, 1], [], []>} : vector<16x32xf32>, vector<32x128xf32>, vector<16x128xf32> -> vector<16x128xf32>
    %183 = vector.extract_strided_slice %23 {offsets = [6, 0], sizes = [1, 128], strides = [1, 1]} : vector<8x128xf32> to vector<1x128xf32>
    %184 = vector.broadcast %183 : vector<1x128xf32> to vector<16x128xf32>
    %185 = arith.addf %182, %184 : vector<16x128xf32>
    %cst_55 = arith.constant dense<0xFF800000> : vector<16xf32>
    %186 = vector.multi_reduction <maximumf>, %185, %cst_55 [1] : vector<16x128xf32> to vector<16xf32>
    %187 = vector.shape_cast %186 : vector<16xf32> to vector<16x1xf32>
    %188 = vector.broadcast %187 : vector<16x1xf32> to vector<16x128xf32>
    %189 = arith.cmpf oge, %185, %188 : vector<16x128xf32>
    %cst_56 = arith.constant -1.000000e+30 : f32
    %190 = vector.broadcast %cst_56 : f32 to vector<16x128xf32>
    %191 = arith.select %189, %190, %185 : vector<16x128xi1>, vector<16x128xf32>
    %cst_57 = arith.constant dense<0xFF800000> : vector<16xf32>
    %192 = vector.multi_reduction <maximumf>, %191, %cst_57 [1] : vector<16x128xf32> to vector<16xf32>
    %193 = vector.shape_cast %192 : vector<16xf32> to vector<16x1xf32>
    %194 = vector.broadcast %193 : vector<16x1xf32> to vector<16x128xf32>
    %195 = arith.cmpf oge, %191, %194 : vector<16x128xf32>
    %cst_58 = arith.constant -1.000000e+30 : f32
    %196 = vector.broadcast %cst_58 : f32 to vector<16x128xf32>
    %197 = arith.select %195, %196, %191 : vector<16x128xi1>, vector<16x128xf32>
    %cst_59 = arith.constant dense<0xFF800000> : vector<16xf32>
    %198 = vector.multi_reduction <maximumf>, %197, %cst_59 [1] : vector<16x128xf32> to vector<16xf32>
    %199 = vector.shape_cast %198 : vector<16xf32> to vector<16x1xf32>
    %200 = vector.broadcast %199 : vector<16x1xf32> to vector<16x128xf32>
    %201 = arith.cmpf oge, %197, %200 : vector<16x128xf32>
    %cst_60 = arith.constant -1.000000e+30 : f32
    %202 = vector.broadcast %cst_60 : f32 to vector<16x128xf32>
    %203 = arith.select %201, %202, %197 : vector<16x128xi1>, vector<16x128xf32>
    %cst_61 = arith.constant dense<0xFF800000> : vector<16xf32>
    %204 = vector.multi_reduction <maximumf>, %203, %cst_61 [1] : vector<16x128xf32> to vector<16xf32>
    %205 = vector.shape_cast %204 : vector<16xf32> to vector<16x1xf32>
    %206 = vector.broadcast %205 : vector<16x1xf32> to vector<16x128xf32>
    %207 = arith.cmpf oge, %203, %206 : vector<16x128xf32>
    %cst_62 = arith.constant -1.000000e+30 : f32
    %208 = vector.broadcast %cst_62 : f32 to vector<16x128xf32>
    %209 = arith.select %207, %208, %203 : vector<16x128xi1>, vector<16x128xf32>
    %cst_63 = arith.constant dense<0xFF800000> : vector<16xf32>
    %210 = vector.multi_reduction <maximumf>, %209, %cst_63 [1] : vector<16x128xf32> to vector<16xf32>
    %211 = vector.shape_cast %210 : vector<16xf32> to vector<16x1xf32>
    %212 = vector.broadcast %211 : vector<16x1xf32> to vector<16x128xf32>
    %213 = arith.cmpf oge, %209, %212 : vector<16x128xf32>
    %cst_64 = arith.constant -1.000000e+30 : f32
    %214 = vector.broadcast %cst_64 : f32 to vector<16x128xf32>
    %215 = arith.select %213, %214, %209 : vector<16x128xi1>, vector<16x128xf32>
    %cst_65 = arith.constant dense<0xFF800000> : vector<16xf32>
    %216 = vector.multi_reduction <maximumf>, %215, %cst_65 [1] : vector<16x128xf32> to vector<16xf32>
    %217 = vector.shape_cast %216 : vector<16xf32> to vector<16x1xf32>
    %218 = vector.broadcast %217 : vector<16x1xf32> to vector<16x128xf32>
    %219 = arith.cmpf oge, %215, %218 : vector<16x128xf32>
    %cst_66 = arith.constant -1.000000e+30 : f32
    %220 = vector.broadcast %cst_66 : f32 to vector<16x128xf32>
    %221 = arith.select %219, %220, %215 : vector<16x128xi1>, vector<16x128xf32>
    %cst_67 = arith.constant dense<0xFF800000> : vector<16xf32>
    %222 = vector.multi_reduction <maximumf>, %221, %cst_67 [1] : vector<16x128xf32> to vector<16xf32>
    %223 = vector.shape_cast %222 : vector<16xf32> to vector<16x1xf32>
    %224 = vector.broadcast %223 : vector<16x1xf32> to vector<16x128xf32>
    %225 = arith.cmpf oge, %221, %224 : vector<16x128xf32>
    %cst_68 = arith.constant -1.000000e+30 : f32
    %226 = vector.broadcast %cst_68 : f32 to vector<16x128xf32>
    %227 = arith.select %225, %226, %221 : vector<16x128xi1>, vector<16x128xf32>
    %cst_69 = arith.constant dense<0xFF800000> : vector<16xf32>
    %228 = vector.multi_reduction <maximumf>, %227, %cst_69 [1] : vector<16x128xf32> to vector<16xf32>
    %229 = vector.shape_cast %228 : vector<16xf32> to vector<16x1xf32>
    %230 = vector.broadcast %229 : vector<16x1xf32> to vector<16x128xf32>
    %231 = arith.cmpf oge, %227, %230 : vector<16x128xf32>
    %cst_70 = arith.constant -1.000000e+30 : f32
    %232 = vector.broadcast %cst_70 : f32 to vector<16x128xf32>
    %233 = arith.select %231, %232, %227 : vector<16x128xi1>, vector<16x128xf32>
    %cst_71 = arith.constant dense<0xFF800000> : vector<16xf32>
    %234 = vector.multi_reduction <maximumf>, %233, %cst_71 [1] : vector<16x128xf32> to vector<16xf32>
    %235 = vector.shape_cast %234 : vector<16xf32> to vector<16x1xf32>
    %236 = vector.broadcast %235 : vector<16x1xf32> to vector<16x128xf32>
    %237 = arith.cmpf oge, %233, %236 : vector<16x128xf32>
    %cst_72 = arith.constant -1.000000e+30 : f32
    %238 = vector.broadcast %cst_72 : f32 to vector<16x128xf32>
    %239 = arith.select %237, %238, %233 : vector<16x128xi1>, vector<16x128xf32>
    %cst_73 = arith.constant dense<0xFF800000> : vector<16xf32>
    %240 = vector.multi_reduction <maximumf>, %239, %cst_73 [1] : vector<16x128xf32> to vector<16xf32>
    %241 = vector.shape_cast %240 : vector<16xf32> to vector<16x1xf32>
    %242 = vector.broadcast %241 : vector<16x1xf32> to vector<16x128xf32>
    %243 = arith.cmpf oge, %239, %242 : vector<16x128xf32>
    %cst_74 = arith.constant -1.000000e+30 : f32
    %244 = vector.broadcast %cst_74 : f32 to vector<16x128xf32>
    %245 = arith.select %243, %244, %239 : vector<16x128xi1>, vector<16x128xf32>
    %cst_75 = arith.constant dense<0xFF800000> : vector<16xf32>
    %246 = vector.multi_reduction <maximumf>, %245, %cst_75 [1] : vector<16x128xf32> to vector<16xf32>
    %247 = vector.shape_cast %246 : vector<16xf32> to vector<16x1xf32>
    %248 = vector.broadcast %247 : vector<16x1xf32> to vector<16x128xf32>
    %249 = arith.cmpf oge, %245, %248 : vector<16x128xf32>
    %cst_76 = arith.constant -1.000000e+30 : f32
    %250 = vector.broadcast %cst_76 : f32 to vector<16x128xf32>
    %251 = arith.select %249, %250, %245 : vector<16x128xi1>, vector<16x128xf32>
    %cst_77 = arith.constant dense<0xFF800000> : vector<16xf32>
    %252 = vector.multi_reduction <maximumf>, %251, %cst_77 [1] : vector<16x128xf32> to vector<16xf32>
    %253 = vector.shape_cast %252 : vector<16xf32> to vector<16x1xf32>
    %254 = vector.broadcast %253 : vector<16x1xf32> to vector<16x128xf32>
    %255 = arith.cmpf oge, %251, %254 : vector<16x128xf32>
    %cst_78 = arith.constant -1.000000e+30 : f32
    %256 = vector.broadcast %cst_78 : f32 to vector<16x128xf32>
    %257 = arith.select %255, %256, %251 : vector<16x128xi1>, vector<16x128xf32>
    %cst_79 = arith.constant dense<0xFF800000> : vector<16xf32>
    %258 = vector.multi_reduction <maximumf>, %257, %cst_79 [1] : vector<16x128xf32> to vector<16xf32>
    %259 = vector.shape_cast %258 : vector<16xf32> to vector<16x1xf32>
    %260 = vector.broadcast %259 : vector<16x1xf32> to vector<16x128xf32>
    %261 = arith.cmpf oge, %257, %260 : vector<16x128xf32>
    %cst_80 = arith.constant -1.000000e+30 : f32
    %262 = vector.broadcast %cst_80 : f32 to vector<16x128xf32>
    %263 = arith.select %261, %262, %257 : vector<16x128xi1>, vector<16x128xf32>
    %cst_81 = arith.constant dense<0xFF800000> : vector<16xf32>
    %264 = vector.multi_reduction <maximumf>, %263, %cst_81 [1] : vector<16x128xf32> to vector<16xf32>
    %265 = vector.shape_cast %264 : vector<16xf32> to vector<16x1xf32>
    %266 = vector.broadcast %265 : vector<16x1xf32> to vector<16x128xf32>
    %267 = arith.cmpf oge, %263, %266 : vector<16x128xf32>
    %cst_82 = arith.constant -1.000000e+30 : f32
    %268 = vector.broadcast %cst_82 : f32 to vector<16x128xf32>
    %269 = arith.select %267, %268, %263 : vector<16x128xi1>, vector<16x128xf32>
    %cst_83 = arith.constant dense<0xFF800000> : vector<16xf32>
    %270 = vector.multi_reduction <maximumf>, %269, %cst_83 [1] : vector<16x128xf32> to vector<16xf32>
    %271 = vector.shape_cast %270 : vector<16xf32> to vector<16x1xf32>
    %272 = vector.broadcast %271 : vector<16x1xf32> to vector<16x128xf32>
    %273 = arith.cmpf oge, %269, %272 : vector<16x128xf32>
    %cst_84 = arith.constant -1.000000e+30 : f32
    %274 = vector.broadcast %cst_84 : f32 to vector<16x128xf32>
    %275 = arith.select %273, %274, %269 : vector<16x128xi1>, vector<16x128xf32>
    %cst_85 = arith.constant dense<0xFF800000> : vector<16xf32>
    %276 = vector.multi_reduction <maximumf>, %275, %cst_85 [1] : vector<16x128xf32> to vector<16xf32>
    %277 = vector.shape_cast %276 : vector<16xf32> to vector<16x1xf32>
    %278 = vector.broadcast %277 : vector<16x1xf32> to vector<16x128xf32>
    %279 = arith.cmpf oge, %275, %278 : vector<16x128xf32>
    %cst_86 = arith.constant -1.000000e+30 : f32
    %280 = vector.broadcast %cst_86 : f32 to vector<16x128xf32>
    %281 = arith.select %279, %280, %275 : vector<16x128xi1>, vector<16x128xf32>
    %cst_87 = arith.constant dense<0xFF800000> : vector<16xf32>
    %282 = vector.multi_reduction <maximumf>, %281, %cst_87 [1] : vector<16x128xf32> to vector<16xf32>
    %283 = vector.shape_cast %282 : vector<16xf32> to vector<16x1xf32>
    %284 = vector.broadcast %283 : vector<16x1xf32> to vector<16x128xf32>
    %285 = arith.cmpf oge, %281, %284 : vector<16x128xf32>
    %cst_88 = arith.constant -1.000000e+30 : f32
    %286 = vector.broadcast %cst_88 : f32 to vector<16x128xf32>
    %287 = arith.select %285, %286, %281 : vector<16x128xi1>, vector<16x128xf32>
    %cst_89 = arith.constant dense<0xFF800000> : vector<16xf32>
    %288 = vector.multi_reduction <maximumf>, %287, %cst_89 [1] : vector<16x128xf32> to vector<16xf32>
    %289 = vector.shape_cast %288 : vector<16xf32> to vector<16x1xf32>
    %290 = vector.broadcast %289 : vector<16x1xf32> to vector<16x128xf32>
    %291 = arith.cmpf oge, %287, %290 : vector<16x128xf32>
    %cst_90 = arith.constant -1.000000e+30 : f32
    %292 = vector.broadcast %cst_90 : f32 to vector<16x128xf32>
    %293 = arith.select %291, %292, %287 : vector<16x128xi1>, vector<16x128xf32>
    %cst_91 = arith.constant dense<0xFF800000> : vector<16xf32>
    %294 = vector.multi_reduction <maximumf>, %293, %cst_91 [1] : vector<16x128xf32> to vector<16xf32>
    %295 = vector.shape_cast %294 : vector<16xf32> to vector<16x1xf32>
    %296 = vector.broadcast %295 : vector<16x1xf32> to vector<16x128xf32>
    %297 = arith.cmpf oge, %293, %296 : vector<16x128xf32>
    %cst_92 = arith.constant -1.000000e+30 : f32
    %298 = vector.broadcast %cst_92 : f32 to vector<16x128xf32>
    %299 = arith.select %297, %298, %293 : vector<16x128xi1>, vector<16x128xf32>
    %cst_93 = arith.constant dense<0xFF800000> : vector<16xf32>
    %300 = vector.multi_reduction <maximumf>, %299, %cst_93 [1] : vector<16x128xf32> to vector<16xf32>
    %301 = vector.shape_cast %300 : vector<16xf32> to vector<16x1xf32>
    %302 = vector.broadcast %301 : vector<16x1xf32> to vector<16x128xf32>
    %303 = arith.cmpf oge, %299, %302 : vector<16x128xf32>
    %cst_94 = arith.constant -1.000000e+30 : f32
    %304 = vector.broadcast %cst_94 : f32 to vector<16x128xf32>
    %305 = arith.select %303, %304, %299 : vector<16x128xi1>, vector<16x128xf32>
    %cst_95 = arith.constant dense<0xFF800000> : vector<16xf32>
    %306 = vector.multi_reduction <maximumf>, %305, %cst_95 [1] : vector<16x128xf32> to vector<16xf32>
    %307 = vector.shape_cast %306 : vector<16xf32> to vector<16x1xf32>
    %308 = vector.broadcast %307 : vector<16x1xf32> to vector<16x128xf32>
    %309 = arith.cmpf oge, %305, %308 : vector<16x128xf32>
    %cst_96 = arith.constant -1.000000e+30 : f32
    %310 = vector.broadcast %cst_96 : f32 to vector<16x128xf32>
    %311 = arith.select %309, %310, %305 : vector<16x128xi1>, vector<16x128xf32>
    %cst_97 = arith.constant dense<0xFF800000> : vector<16xf32>
    %312 = vector.multi_reduction <maximumf>, %311, %cst_97 [1] : vector<16x128xf32> to vector<16xf32>
    %313 = vector.shape_cast %312 : vector<16xf32> to vector<16x1xf32>
    %314 = vector.broadcast %313 : vector<16x1xf32> to vector<16x128xf32>
    %315 = arith.cmpf oge, %311, %314 : vector<16x128xf32>
    %cst_98 = arith.constant -1.000000e+30 : f32
    %316 = vector.broadcast %cst_98 : f32 to vector<16x128xf32>
    %317 = arith.select %315, %316, %311 : vector<16x128xi1>, vector<16x128xf32>
    %cst_99 = arith.constant dense<0xFF800000> : vector<16xf32>
    %318 = vector.multi_reduction <maximumf>, %317, %cst_99 [1] : vector<16x128xf32> to vector<16xf32>
    %319 = vector.shape_cast %318 : vector<16xf32> to vector<16x1xf32>
    %320 = vector.broadcast %319 : vector<16x1xf32> to vector<16x128xf32>
    %321 = arith.cmpf oge, %317, %320 : vector<16x128xf32>
    %cst_100 = arith.constant -1.000000e+30 : f32
    %322 = vector.broadcast %cst_100 : f32 to vector<16x128xf32>
    %323 = arith.select %321, %322, %317 : vector<16x128xi1>, vector<16x128xf32>
    %cst_101 = arith.constant dense<0xFF800000> : vector<16xf32>
    %324 = vector.multi_reduction <maximumf>, %323, %cst_101 [1] : vector<16x128xf32> to vector<16xf32>
    %325 = vector.shape_cast %324 : vector<16xf32> to vector<16x1xf32>
    %326 = vector.broadcast %325 : vector<16x1xf32> to vector<16x128xf32>
    %327 = arith.cmpf oge, %323, %326 : vector<16x128xf32>
    %cst_102 = arith.constant -1.000000e+30 : f32
    %328 = vector.broadcast %cst_102 : f32 to vector<16x128xf32>
    %329 = arith.select %327, %328, %323 : vector<16x128xi1>, vector<16x128xf32>
    %cst_103 = arith.constant dense<0xFF800000> : vector<16xf32>
    %330 = vector.multi_reduction <maximumf>, %329, %cst_103 [1] : vector<16x128xf32> to vector<16xf32>
    %331 = vector.shape_cast %330 : vector<16xf32> to vector<16x1xf32>
    %332 = vector.broadcast %331 : vector<16x1xf32> to vector<16x128xf32>
    %333 = arith.cmpf oge, %329, %332 : vector<16x128xf32>
    %cst_104 = arith.constant -1.000000e+30 : f32
    %334 = vector.broadcast %cst_104 : f32 to vector<16x128xf32>
    %335 = arith.select %333, %334, %329 : vector<16x128xi1>, vector<16x128xf32>
    %cst_105 = arith.constant dense<0xFF800000> : vector<16xf32>
    %336 = vector.multi_reduction <maximumf>, %335, %cst_105 [1] : vector<16x128xf32> to vector<16xf32>
    %337 = vector.shape_cast %336 : vector<16xf32> to vector<16x1xf32>
    %338 = vector.broadcast %337 : vector<16x1xf32> to vector<16x128xf32>
    %339 = arith.cmpf oge, %185, %338 : vector<16x128xf32>
    %cst_106 = arith.constant 0.000000e+00 : f32
    %340 = vector.broadcast %cst_106 : f32 to vector<16x128xf32>
    %341 = arith.select %339, %185, %340 : vector<16x128xi1>, vector<16x128xf32>
    %cst_107 = arith.constant 5.000000e-01 : f32
    %342 = vector.broadcast %cst_107 : f32 to vector<16x128xf32>
    %343 = arith.mulf %342, %341 : vector<16x128xf32>
    %cst_108 = arith.constant 1.41421354 : f32
    %344 = vector.broadcast %cst_108 : f32 to vector<16x128xf32>
    %345 = arith.divf %341, %344 : vector<16x128xf32>
    %346 = math.erf %345 : vector<16x128xf32>
    %cst_109 = arith.constant 1.000000e+00 : f32
    %347 = vector.broadcast %cst_109 : f32 to vector<16x128xf32>
    %348 = arith.addf %347, %346 : vector<16x128xf32>
    %349 = arith.mulf %343, %348 : vector<16x128xf32>
    %cst_110 = arith.constant dense<0.000000e+00> : vector<16x32xf32>
    %350 = tpu.matmul %349, %35, %cst_110 {dimension_numbers = #tpu.dot_dimension_numbers<[1], [0], [0], [1], [0, 0, 1, 1], [], []>} : vector<16x128xf32>, vector<128x32xf32>, vector<16x32xf32> -> vector<16x32xf32>
    %351 = vector.extract_strided_slice %23 {offsets = [5, 0], sizes = [1, 32], strides = [1, 1]} : vector<8x128xf32> to vector<1x32xf32>
    %352 = vector.broadcast %351 : vector<1x32xf32> to vector<16x32xf32>
    %353 = arith.addf %350, %352 : vector<16x32xf32>
    %cst_111 = arith.constant dense<0xFF800000> : vector<16xf32>
    %354 = vector.multi_reduction <maximumf>, %353, %cst_111 [1] : vector<16x32xf32> to vector<16xf32>
    %355 = vector.shape_cast %354 : vector<16xf32> to vector<16x1xf32>
    %356 = vector.broadcast %355 : vector<16x1xf32> to vector<16x32xf32>
    %357 = arith.cmpf oge, %353, %356 : vector<16x32xf32>
    %cst_112 = arith.constant -1.000000e+30 : f32
    %358 = vector.broadcast %cst_112 : f32 to vector<16x32xf32>
    %359 = arith.select %357, %358, %353 : vector<16x32xi1>, vector<16x32xf32>
    %cst_113 = arith.constant dense<0xFF800000> : vector<16xf32>
    %360 = vector.multi_reduction <maximumf>, %359, %cst_113 [1] : vector<16x32xf32> to vector<16xf32>
    %361 = vector.shape_cast %360 : vector<16xf32> to vector<16x1xf32>
    %362 = vector.broadcast %361 : vector<16x1xf32> to vector<16x32xf32>
    %363 = arith.cmpf oge, %359, %362 : vector<16x32xf32>
    %cst_114 = arith.constant -1.000000e+30 : f32
    %364 = vector.broadcast %cst_114 : f32 to vector<16x32xf32>
    %365 = arith.select %363, %364, %359 : vector<16x32xi1>, vector<16x32xf32>
    %cst_115 = arith.constant dense<0xFF800000> : vector<16xf32>
    %366 = vector.multi_reduction <maximumf>, %365, %cst_115 [1] : vector<16x32xf32> to vector<16xf32>
    %367 = vector.shape_cast %366 : vector<16xf32> to vector<16x1xf32>
    %368 = vector.broadcast %367 : vector<16x1xf32> to vector<16x32xf32>
    %369 = arith.cmpf oge, %365, %368 : vector<16x32xf32>
    %cst_116 = arith.constant -1.000000e+30 : f32
    %370 = vector.broadcast %cst_116 : f32 to vector<16x32xf32>
    %371 = arith.select %369, %370, %365 : vector<16x32xi1>, vector<16x32xf32>
    %cst_117 = arith.constant dense<0xFF800000> : vector<16xf32>
    %372 = vector.multi_reduction <maximumf>, %371, %cst_117 [1] : vector<16x32xf32> to vector<16xf32>
    %373 = vector.shape_cast %372 : vector<16xf32> to vector<16x1xf32>
    %374 = vector.broadcast %373 : vector<16x1xf32> to vector<16x32xf32>
    %375 = arith.cmpf oge, %371, %374 : vector<16x32xf32>
    %cst_118 = arith.constant -1.000000e+30 : f32
    %376 = vector.broadcast %cst_118 : f32 to vector<16x32xf32>
    %377 = arith.select %375, %376, %371 : vector<16x32xi1>, vector<16x32xf32>
    %cst_119 = arith.constant dense<0xFF800000> : vector<16xf32>
    %378 = vector.multi_reduction <maximumf>, %377, %cst_119 [1] : vector<16x32xf32> to vector<16xf32>
    %379 = vector.shape_cast %378 : vector<16xf32> to vector<16x1xf32>
    %380 = vector.broadcast %379 : vector<16x1xf32> to vector<16x32xf32>
    %381 = arith.cmpf oge, %377, %380 : vector<16x32xf32>
    %cst_120 = arith.constant -1.000000e+30 : f32
    %382 = vector.broadcast %cst_120 : f32 to vector<16x32xf32>
    %383 = arith.select %381, %382, %377 : vector<16x32xi1>, vector<16x32xf32>
    %cst_121 = arith.constant dense<0xFF800000> : vector<16xf32>
    %384 = vector.multi_reduction <maximumf>, %383, %cst_121 [1] : vector<16x32xf32> to vector<16xf32>
    %385 = vector.shape_cast %384 : vector<16xf32> to vector<16x1xf32>
    %386 = vector.broadcast %385 : vector<16x1xf32> to vector<16x32xf32>
    %387 = arith.cmpf oge, %353, %386 : vector<16x32xf32>
    %cst_122 = arith.constant 0.000000e+00 : f32
    %388 = vector.broadcast %cst_122 : f32 to vector<16x32xf32>
    %389 = arith.select %387, %353, %388 : vector<16x32xi1>, vector<16x32xf32>
    %390 = arith.addf %157, %389 : vector<16x32xf32>
    %c1 = arith.constant 1 : index
    %c0_123 = arith.constant 0 : index
    %c0_124 = arith.constant 0 : index
    %391 = vector.load %arg4[%c1, %c0_123, %c0_124] : memref<3x8x128xf32, #tpu.memory_space<vmem>>, vector<1x8x128xf32>
    %392 = vector.shape_cast %391 : vector<1x8x128xf32> to vector<8x128xf32>
    %c1_125 = arith.constant 1 : index
    %c0_126 = arith.constant 0 : index
    %c0_127 = arith.constant 0 : index
    %393 = vector.load %arg5[%c1_125, %c0_126, %c0_127] : memref<2x32x128xbf16, #tpu.memory_space<vmem>>, vector<1x32x128xbf16>
    %394 = vector.shape_cast %393 : vector<1x32x128xbf16> to vector<32x128xbf16>
    %395 = arith.extf %394 : vector<32x128xbf16> to vector<32x128xf32>
    %c1_128 = arith.constant 1 : index
    %c0_129 = arith.constant 0 : index
    %c0_130 = arith.constant 0 : index
    %396 = vector.load %arg6[%c1_128, %c0_129, %c0_130] : memref<2x32x32xbf16, #tpu.memory_space<vmem>>, vector<1x32x32xbf16>
    %397 = vector.shape_cast %396 : vector<1x32x32xbf16> to vector<32x32xbf16>
    %398 = arith.extf %397 : vector<32x32xbf16> to vector<32x32xf32>
    %c1_131 = arith.constant 1 : index
    %c0_132 = arith.constant 0 : index
    %c0_133 = arith.constant 0 : index
    %399 = vector.load %arg7[%c1_131, %c0_132, %c0_133] : memref<2x32x128xbf16, #tpu.memory_space<vmem>>, vector<1x32x128xbf16>
    %400 = vector.shape_cast %399 : vector<1x32x128xbf16> to vector<32x128xbf16>
    %401 = arith.extf %400 : vector<32x128xbf16> to vector<32x128xf32>
    %c1_134 = arith.constant 1 : index
    %c0_135 = arith.constant 0 : index
    %c0_136 = arith.constant 0 : index
    %402 = vector.load %arg8[%c1_134, %c0_135, %c0_136] : memref<2x128x32xbf16, #tpu.memory_space<vmem>>, vector<1x128x32xbf16>
    %403 = vector.shape_cast %402 : vector<1x128x32xbf16> to vector<128x32xbf16>
    %404 = arith.extf %403 : vector<128x32xbf16> to vector<128x32xf32>
    %405 = vector.extract_strided_slice %392 {offsets = [0, 0], sizes = [1, 32], strides = [1, 1]} : vector<8x128xf32> to vector<1x32xf32>
    %406 = vector.extract_strided_slice %392 {offsets = [1, 0], sizes = [1, 32], strides = [1, 1]} : vector<8x128xf32> to vector<1x32xf32>
    %cst_137 = arith.constant dense<0.000000e+00> : vector<16xf32>
    %407 = vector.multi_reduction <add>, %390, %cst_137 [1] : vector<16x32xf32> to vector<16xf32>
    %408 = vector.shape_cast %407 : vector<16xf32> to vector<16x1xf32>
    %cst_138 = arith.constant 3.200000e+01 : f32
    %409 = vector.broadcast %cst_138 : f32 to vector<16x1xf32>
    %410 = arith.divf %408, %409 : vector<16x1xf32>
    %411 = vector.broadcast %410 : vector<16x1xf32> to vector<16x32xf32>
    %412 = arith.subf %390, %411 : vector<16x32xf32>
    %413 = arith.mulf %412, %412 : vector<16x32xf32>
    %cst_139 = arith.constant dense<0.000000e+00> : vector<16xf32>
    %414 = vector.multi_reduction <add>, %413, %cst_139 [1] : vector<16x32xf32> to vector<16xf32>
    %415 = vector.shape_cast %414 : vector<16xf32> to vector<16x1xf32>
    %cst_140 = arith.constant 3.200000e+01 : f32
    %416 = vector.broadcast %cst_140 : f32 to vector<16x1xf32>
    %417 = arith.divf %415, %416 : vector<16x1xf32>
    %418 = vector.broadcast %410 : vector<16x1xf32> to vector<16x32xf32>
    %419 = arith.subf %390, %418 : vector<16x32xf32>
    %cst_141 = arith.constant 9.99999974E-6 : f32
    %420 = vector.broadcast %cst_141 : f32 to vector<16x1xf32>
    %421 = arith.addf %417, %420 : vector<16x1xf32>
    %422 = math.rsqrt %421 : vector<16x1xf32>
    %423 = vector.broadcast %422 : vector<16x1xf32> to vector<16x32xf32>
    %424 = arith.mulf %419, %423 : vector<16x32xf32>
    %425 = vector.broadcast %405 : vector<1x32xf32> to vector<16x32xf32>
    %426 = arith.mulf %424, %425 : vector<16x32xf32>
    %427 = vector.broadcast %406 : vector<1x32xf32> to vector<16x32xf32>
    %428 = arith.addf %426, %427 : vector<16x32xf32>
    %cst_142 = arith.constant dense<0.000000e+00> : vector<16x128xf32>
    %429 = tpu.matmul %428, %395, %cst_142 {dimension_numbers = #tpu.dot_dimension_numbers<[1], [0], [0], [1], [0, 0, 1, 1], [], []>} : vector<16x32xf32>, vector<32x128xf32>, vector<16x128xf32> -> vector<16x128xf32>
    %430 = vector.extract_strided_slice %392 {offsets = [7, 0], sizes = [1, 128], strides = [1, 1]} : vector<8x128xf32> to vector<1x128xf32>
    %431 = vector.broadcast %430 : vector<1x128xf32> to vector<16x128xf32>
    %432 = arith.addf %429, %431 : vector<16x128xf32>
    %433 = vector.extract_strided_slice %432 {offsets = [0, 0], sizes = [16, 8], strides = [1, 1]} : vector<16x128xf32> to vector<16x8xf32>
    %434 = vector.shape_cast %433 : vector<16x8xf32> to vector<2x8x8xf32>
    %435 = vector.extract_strided_slice %432 {offsets = [0, 32], sizes = [16, 8], strides = [1, 1]} : vector<16x128xf32> to vector<16x8xf32>
    %436 = vector.shape_cast %435 : vector<16x8xf32> to vector<2x8x8xf32>
    %437 = vector.extract_strided_slice %432 {offsets = [0, 64], sizes = [16, 8], strides = [1, 1]} : vector<16x128xf32> to vector<16x8xf32>
    %438 = vector.shape_cast %437 : vector<16x8xf32> to vector<2x8x8xf32>
    "tpu.trace_start"() <{level = 10 : i32, message = "btd,bsd->bts"}> : () -> ()
    %cst_143 = arith.constant dense<0.000000e+00> : vector<2x8x8xf32>
    %439 = tpu.matmul %434, %436, %cst_143 {dimension_numbers = #tpu.dot_dimension_numbers<[2], [2], [1], [1], [0, 0, 0, 1, 1, 1], [0], [0]>} : vector<2x8x8xf32>, vector<2x8x8xf32>, vector<2x8x8xf32> -> vector<2x8x8xf32>
    "tpu.trace_stop"() : () -> ()
    %cst_144 = arith.constant 0.353553385 : f32
    %440 = vector.broadcast %cst_144 : f32 to vector<2x8x8xf32>
    %441 = arith.mulf %439, %440 : vector<2x8x8xf32>
    %442 = vector.broadcast %21 : vector<1x8x8xf32> to vector<2x8x8xf32>
    %443 = arith.addf %441, %442 : vector<2x8x8xf32>
    %cst_145 = arith.constant dense<0xFF800000> : vector<2x8xf32>
    %444 = vector.multi_reduction <maximumf>, %443, %cst_145 [2] : vector<2x8x8xf32> to vector<2x8xf32>
    %445 = vector.shape_cast %444 : vector<2x8xf32> to vector<2x8x1xf32>
    %446 = vector.broadcast %445 : vector<2x8x1xf32> to vector<2x8x8xf32>
    %447 = arith.subf %443, %446 : vector<2x8x8xf32>
    %448 = math.exp %447 : vector<2x8x8xf32>
    %cst_146 = arith.constant dense<0.000000e+00> : vector<2x8xf32>
    %449 = vector.multi_reduction <add>, %448, %cst_146 [2] : vector<2x8x8xf32> to vector<2x8xf32>
    %450 = vector.shape_cast %449 : vector<2x8xf32> to vector<2x8x1xf32>
    %451 = vector.broadcast %450 : vector<2x8x1xf32> to vector<2x8x8xf32>
    %452 = arith.divf %448, %451 : vector<2x8x8xf32>
    "tpu.trace_start"() <{level = 10 : i32, message = "bts,bsd->btd"}> : () -> ()
    %cst_147 = arith.constant dense<0.000000e+00> : vector<2x8x8xf32>
    %453 = tpu.matmul %452, %438, %cst_147 {dimension_numbers = #tpu.dot_dimension_numbers<[2], [1], [1], [2], [0, 0, 0, 1, 1, 2], [0], [0]>} : vector<2x8x8xf32>, vector<2x8x8xf32>, vector<2x8x8xf32> -> vector<2x8x8xf32>
    "tpu.trace_stop"() : () -> ()
    %454 = vector.shape_cast %453 : vector<2x8x8xf32> to vector<16x8xf32>
    %455 = vector.extract_strided_slice %432 {offsets = [0, 8], sizes = [16, 8], strides = [1, 1]} : vector<16x128xf32> to vector<16x8xf32>
    %456 = vector.shape_cast %455 : vector<16x8xf32> to vector<2x8x8xf32>
    %457 = vector.extract_strided_slice %432 {offsets = [0, 40], sizes = [16, 8], strides = [1, 1]} : vector<16x128xf32> to vector<16x8xf32>
    %458 = vector.shape_cast %457 : vector<16x8xf32> to vector<2x8x8xf32>
    %459 = vector.extract_strided_slice %432 {offsets = [0, 72], sizes = [16, 8], strides = [1, 1]} : vector<16x128xf32> to vector<16x8xf32>
    %460 = vector.shape_cast %459 : vector<16x8xf32> to vector<2x8x8xf32>
    "tpu.trace_start"() <{level = 10 : i32, message = "btd,bsd->bts"}> : () -> ()
    %cst_148 = arith.constant dense<0.000000e+00> : vector<2x8x8xf32>
    %461 = tpu.matmul %456, %458, %cst_148 {dimension_numbers = #tpu.dot_dimension_numbers<[2], [2], [1], [1], [0, 0, 0, 1, 1, 1], [0], [0]>} : vector<2x8x8xf32>, vector<2x8x8xf32>, vector<2x8x8xf32> -> vector<2x8x8xf32>
    "tpu.trace_stop"() : () -> ()
    %cst_149 = arith.constant 0.353553385 : f32
    %462 = vector.broadcast %cst_149 : f32 to vector<2x8x8xf32>
    %463 = arith.mulf %461, %462 : vector<2x8x8xf32>
    %464 = vector.broadcast %21 : vector<1x8x8xf32> to vector<2x8x8xf32>
    %465 = arith.addf %463, %464 : vector<2x8x8xf32>
    %cst_150 = arith.constant dense<0xFF800000> : vector<2x8xf32>
    %466 = vector.multi_reduction <maximumf>, %465, %cst_150 [2] : vector<2x8x8xf32> to vector<2x8xf32>
    %467 = vector.shape_cast %466 : vector<2x8xf32> to vector<2x8x1xf32>
    %468 = vector.broadcast %467 : vector<2x8x1xf32> to vector<2x8x8xf32>
    %469 = arith.subf %465, %468 : vector<2x8x8xf32>
    %470 = math.exp %469 : vector<2x8x8xf32>
    %cst_151 = arith.constant dense<0.000000e+00> : vector<2x8xf32>
    %471 = vector.multi_reduction <add>, %470, %cst_151 [2] : vector<2x8x8xf32> to vector<2x8xf32>
    %472 = vector.shape_cast %471 : vector<2x8xf32> to vector<2x8x1xf32>
    %473 = vector.broadcast %472 : vector<2x8x1xf32> to vector<2x8x8xf32>
    %474 = arith.divf %470, %473 : vector<2x8x8xf32>
    "tpu.trace_start"() <{level = 10 : i32, message = "bts,bsd->btd"}> : () -> ()
    %cst_152 = arith.constant dense<0.000000e+00> : vector<2x8x8xf32>
    %475 = tpu.matmul %474, %460, %cst_152 {dimension_numbers = #tpu.dot_dimension_numbers<[2], [1], [1], [2], [0, 0, 0, 1, 1, 2], [0], [0]>} : vector<2x8x8xf32>, vector<2x8x8xf32>, vector<2x8x8xf32> -> vector<2x8x8xf32>
    "tpu.trace_stop"() : () -> ()
    %476 = vector.shape_cast %475 : vector<2x8x8xf32> to vector<16x8xf32>
    %477 = vector.extract_strided_slice %432 {offsets = [0, 16], sizes = [16, 8], strides = [1, 1]} : vector<16x128xf32> to vector<16x8xf32>
    %478 = vector.shape_cast %477 : vector<16x8xf32> to vector<2x8x8xf32>
    %479 = vector.extract_strided_slice %432 {offsets = [0, 48], sizes = [16, 8], strides = [1, 1]} : vector<16x128xf32> to vector<16x8xf32>
    %480 = vector.shape_cast %479 : vector<16x8xf32> to vector<2x8x8xf32>
    %481 = vector.extract_strided_slice %432 {offsets = [0, 80], sizes = [16, 8], strides = [1, 1]} : vector<16x128xf32> to vector<16x8xf32>
    %482 = vector.shape_cast %481 : vector<16x8xf32> to vector<2x8x8xf32>
    "tpu.trace_start"() <{level = 10 : i32, message = "btd,bsd->bts"}> : () -> ()
    %cst_153 = arith.constant dense<0.000000e+00> : vector<2x8x8xf32>
    %483 = tpu.matmul %478, %480, %cst_153 {dimension_numbers = #tpu.dot_dimension_numbers<[2], [2], [1], [1], [0, 0, 0, 1, 1, 1], [0], [0]>} : vector<2x8x8xf32>, vector<2x8x8xf32>, vector<2x8x8xf32> -> vector<2x8x8xf32>
    "tpu.trace_stop"() : () -> ()
    %cst_154 = arith.constant 0.353553385 : f32
    %484 = vector.broadcast %cst_154 : f32 to vector<2x8x8xf32>
    %485 = arith.mulf %483, %484 : vector<2x8x8xf32>
    %486 = vector.broadcast %21 : vector<1x8x8xf32> to vector<2x8x8xf32>
    %487 = arith.addf %485, %486 : vector<2x8x8xf32>
    %cst_155 = arith.constant dense<0xFF800000> : vector<2x8xf32>
    %488 = vector.multi_reduction <maximumf>, %487, %cst_155 [2] : vector<2x8x8xf32> to vector<2x8xf32>
    %489 = vector.shape_cast %488 : vector<2x8xf32> to vector<2x8x1xf32>
    %490 = vector.broadcast %489 : vector<2x8x1xf32> to vector<2x8x8xf32>
    %491 = arith.subf %487, %490 : vector<2x8x8xf32>
    %492 = math.exp %491 : vector<2x8x8xf32>
    %cst_156 = arith.constant dense<0.000000e+00> : vector<2x8xf32>
    %493 = vector.multi_reduction <add>, %492, %cst_156 [2] : vector<2x8x8xf32> to vector<2x8xf32>
    %494 = vector.shape_cast %493 : vector<2x8xf32> to vector<2x8x1xf32>
    %495 = vector.broadcast %494 : vector<2x8x1xf32> to vector<2x8x8xf32>
    %496 = arith.divf %492, %495 : vector<2x8x8xf32>
    "tpu.trace_start"() <{level = 10 : i32, message = "bts,bsd->btd"}> : () -> ()
    %cst_157 = arith.constant dense<0.000000e+00> : vector<2x8x8xf32>
    %497 = tpu.matmul %496, %482, %cst_157 {dimension_numbers = #tpu.dot_dimension_numbers<[2], [1], [1], [2], [0, 0, 0, 1, 1, 2], [0], [0]>} : vector<2x8x8xf32>, vector<2x8x8xf32>, vector<2x8x8xf32> -> vector<2x8x8xf32>
    "tpu.trace_stop"() : () -> ()
    %498 = vector.shape_cast %497 : vector<2x8x8xf32> to vector<16x8xf32>
    %499 = vector.extract_strided_slice %432 {offsets = [0, 24], sizes = [16, 8], strides = [1, 1]} : vector<16x128xf32> to vector<16x8xf32>
    %500 = vector.shape_cast %499 : vector<16x8xf32> to vector<2x8x8xf32>
    %501 = vector.extract_strided_slice %432 {offsets = [0, 56], sizes = [16, 8], strides = [1, 1]} : vector<16x128xf32> to vector<16x8xf32>
    %502 = vector.shape_cast %501 : vector<16x8xf32> to vector<2x8x8xf32>
    %503 = vector.extract_strided_slice %432 {offsets = [0, 88], sizes = [16, 8], strides = [1, 1]} : vector<16x128xf32> to vector<16x8xf32>
    %504 = vector.shape_cast %503 : vector<16x8xf32> to vector<2x8x8xf32>
    "tpu.trace_start"() <{level = 10 : i32, message = "btd,bsd->bts"}> : () -> ()
    %cst_158 = arith.constant dense<0.000000e+00> : vector<2x8x8xf32>
    %505 = tpu.matmul %500, %502, %cst_158 {dimension_numbers = #tpu.dot_dimension_numbers<[2], [2], [1], [1], [0, 0, 0, 1, 1, 1], [0], [0]>} : vector<2x8x8xf32>, vector<2x8x8xf32>, vector<2x8x8xf32> -> vector<2x8x8xf32>
    "tpu.trace_stop"() : () -> ()
    %cst_159 = arith.constant 0.353553385 : f32
    %506 = vector.broadcast %cst_159 : f32 to vector<2x8x8xf32>
    %507 = arith.mulf %505, %506 : vector<2x8x8xf32>
    %508 = vector.broadcast %21 : vector<1x8x8xf32> to vector<2x8x8xf32>
    %509 = arith.addf %507, %508 : vector<2x8x8xf32>
    %cst_160 = arith.constant dense<0xFF800000> : vector<2x8xf32>
    %510 = vector.multi_reduction <maximumf>, %509, %cst_160 [2] : vector<2x8x8xf32> to vector<2x8xf32>
    %511 = vector.shape_cast %510 : vector<2x8xf32> to vector<2x8x1xf32>
    %512 = vector.broadcast %511 : vector<2x8x1xf32> to vector<2x8x8xf32>
    %513 = arith.subf %509, %512 : vector<2x8x8xf32>
    %514 = math.exp %513 : vector<2x8x8xf32>
    %cst_161 = arith.constant dense<0.000000e+00> : vector<2x8xf32>
    %515 = vector.multi_reduction <add>, %514, %cst_161 [2] : vector<2x8x8xf32> to vector<2x8xf32>
    %516 = vector.shape_cast %515 : vector<2x8xf32> to vector<2x8x1xf32>
    %517 = vector.broadcast %516 : vector<2x8x1xf32> to vector<2x8x8xf32>
    %518 = arith.divf %514, %517 : vector<2x8x8xf32>
    "tpu.trace_start"() <{level = 10 : i32, message = "bts,bsd->btd"}> : () -> ()
    %cst_162 = arith.constant dense<0.000000e+00> : vector<2x8x8xf32>
    %519 = tpu.matmul %518, %504, %cst_162 {dimension_numbers = #tpu.dot_dimension_numbers<[2], [1], [1], [2], [0, 0, 0, 1, 1, 2], [0], [0]>} : vector<2x8x8xf32>, vector<2x8x8xf32>, vector<2x8x8xf32> -> vector<2x8x8xf32>
    "tpu.trace_stop"() : () -> ()
    %520 = vector.shape_cast %519 : vector<2x8x8xf32> to vector<16x8xf32>
    %521 = tpu.concatenate %454, %476, %498, %520 in 1 : vector<16x8xf32>, vector<16x8xf32>, vector<16x8xf32>, vector<16x8xf32> -> vector<16x32xf32>
    %cst_163 = arith.constant dense<0.000000e+00> : vector<16x32xf32>
    %522 = tpu.matmul %521, %398, %cst_163 {dimension_numbers = #tpu.dot_dimension_numbers<[1], [0], [0], [1], [0, 0, 1, 1], [], []>} : vector<16x32xf32>, vector<32x32xf32>, vector<16x32xf32> -> vector<16x32xf32>
    %523 = arith.addf %390, %522 : vector<16x32xf32>
    %524 = vector.extract_strided_slice %392 {offsets = [4, 0], sizes = [1, 32], strides = [1, 1]} : vector<8x128xf32> to vector<1x32xf32>
    %525 = vector.broadcast %524 : vector<1x32xf32> to vector<16x32xf32>
    %526 = arith.addf %523, %525 : vector<16x32xf32>
    %527 = vector.extract_strided_slice %392 {offsets = [2, 0], sizes = [1, 32], strides = [1, 1]} : vector<8x128xf32> to vector<1x32xf32>
    %528 = vector.extract_strided_slice %392 {offsets = [3, 0], sizes = [1, 32], strides = [1, 1]} : vector<8x128xf32> to vector<1x32xf32>
    %cst_164 = arith.constant dense<0.000000e+00> : vector<16xf32>
    %529 = vector.multi_reduction <add>, %526, %cst_164 [1] : vector<16x32xf32> to vector<16xf32>
    %530 = vector.shape_cast %529 : vector<16xf32> to vector<16x1xf32>
    %cst_165 = arith.constant 3.200000e+01 : f32
    %531 = vector.broadcast %cst_165 : f32 to vector<16x1xf32>
    %532 = arith.divf %530, %531 : vector<16x1xf32>
    %533 = vector.broadcast %532 : vector<16x1xf32> to vector<16x32xf32>
    %534 = arith.subf %526, %533 : vector<16x32xf32>
    %535 = arith.mulf %534, %534 : vector<16x32xf32>
    %cst_166 = arith.constant dense<0.000000e+00> : vector<16xf32>
    %536 = vector.multi_reduction <add>, %535, %cst_166 [1] : vector<16x32xf32> to vector<16xf32>
    %537 = vector.shape_cast %536 : vector<16xf32> to vector<16x1xf32>
    %cst_167 = arith.constant 3.200000e+01 : f32
    %538 = vector.broadcast %cst_167 : f32 to vector<16x1xf32>
    %539 = arith.divf %537, %538 : vector<16x1xf32>
    %540 = vector.broadcast %532 : vector<16x1xf32> to vector<16x32xf32>
    %541 = arith.subf %526, %540 : vector<16x32xf32>
    %cst_168 = arith.constant 9.99999974E-6 : f32
    %542 = vector.broadcast %cst_168 : f32 to vector<16x1xf32>
    %543 = arith.addf %539, %542 : vector<16x1xf32>
    %544 = math.rsqrt %543 : vector<16x1xf32>
    %545 = vector.broadcast %544 : vector<16x1xf32> to vector<16x32xf32>
    %546 = arith.mulf %541, %545 : vector<16x32xf32>
    %547 = vector.broadcast %527 : vector<1x32xf32> to vector<16x32xf32>
    %548 = arith.mulf %546, %547 : vector<16x32xf32>
    %549 = vector.broadcast %528 : vector<1x32xf32> to vector<16x32xf32>
    %550 = arith.addf %548, %549 : vector<16x32xf32>
    %cst_169 = arith.constant dense<0.000000e+00> : vector<16x128xf32>
    %551 = tpu.matmul %550, %401, %cst_169 {dimension_numbers = #tpu.dot_dimension_numbers<[1], [0], [0], [1], [0, 0, 1, 1], [], []>} : vector<16x32xf32>, vector<32x128xf32>, vector<16x128xf32> -> vector<16x128xf32>
    %552 = vector.extract_strided_slice %392 {offsets = [6, 0], sizes = [1, 128], strides = [1, 1]} : vector<8x128xf32> to vector<1x128xf32>
    %553 = vector.broadcast %552 : vector<1x128xf32> to vector<16x128xf32>
    %554 = arith.addf %551, %553 : vector<16x128xf32>
    %cst_170 = arith.constant dense<0xFF800000> : vector<16xf32>
    %555 = vector.multi_reduction <maximumf>, %554, %cst_170 [1] : vector<16x128xf32> to vector<16xf32>
    %556 = vector.shape_cast %555 : vector<16xf32> to vector<16x1xf32>
    %557 = vector.broadcast %556 : vector<16x1xf32> to vector<16x128xf32>
    %558 = arith.cmpf oge, %554, %557 : vector<16x128xf32>
    %cst_171 = arith.constant -1.000000e+30 : f32
    %559 = vector.broadcast %cst_171 : f32 to vector<16x128xf32>
    %560 = arith.select %558, %559, %554 : vector<16x128xi1>, vector<16x128xf32>
    %cst_172 = arith.constant dense<0xFF800000> : vector<16xf32>
    %561 = vector.multi_reduction <maximumf>, %560, %cst_172 [1] : vector<16x128xf32> to vector<16xf32>
    %562 = vector.shape_cast %561 : vector<16xf32> to vector<16x1xf32>
    %563 = vector.broadcast %562 : vector<16x1xf32> to vector<16x128xf32>
    %564 = arith.cmpf oge, %560, %563 : vector<16x128xf32>
    %cst_173 = arith.constant -1.000000e+30 : f32
    %565 = vector.broadcast %cst_173 : f32 to vector<16x128xf32>
    %566 = arith.select %564, %565, %560 : vector<16x128xi1>, vector<16x128xf32>
    %cst_174 = arith.constant dense<0xFF800000> : vector<16xf32>
    %567 = vector.multi_reduction <maximumf>, %566, %cst_174 [1] : vector<16x128xf32> to vector<16xf32>
    %568 = vector.shape_cast %567 : vector<16xf32> to vector<16x1xf32>
    %569 = vector.broadcast %568 : vector<16x1xf32> to vector<16x128xf32>
    %570 = arith.cmpf oge, %566, %569 : vector<16x128xf32>
    %cst_175 = arith.constant -1.000000e+30 : f32
    %571 = vector.broadcast %cst_175 : f32 to vector<16x128xf32>
    %572 = arith.select %570, %571, %566 : vector<16x128xi1>, vector<16x128xf32>
    %cst_176 = arith.constant dense<0xFF800000> : vector<16xf32>
    %573 = vector.multi_reduction <maximumf>, %572, %cst_176 [1] : vector<16x128xf32> to vector<16xf32>
    %574 = vector.shape_cast %573 : vector<16xf32> to vector<16x1xf32>
    %575 = vector.broadcast %574 : vector<16x1xf32> to vector<16x128xf32>
    %576 = arith.cmpf oge, %572, %575 : vector<16x128xf32>
    %cst_177 = arith.constant -1.000000e+30 : f32
    %577 = vector.broadcast %cst_177 : f32 to vector<16x128xf32>
    %578 = arith.select %576, %577, %572 : vector<16x128xi1>, vector<16x128xf32>
    %cst_178 = arith.constant dense<0xFF800000> : vector<16xf32>
    %579 = vector.multi_reduction <maximumf>, %578, %cst_178 [1] : vector<16x128xf32> to vector<16xf32>
    %580 = vector.shape_cast %579 : vector<16xf32> to vector<16x1xf32>
    %581 = vector.broadcast %580 : vector<16x1xf32> to vector<16x128xf32>
    %582 = arith.cmpf oge, %578, %581 : vector<16x128xf32>
    %cst_179 = arith.constant -1.000000e+30 : f32
    %583 = vector.broadcast %cst_179 : f32 to vector<16x128xf32>
    %584 = arith.select %582, %583, %578 : vector<16x128xi1>, vector<16x128xf32>
    %cst_180 = arith.constant dense<0xFF800000> : vector<16xf32>
    %585 = vector.multi_reduction <maximumf>, %584, %cst_180 [1] : vector<16x128xf32> to vector<16xf32>
    %586 = vector.shape_cast %585 : vector<16xf32> to vector<16x1xf32>
    %587 = vector.broadcast %586 : vector<16x1xf32> to vector<16x128xf32>
    %588 = arith.cmpf oge, %584, %587 : vector<16x128xf32>
    %cst_181 = arith.constant -1.000000e+30 : f32
    %589 = vector.broadcast %cst_181 : f32 to vector<16x128xf32>
    %590 = arith.select %588, %589, %584 : vector<16x128xi1>, vector<16x128xf32>
    %cst_182 = arith.constant dense<0xFF800000> : vector<16xf32>
    %591 = vector.multi_reduction <maximumf>, %590, %cst_182 [1] : vector<16x128xf32> to vector<16xf32>
    %592 = vector.shape_cast %591 : vector<16xf32> to vector<16x1xf32>
    %593 = vector.broadcast %592 : vector<16x1xf32> to vector<16x128xf32>
    %594 = arith.cmpf oge, %590, %593 : vector<16x128xf32>
    %cst_183 = arith.constant -1.000000e+30 : f32
    %595 = vector.broadcast %cst_183 : f32 to vector<16x128xf32>
    %596 = arith.select %594, %595, %590 : vector<16x128xi1>, vector<16x128xf32>
    %cst_184 = arith.constant dense<0xFF800000> : vector<16xf32>
    %597 = vector.multi_reduction <maximumf>, %596, %cst_184 [1] : vector<16x128xf32> to vector<16xf32>
    %598 = vector.shape_cast %597 : vector<16xf32> to vector<16x1xf32>
    %599 = vector.broadcast %598 : vector<16x1xf32> to vector<16x128xf32>
    %600 = arith.cmpf oge, %596, %599 : vector<16x128xf32>
    %cst_185 = arith.constant -1.000000e+30 : f32
    %601 = vector.broadcast %cst_185 : f32 to vector<16x128xf32>
    %602 = arith.select %600, %601, %596 : vector<16x128xi1>, vector<16x128xf32>
    %cst_186 = arith.constant dense<0xFF800000> : vector<16xf32>
    %603 = vector.multi_reduction <maximumf>, %602, %cst_186 [1] : vector<16x128xf32> to vector<16xf32>
    %604 = vector.shape_cast %603 : vector<16xf32> to vector<16x1xf32>
    %605 = vector.broadcast %604 : vector<16x1xf32> to vector<16x128xf32>
    %606 = arith.cmpf oge, %602, %605 : vector<16x128xf32>
    %cst_187 = arith.constant -1.000000e+30 : f32
    %607 = vector.broadcast %cst_187 : f32 to vector<16x128xf32>
    %608 = arith.select %606, %607, %602 : vector<16x128xi1>, vector<16x128xf32>
    %cst_188 = arith.constant dense<0xFF800000> : vector<16xf32>
    %609 = vector.multi_reduction <maximumf>, %608, %cst_188 [1] : vector<16x128xf32> to vector<16xf32>
    %610 = vector.shape_cast %609 : vector<16xf32> to vector<16x1xf32>
    %611 = vector.broadcast %610 : vector<16x1xf32> to vector<16x128xf32>
    %612 = arith.cmpf oge, %608, %611 : vector<16x128xf32>
    %cst_189 = arith.constant -1.000000e+30 : f32
    %613 = vector.broadcast %cst_189 : f32 to vector<16x128xf32>
    %614 = arith.select %612, %613, %608 : vector<16x128xi1>, vector<16x128xf32>
    %cst_190 = arith.constant dense<0xFF800000> : vector<16xf32>
    %615 = vector.multi_reduction <maximumf>, %614, %cst_190 [1] : vector<16x128xf32> to vector<16xf32>
    %616 = vector.shape_cast %615 : vector<16xf32> to vector<16x1xf32>
    %617 = vector.broadcast %616 : vector<16x1xf32> to vector<16x128xf32>
    %618 = arith.cmpf oge, %614, %617 : vector<16x128xf32>
    %cst_191 = arith.constant -1.000000e+30 : f32
    %619 = vector.broadcast %cst_191 : f32 to vector<16x128xf32>
    %620 = arith.select %618, %619, %614 : vector<16x128xi1>, vector<16x128xf32>
    %cst_192 = arith.constant dense<0xFF800000> : vector<16xf32>
    %621 = vector.multi_reduction <maximumf>, %620, %cst_192 [1] : vector<16x128xf32> to vector<16xf32>
    %622 = vector.shape_cast %621 : vector<16xf32> to vector<16x1xf32>
    %623 = vector.broadcast %622 : vector<16x1xf32> to vector<16x128xf32>
    %624 = arith.cmpf oge, %620, %623 : vector<16x128xf32>
    %cst_193 = arith.constant -1.000000e+30 : f32
    %625 = vector.broadcast %cst_193 : f32 to vector<16x128xf32>
    %626 = arith.select %624, %625, %620 : vector<16x128xi1>, vector<16x128xf32>
    %cst_194 = arith.constant dense<0xFF800000> : vector<16xf32>
    %627 = vector.multi_reduction <maximumf>, %626, %cst_194 [1] : vector<16x128xf32> to vector<16xf32>
    %628 = vector.shape_cast %627 : vector<16xf32> to vector<16x1xf32>
    %629 = vector.broadcast %628 : vector<16x1xf32> to vector<16x128xf32>
    %630 = arith.cmpf oge, %626, %629 : vector<16x128xf32>
    %cst_195 = arith.constant -1.000000e+30 : f32
    %631 = vector.broadcast %cst_195 : f32 to vector<16x128xf32>
    %632 = arith.select %630, %631, %626 : vector<16x128xi1>, vector<16x128xf32>
    %cst_196 = arith.constant dense<0xFF800000> : vector<16xf32>
    %633 = vector.multi_reduction <maximumf>, %632, %cst_196 [1] : vector<16x128xf32> to vector<16xf32>
    %634 = vector.shape_cast %633 : vector<16xf32> to vector<16x1xf32>
    %635 = vector.broadcast %634 : vector<16x1xf32> to vector<16x128xf32>
    %636 = arith.cmpf oge, %632, %635 : vector<16x128xf32>
    %cst_197 = arith.constant -1.000000e+30 : f32
    %637 = vector.broadcast %cst_197 : f32 to vector<16x128xf32>
    %638 = arith.select %636, %637, %632 : vector<16x128xi1>, vector<16x128xf32>
    %cst_198 = arith.constant dense<0xFF800000> : vector<16xf32>
    %639 = vector.multi_reduction <maximumf>, %638, %cst_198 [1] : vector<16x128xf32> to vector<16xf32>
    %640 = vector.shape_cast %639 : vector<16xf32> to vector<16x1xf32>
    %641 = vector.broadcast %640 : vector<16x1xf32> to vector<16x128xf32>
    %642 = arith.cmpf oge, %638, %641 : vector<16x128xf32>
    %cst_199 = arith.constant -1.000000e+30 : f32
    %643 = vector.broadcast %cst_199 : f32 to vector<16x128xf32>
    %644 = arith.select %642, %643, %638 : vector<16x128xi1>, vector<16x128xf32>
    %cst_200 = arith.constant dense<0xFF800000> : vector<16xf32>
    %645 = vector.multi_reduction <maximumf>, %644, %cst_200 [1] : vector<16x128xf32> to vector<16xf32>
    %646 = vector.shape_cast %645 : vector<16xf32> to vector<16x1xf32>
    %647 = vector.broadcast %646 : vector<16x1xf32> to vector<16x128xf32>
    %648 = arith.cmpf oge, %644, %647 : vector<16x128xf32>
    %cst_201 = arith.constant -1.000000e+30 : f32
    %649 = vector.broadcast %cst_201 : f32 to vector<16x128xf32>
    %650 = arith.select %648, %649, %644 : vector<16x128xi1>, vector<16x128xf32>
    %cst_202 = arith.constant dense<0xFF800000> : vector<16xf32>
    %651 = vector.multi_reduction <maximumf>, %650, %cst_202 [1] : vector<16x128xf32> to vector<16xf32>
    %652 = vector.shape_cast %651 : vector<16xf32> to vector<16x1xf32>
    %653 = vector.broadcast %652 : vector<16x1xf32> to vector<16x128xf32>
    %654 = arith.cmpf oge, %650, %653 : vector<16x128xf32>
    %cst_203 = arith.constant -1.000000e+30 : f32
    %655 = vector.broadcast %cst_203 : f32 to vector<16x128xf32>
    %656 = arith.select %654, %655, %650 : vector<16x128xi1>, vector<16x128xf32>
    %cst_204 = arith.constant dense<0xFF800000> : vector<16xf32>
    %657 = vector.multi_reduction <maximumf>, %656, %cst_204 [1] : vector<16x128xf32> to vector<16xf32>
    %658 = vector.shape_cast %657 : vector<16xf32> to vector<16x1xf32>
    %659 = vector.broadcast %658 : vector<16x1xf32> to vector<16x128xf32>
    %660 = arith.cmpf oge, %656, %659 : vector<16x128xf32>
    %cst_205 = arith.constant -1.000000e+30 : f32
    %661 = vector.broadcast %cst_205 : f32 to vector<16x128xf32>
    %662 = arith.select %660, %661, %656 : vector<16x128xi1>, vector<16x128xf32>
    %cst_206 = arith.constant dense<0xFF800000> : vector<16xf32>
    %663 = vector.multi_reduction <maximumf>, %662, %cst_206 [1] : vector<16x128xf32> to vector<16xf32>
    %664 = vector.shape_cast %663 : vector<16xf32> to vector<16x1xf32>
    %665 = vector.broadcast %664 : vector<16x1xf32> to vector<16x128xf32>
    %666 = arith.cmpf oge, %662, %665 : vector<16x128xf32>
    %cst_207 = arith.constant -1.000000e+30 : f32
    %667 = vector.broadcast %cst_207 : f32 to vector<16x128xf32>
    %668 = arith.select %666, %667, %662 : vector<16x128xi1>, vector<16x128xf32>
    %cst_208 = arith.constant dense<0xFF800000> : vector<16xf32>
    %669 = vector.multi_reduction <maximumf>, %668, %cst_208 [1] : vector<16x128xf32> to vector<16xf32>
    %670 = vector.shape_cast %669 : vector<16xf32> to vector<16x1xf32>
    %671 = vector.broadcast %670 : vector<16x1xf32> to vector<16x128xf32>
    %672 = arith.cmpf oge, %668, %671 : vector<16x128xf32>
    %cst_209 = arith.constant -1.000000e+30 : f32
    %673 = vector.broadcast %cst_209 : f32 to vector<16x128xf32>
    %674 = arith.select %672, %673, %668 : vector<16x128xi1>, vector<16x128xf32>
    %cst_210 = arith.constant dense<0xFF800000> : vector<16xf32>
    %675 = vector.multi_reduction <maximumf>, %674, %cst_210 [1] : vector<16x128xf32> to vector<16xf32>
    %676 = vector.shape_cast %675 : vector<16xf32> to vector<16x1xf32>
    %677 = vector.broadcast %676 : vector<16x1xf32> to vector<16x128xf32>
    %678 = arith.cmpf oge, %674, %677 : vector<16x128xf32>
    %cst_211 = arith.constant -1.000000e+30 : f32
    %679 = vector.broadcast %cst_211 : f32 to vector<16x128xf32>
    %680 = arith.select %678, %679, %674 : vector<16x128xi1>, vector<16x128xf32>
    %cst_212 = arith.constant dense<0xFF800000> : vector<16xf32>
    %681 = vector.multi_reduction <maximumf>, %680, %cst_212 [1] : vector<16x128xf32> to vector<16xf32>
    %682 = vector.shape_cast %681 : vector<16xf32> to vector<16x1xf32>
    %683 = vector.broadcast %682 : vector<16x1xf32> to vector<16x128xf32>
    %684 = arith.cmpf oge, %680, %683 : vector<16x128xf32>
    %cst_213 = arith.constant -1.000000e+30 : f32
    %685 = vector.broadcast %cst_213 : f32 to vector<16x128xf32>
    %686 = arith.select %684, %685, %680 : vector<16x128xi1>, vector<16x128xf32>
    %cst_214 = arith.constant dense<0xFF800000> : vector<16xf32>
    %687 = vector.multi_reduction <maximumf>, %686, %cst_214 [1] : vector<16x128xf32> to vector<16xf32>
    %688 = vector.shape_cast %687 : vector<16xf32> to vector<16x1xf32>
    %689 = vector.broadcast %688 : vector<16x1xf32> to vector<16x128xf32>
    %690 = arith.cmpf oge, %686, %689 : vector<16x128xf32>
    %cst_215 = arith.constant -1.000000e+30 : f32
    %691 = vector.broadcast %cst_215 : f32 to vector<16x128xf32>
    %692 = arith.select %690, %691, %686 : vector<16x128xi1>, vector<16x128xf32>
    %cst_216 = arith.constant dense<0xFF800000> : vector<16xf32>
    %693 = vector.multi_reduction <maximumf>, %692, %cst_216 [1] : vector<16x128xf32> to vector<16xf32>
    %694 = vector.shape_cast %693 : vector<16xf32> to vector<16x1xf32>
    %695 = vector.broadcast %694 : vector<16x1xf32> to vector<16x128xf32>
    %696 = arith.cmpf oge, %692, %695 : vector<16x128xf32>
    %cst_217 = arith.constant -1.000000e+30 : f32
    %697 = vector.broadcast %cst_217 : f32 to vector<16x128xf32>
    %698 = arith.select %696, %697, %692 : vector<16x128xi1>, vector<16x128xf32>
    %cst_218 = arith.constant dense<0xFF800000> : vector<16xf32>
    %699 = vector.multi_reduction <maximumf>, %698, %cst_218 [1] : vector<16x128xf32> to vector<16xf32>
    %700 = vector.shape_cast %699 : vector<16xf32> to vector<16x1xf32>
    %701 = vector.broadcast %700 : vector<16x1xf32> to vector<16x128xf32>
    %702 = arith.cmpf oge, %698, %701 : vector<16x128xf32>
    %cst_219 = arith.constant -1.000000e+30 : f32
    %703 = vector.broadcast %cst_219 : f32 to vector<16x128xf32>
    %704 = arith.select %702, %703, %698 : vector<16x128xi1>, vector<16x128xf32>
    %cst_220 = arith.constant dense<0xFF800000> : vector<16xf32>
    %705 = vector.multi_reduction <maximumf>, %704, %cst_220 [1] : vector<16x128xf32> to vector<16xf32>
    %706 = vector.shape_cast %705 : vector<16xf32> to vector<16x1xf32>
    %707 = vector.broadcast %706 : vector<16x1xf32> to vector<16x128xf32>
    %708 = arith.cmpf oge, %554, %707 : vector<16x128xf32>
    %cst_221 = arith.constant 0.000000e+00 : f32
    %709 = vector.broadcast %cst_221 : f32 to vector<16x128xf32>
    %710 = arith.select %708, %554, %709 : vector<16x128xi1>, vector<16x128xf32>
    %cst_222 = arith.constant 5.000000e-01 : f32
    %711 = vector.broadcast %cst_222 : f32 to vector<16x128xf32>
    %712 = arith.mulf %711, %710 : vector<16x128xf32>
    %cst_223 = arith.constant 1.41421354 : f32
    %713 = vector.broadcast %cst_223 : f32 to vector<16x128xf32>
    %714 = arith.divf %710, %713 : vector<16x128xf32>
    %715 = math.erf %714 : vector<16x128xf32>
    %cst_224 = arith.constant 1.000000e+00 : f32
    %716 = vector.broadcast %cst_224 : f32 to vector<16x128xf32>
    %717 = arith.addf %716, %715 : vector<16x128xf32>
    %718 = arith.mulf %712, %717 : vector<16x128xf32>
    %cst_225 = arith.constant dense<0.000000e+00> : vector<16x32xf32>
    %719 = tpu.matmul %718, %404, %cst_225 {dimension_numbers = #tpu.dot_dimension_numbers<[1], [0], [0], [1], [0, 0, 1, 1], [], []>} : vector<16x128xf32>, vector<128x32xf32>, vector<16x32xf32> -> vector<16x32xf32>
    %720 = vector.extract_strided_slice %392 {offsets = [5, 0], sizes = [1, 32], strides = [1, 1]} : vector<8x128xf32> to vector<1x32xf32>
    %721 = vector.broadcast %720 : vector<1x32xf32> to vector<16x32xf32>
    %722 = arith.addf %719, %721 : vector<16x32xf32>
    %cst_226 = arith.constant dense<0xFF800000> : vector<16xf32>
    %723 = vector.multi_reduction <maximumf>, %722, %cst_226 [1] : vector<16x32xf32> to vector<16xf32>
    %724 = vector.shape_cast %723 : vector<16xf32> to vector<16x1xf32>
    %725 = vector.broadcast %724 : vector<16x1xf32> to vector<16x32xf32>
    %726 = arith.cmpf oge, %722, %725 : vector<16x32xf32>
    %cst_227 = arith.constant -1.000000e+30 : f32
    %727 = vector.broadcast %cst_227 : f32 to vector<16x32xf32>
    %728 = arith.select %726, %727, %722 : vector<16x32xi1>, vector<16x32xf32>
    %cst_228 = arith.constant dense<0xFF800000> : vector<16xf32>
    %729 = vector.multi_reduction <maximumf>, %728, %cst_228 [1] : vector<16x32xf32> to vector<16xf32>
    %730 = vector.shape_cast %729 : vector<16xf32> to vector<16x1xf32>
    %731 = vector.broadcast %730 : vector<16x1xf32> to vector<16x32xf32>
    %732 = arith.cmpf oge, %728, %731 : vector<16x32xf32>
    %cst_229 = arith.constant -1.000000e+30 : f32
    %733 = vector.broadcast %cst_229 : f32 to vector<16x32xf32>
    %734 = arith.select %732, %733, %728 : vector<16x32xi1>, vector<16x32xf32>
    %cst_230 = arith.constant dense<0xFF800000> : vector<16xf32>
    %735 = vector.multi_reduction <maximumf>, %734, %cst_230 [1] : vector<16x32xf32> to vector<16xf32>
    %736 = vector.shape_cast %735 : vector<16xf32> to vector<16x1xf32>
    %737 = vector.broadcast %736 : vector<16x1xf32> to vector<16x32xf32>
    %738 = arith.cmpf oge, %734, %737 : vector<16x32xf32>
    %cst_231 = arith.constant -1.000000e+30 : f32
    %739 = vector.broadcast %cst_231 : f32 to vector<16x32xf32>
    %740 = arith.select %738, %739, %734 : vector<16x32xi1>, vector<16x32xf32>
    %cst_232 = arith.constant dense<0xFF800000> : vector<16xf32>
    %741 = vector.multi_reduction <maximumf>, %740, %cst_232 [1] : vector<16x32xf32> to vector<16xf32>
    %742 = vector.shape_cast %741 : vector<16xf32> to vector<16x1xf32>
    %743 = vector.broadcast %742 : vector<16x1xf32> to vector<16x32xf32>
    %744 = arith.cmpf oge, %740, %743 : vector<16x32xf32>
    %cst_233 = arith.constant -1.000000e+30 : f32
    %745 = vector.broadcast %cst_233 : f32 to vector<16x32xf32>
    %746 = arith.select %744, %745, %740 : vector<16x32xi1>, vector<16x32xf32>
    %cst_234 = arith.constant dense<0xFF800000> : vector<16xf32>
    %747 = vector.multi_reduction <maximumf>, %746, %cst_234 [1] : vector<16x32xf32> to vector<16xf32>
    %748 = vector.shape_cast %747 : vector<16xf32> to vector<16x1xf32>
    %749 = vector.broadcast %748 : vector<16x1xf32> to vector<16x32xf32>
    %750 = arith.cmpf oge, %746, %749 : vector<16x32xf32>
    %cst_235 = arith.constant -1.000000e+30 : f32
    %751 = vector.broadcast %cst_235 : f32 to vector<16x32xf32>
    %752 = arith.select %750, %751, %746 : vector<16x32xi1>, vector<16x32xf32>
    %cst_236 = arith.constant dense<0xFF800000> : vector<16xf32>
    %753 = vector.multi_reduction <maximumf>, %752, %cst_236 [1] : vector<16x32xf32> to vector<16xf32>
    %754 = vector.shape_cast %753 : vector<16xf32> to vector<16x1xf32>
    %755 = vector.broadcast %754 : vector<16x1xf32> to vector<16x32xf32>
    %756 = arith.cmpf oge, %722, %755 : vector<16x32xf32>
    %cst_237 = arith.constant 0.000000e+00 : f32
    %757 = vector.broadcast %cst_237 : f32 to vector<16x32xf32>
    %758 = arith.select %756, %722, %757 : vector<16x32xi1>, vector<16x32xf32>
    %759 = arith.addf %526, %758 : vector<16x32xf32>
    %c2 = arith.constant 2 : index
    %c0_238 = arith.constant 0 : index
    %c0_239 = arith.constant 0 : index
    %760 = vector.load %arg4[%c2, %c0_238, %c0_239] : memref<3x8x128xf32, #tpu.memory_space<vmem>>, vector<1x8x128xf32>
    %761 = vector.shape_cast %760 : vector<1x8x128xf32> to vector<8x128xf32>
    %762 = vector.extract_strided_slice %761 {offsets = [0, 0], sizes = [1, 32], strides = [1, 1]} : vector<8x128xf32> to vector<1x32xf32>
    %763 = vector.extract_strided_slice %761 {offsets = [1, 0], sizes = [1, 32], strides = [1, 1]} : vector<8x128xf32> to vector<1x32xf32>
    %cst_240 = arith.constant dense<0.000000e+00> : vector<16xf32>
    %764 = vector.multi_reduction <add>, %759, %cst_240 [1] : vector<16x32xf32> to vector<16xf32>
    %765 = vector.shape_cast %764 : vector<16xf32> to vector<16x1xf32>
    %cst_241 = arith.constant 3.200000e+01 : f32
    %766 = vector.broadcast %cst_241 : f32 to vector<16x1xf32>
    %767 = arith.divf %765, %766 : vector<16x1xf32>
    %768 = vector.broadcast %767 : vector<16x1xf32> to vector<16x32xf32>
    %769 = arith.subf %759, %768 : vector<16x32xf32>
    %770 = arith.mulf %769, %769 : vector<16x32xf32>
    %cst_242 = arith.constant dense<0.000000e+00> : vector<16xf32>
    %771 = vector.multi_reduction <add>, %770, %cst_242 [1] : vector<16x32xf32> to vector<16xf32>
    %772 = vector.shape_cast %771 : vector<16xf32> to vector<16x1xf32>
    %cst_243 = arith.constant 3.200000e+01 : f32
    %773 = vector.broadcast %cst_243 : f32 to vector<16x1xf32>
    %774 = arith.divf %772, %773 : vector<16x1xf32>
    %775 = vector.broadcast %767 : vector<16x1xf32> to vector<16x32xf32>
    %776 = arith.subf %759, %775 : vector<16x32xf32>
    %cst_244 = arith.constant 9.99999974E-6 : f32
    %777 = vector.broadcast %cst_244 : f32 to vector<16x1xf32>
    %778 = arith.addf %774, %777 : vector<16x1xf32>
    %779 = math.rsqrt %778 : vector<16x1xf32>
    %780 = vector.broadcast %779 : vector<16x1xf32> to vector<16x32xf32>
    %781 = arith.mulf %776, %780 : vector<16x32xf32>
    %782 = vector.broadcast %762 : vector<1x32xf32> to vector<16x32xf32>
    %783 = arith.mulf %781, %782 : vector<16x32xf32>
    %784 = vector.broadcast %763 : vector<1x32xf32> to vector<16x32xf32>
    %785 = arith.addf %783, %784 : vector<16x32xf32>
    %c0_245 = arith.constant 0 : index
    %c0_246 = arith.constant 0 : index
    %786 = vector.load %arg9[%c0_245, %c0_246] : memref<32x128xbf16, #tpu.memory_space<vmem>>, vector<32x128xbf16>
    %787 = arith.extf %786 : vector<32x128xbf16> to vector<32x128xf32>
    %cst_247 = arith.constant dense<0.000000e+00> : vector<16x128xf32>
    %788 = tpu.matmul %785, %787, %cst_247 {dimension_numbers = #tpu.dot_dimension_numbers<[1], [0], [0], [1], [0, 0, 1, 1], [], []>} : vector<16x32xf32>, vector<32x128xf32>, vector<16x128xf32> -> vector<16x128xf32>
    %c0_248 = arith.constant 0 : index
    %c0_249 = arith.constant 0 : index
    %789 = vector.load %arg10[%c0_248, %c0_249] : memref<16x128xf32, #tpu.memory_space<vmem>>, vector<16x128xf32>
    tpu.vector_store %arg10[%c0_248, %c0_249], %788 {strides = array<i32>} : memref<16x128xf32, #tpu.memory_space<vmem>>, vector<16x128xf32>,
    return
  }
  func.func @transform_0(%arg0: i32) -> (i32, i32) {
    %c0_i32 = arith.constant 0 : i32
    %c0_i32_0 = arith.constant 0 : i32
    %c0_i32_1 = arith.constant 0 : i32
    return %c0_i32, %c0_i32_0 : i32, i32
  }
  func.func @transform_1(%arg0: i32) -> (i32, i32) {
    %c0_i32 = arith.constant 0 : i32
    %c0_i32_0 = arith.constant 0 : i32
    %c0_i32_1 = arith.constant 0 : i32
    return %c0_i32, %c0_i32_0 : i32, i32
  }
  func.func @transform_2(%arg0: i32) -> (i32, i32) {
    %c0_i32 = arith.constant 0 : i32
    %c0_i32_0 = arith.constant 0 : i32
    %c0_i32_1 = arith.constant 0 : i32
    return %c0_i32, %c0_i32_0 : i32, i32
  }
  func.func @transform_3(%arg0: i32) -> (i32, i32, i32) {
    %c0_i32 = arith.constant 0 : i32
    %c0_i32_0 = arith.constant 0 : i32
    %c0_i32_1 = arith.constant 0 : i32
    %c0_i32_2 = arith.constant 0 : i32
    return %c0_i32, %c0_i32_0, %c0_i32_1 : i32, i32, i32
  }
  func.func @transform_4(%arg0: i32) -> (i32, i32, i32) {
    %c0_i32 = arith.constant 0 : i32
    %c0_i32_0 = arith.constant 0 : i32
    %c0_i32_1 = arith.constant 0 : i32
    %c0_i32_2 = arith.constant 0 : i32
    return %c0_i32, %c0_i32_0, %c0_i32_1 : i32, i32, i32
  }
  func.func @transform_5(%arg0: i32) -> (i32, i32, i32) {
    %c0_i32 = arith.constant 0 : i32
    %c0_i32_0 = arith.constant 0 : i32
    %c0_i32_1 = arith.constant 0 : i32
    %c0_i32_2 = arith.constant 0 : i32
    return %c0_i32, %c0_i32_0, %c0_i32_1 : i32, i32, i32
  }
  func.func @transform_6(%arg0: i32) -> (i32, i32, i32) {
    %c0_i32 = arith.constant 0 : i32
    %c0_i32_0 = arith.constant 0 : i32
    %c0_i32_1 = arith.constant 0 : i32
    %c0_i32_2 = arith.constant 0 : i32
    return %c0_i32, %c0_i32_0, %c0_i32_1 : i32, i32, i32
  }
  func.func @transform_7(%arg0: i32) -> (i32, i32, i32) {
    %c0_i32 = arith.constant 0 : i32
    %c0_i32_0 = arith.constant 0 : i32
    %c0_i32_1 = arith.constant 0 : i32
    %c0_i32_2 = arith.constant 0 : i32
    return %c0_i32, %c0_i32_0, %c0_i32_1 : i32, i32, i32
  }
  func.func @transform_8(%arg0: i32) -> (i32, i32) {
    %c0_i32 = arith.constant 0 : i32
    %c0_i32_0 = arith.constant 0 : i32
    %c0_i32_1 = arith.constant 0 : i32
    return %c0_i32, %c0_i32_0 : i32, i32
  }
  func.func @transform_9(%arg0: i32) -> (i32, i32) {
    %c0_i32 = arith.constant 0 : i32
    %c0_i32_0 = arith.constant 0 : i32
    %c0_i32_1 = arith.constant 0 : i32
    return %c0_i32, %c0_i32_0 : i32, i32
  }
}

</mosaic_0001>

<llo_original>
// kernel: tpu_custom_call.1
$region0: #{tpu_custom_call.1}
  #allocation0 [shape = 'u32[]', space=smem, size = 0x4, offset = 0x4, fixed_abs, tag = 'smem constant byte address 0x4 - core index']
  #allocation1 [shape = 'u32[144,128]{1,0:T(1,128)}', space=vmem, size = 0x12000, scoped, tag = 'internal scratch']
  %s0 = inlined_call_operand.vmem [shape: s32[16,1], index: 0, kind: input, shape index: {}]
  %s1 = inlined_call_operand.vmem [shape: bf16[64,32], index: 1, kind: input, shape index: {}]
  %s2 = inlined_call_operand.vmem [shape: f32[16,32], index: 2, kind: input, shape index: {}]
  %s3 = inlined_call_operand.vmem [shape: f32[3,8,128], index: 3, kind: input, shape index: {}]
  %s4 = inlined_call_operand.vmem [shape: bf16[2,32,128], index: 4, kind: input, shape index: {}]
  %s5 = inlined_call_operand.vmem [shape: bf16[2,32,32], index: 5, kind: input, shape index: {}]
  %s6 = inlined_call_operand.vmem [shape: bf16[2,32,128], index: 6, kind: input, shape index: {}]
  %s7 = inlined_call_operand.vmem [shape: bf16[2,128,32], index: 7, kind: input, shape index: {}]
  %s8 = inlined_call_operand.vmem [shape: bf16[32,128], index: 8, kind: input, shape index: {}]
  %s9 = inlined_call_operand.hbm [shape: f32[16,128], index: 9, kind: output, shape index: {}]
  %s10 = sld [smem:[#allocation0]]
  $region46: #{tpu_custom_call.1} parent=0
    _
  %s12 = ssub.s32 1, %s10
  %s13 = scalar_select 0, %s12, %s10
  $region1: #{tpu_custom_call.1} parent=0
    #allocation2 [shape = 'u8[8192]{0}', space=vmem, size = 0x2000, scoped, tag = 'output window, operand 0, single buffered']
    #allocation3 [shape = 's32[1]{0}', space=sflag, size = 0x4, scoped, tag = 'scoped memory for tpu_custom_call.1']
    %14 = vsyncpa [#allocation3], 0
    // Predicated region
    $region2: #{tpu_custom_call.1} parent=1 // pred_check
      _
    $region3: #{tpu_custom_call.1} parent=1 // pred_check_branch
      %16 = sbr.rel (0) target = $region5
    $region4: #{tpu_custom_call.1} parent=1 // pred_region
      _
    $region5: #{tpu_custom_call.1} parent=1 // pred_fallthru
      _
    // Predicated region
    $region6: #{tpu_custom_call.1} parent=1 // pred_check
      _
    $region7: #{tpu_custom_call.1} parent=1 // pred_check_branch
      %18 = sbr.rel (0) target = $region9
    $region8: #{tpu_custom_call.1} parent=1 // pred_region
      _
    $region9: #{tpu_custom_call.1} parent=1 // pred_fallthru
      _
    // Predicated region
    $region10: #{tpu_custom_call.1} parent=1 // pred_check
      _
    $region11: #{tpu_custom_call.1} parent=1 // pred_check_branch
      %20 = sbr.rel (0) target = $region13
    $region12: #{tpu_custom_call.1} parent=1 // pred_region
      _
    $region13: #{tpu_custom_call.1} parent=1 // pred_fallthru
      _
    // Predicated region
    $region14: #{tpu_custom_call.1} parent=1 // pred_check
      _
    $region15: #{tpu_custom_call.1} parent=1 // pred_check_branch
      %22 = sbr.rel (0) target = $region17
    $region16: #{tpu_custom_call.1} parent=1 // pred_region
      _
    $region17: #{tpu_custom_call.1} parent=1 // pred_fallthru
      _
    // Predicated region
    $region18: #{tpu_custom_call.1} parent=1 // pred_check
      _
    $region19: #{tpu_custom_call.1} parent=1 // pred_check_branch
      %24 = sbr.rel (0) target = $region21
    $region20: #{tpu_custom_call.1} parent=1 // pred_region
      _
    $region21: #{tpu_custom_call.1} parent=1 // pred_fallthru
      _
    // Predicated region
    $region22: #{tpu_custom_call.1} parent=1 // pred_check
      _
    $region23: #{tpu_custom_call.1} parent=1 // pred_check_branch
      %26 = sbr.rel (0) target = $region25
    $region24: #{tpu_custom_call.1} parent=1 // pred_region
      _
    $region25: #{tpu_custom_call.1} parent=1 // pred_fallthru
      _
    // Predicated region
    $region26: #{tpu_custom_call.1} parent=1 // pred_check
      _
    $region27: #{tpu_custom_call.1} parent=1 // pred_check_branch
      %28 = sbr.rel (0) target = $region29
    $region28: #{tpu_custom_call.1} parent=1 // pred_region
      _
    $region29: #{tpu_custom_call.1} parent=1 // pred_fallthru
      _
    // Predicated region
    $region30: #{tpu_custom_call.1} parent=1 // pred_check
      _
    $region31: #{tpu_custom_call.1} parent=1 // pred_check_branch
      %30 = sbr.rel (0) target = $region33
    $region32: #{tpu_custom_call.1} parent=1 // pred_region
      _
    $region33: #{tpu_custom_call.1} parent=1 // pred_fallthru
      _
    // Predicated region
    $region34: #{tpu_custom_call.1} parent=1 // pred_check
      _
    $region35: #{tpu_custom_call.1} parent=1 // pred_check_branch
      %32 = sbr.rel (0) target = $region37
    $region36: #{tpu_custom_call.1} parent=1 // pred_region
      _
    $region37: #{tpu_custom_call.1} parent=1 // pred_fallthru
      _
    %v33 = vlaneseq
    %v34 = vand.u32 %v33, 127
    %v35 = vld [vmem:[%s0] sm:$0xff]
    %v36 = vld [vmem:[%s0 + $0x8] sm:$0xff]
    %37 = vset.pattern.permute.xlu0 0
    %38 = vperm.xlu0 %37, %v35
    %v39 = vpop.permute.xlu0 %38
    %40 = vset.pattern.permute.xlu0 0
    %41 = vperm.xlu0 %40, %v36
    %v42 = vpop.permute.xlu0 %41
    %vm43 = vcmp.eq.s32.totalorder %v34, %v39
    %vm44 = vcmp.eq.s32.totalorder %v34, %v42
    %v45 = vsel %vm43, 1, 0
    %v46 = vsel %vm44, 1, 0
    %v47 = vcvt.s32.f32 %v45
    %v48 = vcvt.s32.f32 %v46
    %v49 = vld [vmem:[%s1] sm:$0xf]
    %v50 = vld [vmem:[%s1 + $0x4] sm:$0xf]
    %v51 = vld [vmem:[%s1 + $0x8] sm:$0xf]
    %v52 = vld [vmem:[%s1 + $0xc] sm:$0xf]
    %v53 = vld [vmem:[%s1 + $0x10] sm:$0xf]
    %v54 = vld [vmem:[%s1 + $0x14] sm:$0xf]
    %v55 = vld [vmem:[%s1 + $0x18] sm:$0xf]
    %v56 = vld [vmem:[%s1 + $0x1c] sm:$0xf]
    %v57 = vunpack.c.l.bf16 %v49
    %v58 = vunpack.c.l.bf16 %v50
    %v59 = vunpack.c.l.bf16 %v51
    %v60 = vunpack.c.l.bf16 %v52
    %v61 = vunpack.c.l.bf16 %v53
    %v62 = vunpack.c.l.bf16 %v54
    %v63 = vunpack.c.l.bf16 %v55
    %v64 = vunpack.c.l.bf16 %v56
    %vm65 = vcmask 523264
    %v67 = vsel %vm65, %v47, 0
    %v70 = vsel %vm65, %v48, 0
    %72 = vmatprep.subr.mxu0 0.0
    %73 = vmatpush1.msra.mxu0 0.0
    %74 = vmatprep.subr.mxu0 0.0
    %75 = vmatpush1.msra.mxu0 0.0
    %76 = vmatprep.subr.mxu0 0.0
    %77 = vmatpush1.msra.mxu0 0.0
    %78 = vmatprep.subr.mxu0 0.0
    %79 = vmatpush1.msra.mxu0 0.0
    %80 = vmatprep.subr.mxu0 0.0
    %81 = vmatpush1.msra.mxu0 0.0
    %82 = vmatprep.subr.mxu0 0.0
    %83 = vmatpush1.msra.mxu0 0.0
    %84 = vmatprep.subr.mxu0 0.0
    %85 = vmatpush1.msra.mxu0 0.0
    %86 = vmatprep.subr.mxu0 0.0
    %87 = vmatpush1.msra.mxu0 0.0
    %88 = vmatprep.subr.mxu0 0.0
    %89 = vmatpush1.msra.mxu0 %v64
    %90 = vmatprep.subr.mxu0 0.0
    %91 = vmatpush1.msra.mxu0 %v63
    %92 = vmatprep.subr.mxu0 0.0
    %93 = vmatpush1.msra.mxu0 %v62
    %94 = vmatprep.subr.mxu0 0.0
    %95 = vmatpush1.msra.mxu0 %v61
    %96 = vmatprep.subr.mxu0 0.0
    %97 = vmatpush1.msra.mxu0 %v60
    %98 = vmatprep.subr.mxu0 0.0
    %99 = vmatpush1.msra.mxu0 %v59
    %100 = vmatprep.subr.mxu0 0.0
    %101 = vmatpush1.msra.mxu0 %v58
    %102 = vmatprep.subr.mxu0 0.0
    %103 = vmatpush1.msra.mxu0 %v57
    %104 = vmatprep.subr.mxu0 0.0
    %105 = vmatpush2.msra.mxu0 0.0
    %106 = vmatprep.subr.mxu0 0.0
    %107 = vmatpush2.msra.mxu0 0.0
    %108 = vmatprep.subr.mxu0 0.0
    %109 = vmatpush2.msra.mxu0 0.0
    %110 = vmatprep.subr.mxu0 0.0
    %111 = vmatpush2.msra.mxu0 0.0
    %112 = vmatprep.subr.mxu0 0.0
    %113 = vmatpush2.msra.mxu0 0.0
    %114 = vmatprep.subr.mxu0 0.0
    %115 = vmatpush2.msra.mxu0 0.0
    %116 = vmatprep.subr.mxu0 0.0
    %117 = vmatpush2.msra.mxu0 0.0
    %118 = vmatprep.subr.mxu0 0.0
    %119 = vmatpush2.msra.mxu0 0.0
    %120 = vmatprep.subr.mxu0 0.0
    %121 = vmatpush2.msra.mxu0 0.0
    %122 = vmatprep.subr.mxu0 0.0
    %123 = vmatpush2.msra.mxu0 0.0
    %124 = vmatprep.subr.mxu0 0.0
    %125 = vmatpush2.msra.mxu0 0.0
    %126 = vmatprep.subr.mxu0 0.0
    %127 = vmatpush2.msra.mxu0 0.0
    %128 = vmatprep.subr.mxu0 0.0
    %129 = vmatpush2.msra.mxu0 0.0
    %130 = vmatprep.subr.mxu0 0.0
    %131 = vmatpush2.msra.mxu0 0.0
    %132 = vmatprep.subr.mxu0 0.0
    %133 = vmatpush2.msra.mxu0 0.0
    %134 = vmatprep.subr.mxu0 0.0
    %135 = vmatpush2.msra.mxu0 0.0
    %136 = vmatprep.mubr.f32.mxu0 0.0
    %137 = vmatmul.mubr.f32.gmra.mxu0 %v67
    %v138 = vpop.f32.mrf.mxu0
    %v139 = vadd.f32 0.0, %v138
    %v140 = vpop.f32.mrf.mxu0
    %141 = vmatprep.mubr.f32.mxu0 0.0
    %142 = vmatmul.mubr.f32.gmra.mxu0 %v70
    %v143 = vpop.f32.mrf.mxu0
    %v144 = vadd.f32 0.0, %v143
    %v145 = vpop.f32.mrf.mxu0
    %146 = vdwg.mxu0
    %v147 = vld [vmem:[%s2] sm:$0xff]
    %v148 = vadd.f32 %v139, %v147
    %v149 = vadd.f32 %v144, %v147
    %v150 = vlaneseq
    %v151 = vshrl.u32 %v150, 7
    %vm152 = vcmp.le.s32.totalorder %v34, %v151
    %v153 = vsel %vm152, 0.0, -1e+30
    %v154 = vld [vmem:[%s3] sm:$0xff]
    %v155 = vld [vmem:[%s4] sm:$0xf]
    %v156 = vld [vmem:[%s4 + $0x4] sm:$0xf]
    %v157 = vld [vmem:[%s4 + $0x8] sm:$0xf]
    %v158 = vld [vmem:[%s4 + $0xc] sm:$0xf]
    %v159 = vunpack.c.l.bf16 %v155
    %v160 = vunpack.c.l.bf16 %v156
    %v161 = vunpack.c.l.bf16 %v157
    %v162 = vunpack.c.l.bf16 %v158
    %v163 = vld [vmem:[%s5] sm:$0xf]
    %v164 = vld [vmem:[%s5 + $0x4] sm:$0xf]
    %v165 = vld [vmem:[%s5 + $0x8] sm:$0xf]
    %v166 = vld [vmem:[%s5 + $0xc] sm:$0xf]
    %v167 = vunpack.c.l.bf16 %v163
    %v168 = vunpack.c.l.bf16 %v164
    %v169 = vunpack.c.l.bf16 %v165
    %v170 = vunpack.c.l.bf16 %v166
    %v171 = vld [vmem:[%s6] sm:$0xf]
    %v172 = vld [vmem:[%s6 + $0x4] sm:$0xf]
    %v173 = vld [vmem:[%s6 + $0x8] sm:$0xf]
    %v174 = vld [vmem:[%s6 + $0xc] sm:$0xf]
    %v175 = vunpack.c.l.bf16 %v171
    %v176 = vunpack.c.l.bf16 %v172
    %v177 = vunpack.c.l.bf16 %v173
    %v178 = vunpack.c.l.bf16 %v174
    %v179 = vld [vmem:[%s7] sm:$0xf]
    %v180 = vld [vmem:[%s7 + $0x4] sm:$0xf]
    %v181 = vld [vmem:[%s7 + $0x8] sm:$0xf]
    %v182 = vld [vmem:[%s7 + $0xc] sm:$0xf]
    %v183 = vld [vmem:[%s7 + $0x10] sm:$0xf]
    %v184 = vld [vmem:[%s7 + $0x14] sm:$0xf]
    %v185 = vld [vmem:[%s7 + $0x18] sm:$0xf]
    %v186 = vld [vmem:[%s7 + $0x1c] sm:$0xf]
    %v187 = vld [vmem:[%s7 + $0x20] sm:$0xf]
    %v188 = vld [vmem:[%s7 + $0x24] sm:$0xf]
    %v189 = vld [vmem:[%s7 + $0x28] sm:$0xf]
    %v190 = vld [vmem:[%s7 + $0x2c] sm:$0xf]
    %v191 = vld [vmem:[%s7 + $0x30] sm:$0xf]
    %v192 = vld [vmem:[%s7 + $0x34] sm:$0xf]
    %v193 = vld [vmem:[%s7 + $0x38] sm:$0xf]
    %v194 = vld [vmem:[%s7 + $0x3c] sm:$0xf]
    %v195 = vunpack.c.l.bf16 %v179
    %v196 = vunpack.c.l.bf16 %v180
    %v197 = vunpack.c.l.bf16 %v181
    %v198 = vunpack.c.l.bf16 %v182
    %v199 = vunpack.c.l.bf16 %v183
    %v200 = vunpack.c.l.bf16 %v184
    %v201 = vunpack.c.l.bf16 %v185
    %v202 = vunpack.c.l.bf16 %v186
    %v203 = vunpack.c.l.bf16 %v187
    %v204 = vunpack.c.l.bf16 %v188
    %v205 = vunpack.c.l.bf16 %v189
    %v206 = vunpack.c.l.bf16 %v190
    %v207 = vunpack.c.l.bf16 %v191
    %v208 = vunpack.c.l.bf16 %v192
    %v209 = vunpack.c.l.bf16 %v193
    %v210 = vunpack.c.l.bf16 %v194
    %vm211 = vcmask 261120
    %v212 = vsel %vm211, %v148, 0.0
    %213 = vadd.xlane.f32.xlu0 %v212
    %v214 = vpop.xlane.xlu0 %213
    %v215 = vsel %vm211, %v149, 0.0
    %216 = vadd.xlane.f32.xlu0 %v215
    %v217 = vpop.xlane.xlu0 %216
    %v218 = vrcp.pop 32.0
    %v219 = vmul.f32 %v214, %v218
    %v220 = vmul.f32 %v217, %v218
    %v221 = vsub.f32 %v148, %v219
    %v222 = vsub.f32 %v149, %v220
    %v223 = vmul.f32 %v221, %v221
    %v224 = vmul.f32 %v222, %v222
    %v225 = vsel %vm211, %v223, 0.0
    %226 = vadd.xlane.f32.xlu0 %v225
    %v227 = vpop.xlane.xlu0 %226
    %v228 = vsel %vm211, %v224, 0.0
    %229 = vadd.xlane.f32.xlu0 %v228
    %v230 = vpop.xlane.xlu0 %229
    %v231 = vmul.f32 %v227, %v218
    %v232 = vmul.f32 %v230, %v218
    %v233 = vadd.f32 %v231, 1e-05
    %v234 = vadd.f32 %v232, 1e-05
    %v235 = vrsqrt.pop %v233
    %v236 = vrsqrt.pop %v234
    %v237 = vmul.f32 %v221, %v235
    %v238 = vmul.f32 %v222, %v236
    %v239 = vlaneseq
    %v240 = vshrl.u32 %v239, 7
    %v241 = vsub.s32 0, %v240
    %v242 = vrot.slane %v154, %v241
    %v243 = vmul.f32 %v237, %v242
    %v244 = vmul.f32 %v238, %v242
    %v245 = vlaneseq
    %v246 = vshrl.u32 %v245, 7
    %v247 = vsub.s32 1, %v246
    %v248 = vrot.slane %v154, %v247
    %v249 = vadd.f32 %v243, %v248
    %v250 = vadd.f32 %v244, %v248
    %v251 = vlaneseq
    %v252 = vshrl.u32 %v251, 7
    %v253 = vsub.s32 7, %v252
    %v254 = vrot.slane %v154, %v253
    %v256 = vsel %vm211, %v249, 0
    %v259 = vsel %vm211, %v250, 0
    %261 = vmatprep.subr.mxu0 0.0
    %262 = vmatpush1.msra.mxu0 0.0
    %263 = vmatprep.subr.mxu0 0.0
    %264 = vmatpush1.msra.mxu0 0.0
    %265 = vmatprep.subr.mxu0 0.0
    %266 = vmatpush1.msra.mxu0 0.0
    %267 = vmatprep.subr.mxu0 0.0
    %268 = vmatpush1.msra.mxu0 0.0
    %269 = vmatprep.subr.mxu0 0.0
    %270 = vmatpush1.msra.mxu0 0.0
    %271 = vmatprep.subr.mxu0 0.0
    %272 = vmatpush1.msra.mxu0 0.0
    %273 = vmatprep.subr.mxu0 0.0
    %274 = vmatpush1.msra.mxu0 0.0
    %275 = vmatprep.subr.mxu0 0.0
    %276 = vmatpush1.msra.mxu0 0.0
    %277 = vmatprep.subr.mxu0 0.0
    %278 = vmatpush1.msra.mxu0 0.0
    %279 = vmatprep.subr.mxu0 0.0
    %280 = vmatpush1.msra.mxu0 0.0
    %281 = vmatprep.subr.mxu0 0.0
    %282 = vmatpush1.msra.mxu0 0.0
    %283 = vmatprep.subr.mxu0 0.0
    %284 = vmatpush1.msra.mxu0 0.0
    %285 = vmatprep.subr.mxu0 0.0
    %286 = vmatpush1.msra.mxu0 %v162
    %287 = vmatprep.subr.mxu0 0.0
    %288 = vmatpush1.msra.mxu0 %v161
    %289 = vmatprep.subr.mxu0 0.0
    %290 = vmatpush1.msra.mxu0 %v160
    %291 = vmatprep.subr.mxu0 0.0
    %292 = vmatpush1.msra.mxu0 %v159
    %293 = vmatprep.subr.mxu0 0.0
    %294 = vmatpush2.msra.mxu0 0.0
    %295 = vmatprep.subr.mxu0 0.0
    %296 = vmatpush2.msra.mxu0 0.0
    %297 = vmatprep.subr.mxu0 0.0
    %298 = vmatpush2.msra.mxu0 0.0
    %299 = vmatprep.subr.mxu0 0.0
    %300 = vmatpush2.msra.mxu0 0.0
    %301 = vmatprep.subr.mxu0 0.0
    %302 = vmatpush2.msra.mxu0 0.0
    %303 = vmatprep.subr.mxu0 0.0
    %304 = vmatpush2.msra.mxu0 0.0
    %305 = vmatprep.subr.mxu0 0.0
    %306 = vmatpush2.msra.mxu0 0.0
    %307 = vmatprep.subr.mxu0 0.0
    %308 = vmatpush2.msra.mxu0 0.0
    %309 = vmatprep.subr.mxu0 0.0
    %310 = vmatpush2.msra.mxu0 0.0
    %311 = vmatprep.subr.mxu0 0.0
    %312 = vmatpush2.msra.mxu0 0.0
    %313 = vmatprep.subr.mxu0 0.0
    %314 = vmatpush2.msra.mxu0 0.0
    %315 = vmatprep.subr.mxu0 0.0
    %316 = vmatpush2.msra.mxu0 0.0
    %317 = vmatprep.subr.mxu0 0.0
    %318 = vmatpush2.msra.mxu0 0.0
    %319 = vmatprep.subr.mxu0 0.0
    %320 = vmatpush2.msra.mxu0 0.0
    %321 = vmatprep.subr.mxu0 0.0
    %322 = vmatpush2.msra.mxu0 0.0
    %323 = vmatprep.subr.mxu0 0.0
    %324 = vmatpush2.msra.mxu0 0.0
    %325 = vmatprep.mubr.f32.mxu0 0.0
    %326 = vmatmul.mubr.f32.gmra.mxu0 %v256
    %v327 = vpop.f32.mrf.mxu0
    %v328 = vadd.f32 %v254, %v327
    %v329 = vpop.f32.mrf.mxu0
    %330 = vmatprep.mubr.f32.mxu0 0.0
    %331 = vmatmul.mubr.f32.gmra.mxu0 %v259
    %v332 = vpop.f32.mrf.mxu0
    %v333 = vadd.f32 %v254, %v332
    %v334 = vpop.f32.mrf.mxu0
    %335 = vdwg.mxu0
    %337 = vrot.lane.b32.xlu0 %v328, 96
    %v338 = vpop.permute.xlu0 %337
    %vm339 = vcmask 64512
    %v340 = vsel %vm339, %v328, 0
    %v342 = vsel %vm339, %v338, 0
    %344 = vmatprep.subr.mxu0 0.0
    %345 = vmatpush1.xpose.msra.mxu0 0.0
    %346 = vmatprep.subr.mxu0 0.0
    %347 = vmatpush1.xpose.msra.mxu0 0.0
    %348 = vmatprep.subr.mxu0 0.0
    %349 = vmatpush1.xpose.msra.mxu0 0.0
    %350 = vmatprep.subr.mxu0 0.0
    %351 = vmatpush1.xpose.msra.mxu0 0.0
    %352 = vmatprep.subr.mxu0 0.0
    %353 = vmatpush1.xpose.msra.mxu0 0.0
    %354 = vmatprep.subr.mxu0 0.0
    %355 = vmatpush1.xpose.msra.mxu0 0.0
    %356 = vmatprep.subr.mxu0 0.0
    %357 = vmatpush1.xpose.msra.mxu0 0.0
    %358 = vmatprep.subr.mxu0 0.0
    %359 = vmatpush1.xpose.msra.mxu0 0.0
    %360 = vmatprep.subr.mxu0 0.0
    %361 = vmatpush1.xpose.msra.mxu0 0.0
    %362 = vmatprep.subr.mxu0 0.0
    %363 = vmatpush1.xpose.msra.mxu0 0.0
    %364 = vmatprep.subr.mxu0 0.0
    %365 = vmatpush1.xpose.msra.mxu0 0.0
    %366 = vmatprep.subr.mxu0 0.0
    %367 = vmatpush1.xpose.msra.mxu0 0.0
    %368 = vmatprep.subr.mxu0 0.0
    %369 = vmatpush1.xpose.msra.mxu0 0.0
    %370 = vmatprep.subr.mxu0 0.0
    %371 = vmatpush1.xpose.msra.mxu0 0.0
    %372 = vmatprep.subr.mxu0 0.0
    %373 = vmatpush1.xpose.msra.mxu0 0.0
    %374 = vmatprep.subr.mxu0 0.0
    %375 = vmatpush1.xpose.msra.mxu0 %v342
    %376 = vmatprep.subr.mxu0 0.0
    %377 = vmatpush2.xpose.msra.mxu0 0.0
    %378 = vmatprep.subr.mxu0 0.0
    %379 = vmatpush2.xpose.msra.mxu0 0.0
    %380 = vmatprep.subr.mxu0 0.0
    %381 = vmatpush2.xpose.msra.mxu0 0.0
    %382 = vmatprep.subr.mxu0 0.0
    %383 = vmatpush2.xpose.msra.mxu0 0.0
    %384 = vmatprep.subr.mxu0 0.0
    %385 = vmatpush2.xpose.msra.mxu0 0.0
    %386 = vmatprep.subr.mxu0 0.0
    %387 = vmatpush2.xpose.msra.mxu0 0.0
    %388 = vmatprep.subr.mxu0 0.0
    %389 = vmatpush2.xpose.msra.mxu0 0.0
    %390 = vmatprep.subr.mxu0 0.0
    %391 = vmatpush2.xpose.msra.mxu0 0.0
    %392 = vmatprep.subr.mxu0 0.0
    %393 = vmatpush2.xpose.msra.mxu0 0.0
    %394 = vmatprep.subr.mxu0 0.0
    %395 = vmatpush2.xpose.msra.mxu0 0.0
    %396 = vmatprep.subr.mxu0 0.0
    %397 = vmatpush2.xpose.msra.mxu0 0.0
    %398 = vmatprep.subr.mxu0 0.0
    %399 = vmatpush2.xpose.msra.mxu0 0.0
    %400 = vmatprep.subr.mxu0 0.0
    %401 = vmatpush2.xpose.msra.mxu0 0.0
    %402 = vmatprep.subr.mxu0 0.0
    %403 = vmatpush2.xpose.msra.mxu0 0.0
    %404 = vmatprep.subr.mxu0 0.0
    %405 = vmatpush2.xpose.msra.mxu0 0.0
    %406 = vmatprep.subr.mxu0 0.0
    %407 = vmatpush2.xpose.msra.mxu0 0.0
    %408 = vmatprep.mubr.f32.mxu0 0.0
    %409 = vmatmul.mubr.f32.gmra.mxu0 %v340
    %v410 = vpop.f32.mrf.mxu0
    %v411 = vadd.f32 0.0, %v410
    %v412 = vpop.f32.mrf.mxu0
    %413 = vdwg.mxu0
    %415 = vrot.lane.b32.xlu0 %v333, 96
    %v416 = vpop.permute.xlu0 %415
    %v417 = vsel %vm339, %v333, 0
    %v419 = vsel %vm339, %v416, 0
    %421 = vmatprep.subr.mxu0 0.0
    %422 = vmatpush1.xpose.msra.mxu0 0.0
    %423 = vmatprep.subr.mxu0 0.0
    %424 = vmatpush1.xpose.msra.mxu0 0.0
    %425 = vmatprep.subr.mxu0 0.0
    %426 = vmatpush1.xpose.msra.mxu0 0.0
    %427 = vmatprep.subr.mxu0 0.0
    %428 = vmatpush1.xpose.msra.mxu0 0.0
    %429 = vmatprep.subr.mxu0 0.0
    %430 = vmatpush1.xpose.msra.mxu0 0.0
    %431 = vmatprep.subr.mxu0 0.0
    %432 = vmatpush1.xpose.msra.mxu0 0.0
    %433 = vmatprep.subr.mxu0 0.0
    %434 = vmatpush1.xpose.msra.mxu0 0.0
    %435 = vmatprep.subr.mxu0 0.0
    %436 = vmatpush1.xpose.msra.mxu0 0.0
    %437 = vmatprep.subr.mxu0 0.0
    %438 = vmatpush1.xpose.msra.mxu0 0.0
    %439 = vmatprep.subr.mxu0 0.0
    %440 = vmatpush1.xpose.msra.mxu0 0.0
    %441 = vmatprep.subr.mxu0 0.0
    %442 = vmatpush1.xpose.msra.mxu0 0.0
    %443 = vmatprep.subr.mxu0 0.0
    %444 = vmatpush1.xpose.msra.mxu0 0.0
    %445 = vmatprep.subr.mxu0 0.0
    %446 = vmatpush1.xpose.msra.mxu0 0.0
    %447 = vmatprep.subr.mxu0 0.0
    %448 = vmatpush1.xpose.msra.mxu0 0.0
    %449 = vmatprep.subr.mxu0 0.0
    %450 = vmatpush1.xpose.msra.mxu0 0.0
    %451 = vmatprep.subr.mxu0 0.0
    %452 = vmatpush1.xpose.msra.mxu0 %v419
    %453 = vmatprep.subr.mxu0 0.0
    %454 = vmatpush2.xpose.msra.mxu0 0.0
    %455 = vmatprep.subr.mxu0 0.0
    %456 = vmatpush2.xpose.msra.mxu0 0.0
    %457 = vmatprep.subr.mxu0 0.0
    %458 = vmatpush2.xpose.msra.mxu0 0.0
    %459 = vmatprep.subr.mxu0 0.0
    %460 = vmatpush2.xpose.msra.mxu0 0.0
    %461 = vmatprep.subr.mxu0 0.0
    %462 = vmatpush2.xpose.msra.mxu0 0.0
    %463 = vmatprep.subr.mxu0 0.0
    %464 = vmatpush2.xpose.msra.mxu0 0.0
    %465 = vmatprep.subr.mxu0 0.0
    %466 = vmatpush2.xpose.msra.mxu0 0.0
    %467 = vmatprep.subr.mxu0 0.0
    %468 = vmatpush2.xpose.msra.mxu0 0.0
    %469 = vmatprep.subr.mxu0 0.0
    %470 = vmatpush2.xpose.msra.mxu0 0.0
    %471 = vmatprep.subr.mxu0 0.0
    %472 = vmatpush2.xpose.msra.mxu0 0.0
    %473 = vmatprep.subr.mxu0 0.0
    %474 = vmatpush2.xpose.msra.mxu0 0.0
    %475 = vmatprep.subr.mxu0 0.0
    %476 = vmatpush2.xpose.msra.mxu0 0.0
    %477 = vmatprep.subr.mxu0 0.0
    %478 = vmatpush2.xpose.msra.mxu0 0.0
    %479 = vmatprep.subr.mxu0 0.0
    %480 = vmatpush2.xpose.msra.mxu0 0.0
    %481 = vmatprep.subr.mxu0 0.0
    %482 = vmatpush2.xpose.msra.mxu0 0.0
    %483 = vmatprep.subr.mxu0 0.0
    %484 = vmatpush2.xpose.msra.mxu0 0.0
    %485 = vmatprep.mubr.f32.mxu0 0.0
    %486 = vmatmul.mubr.f32.gmra.mxu0 %v417
    %v487 = vpop.f32.mrf.mxu0
    %v488 = vadd.f32 0.0, %v487
    %v489 = vpop.f32.mrf.mxu0
    %490 = vdwg.mxu0
    %v491 = vmul.f32 %v411, 0.35355338
    %v492 = vmul.f32 %v488, 0.35355338
    %v493 = vadd.f32 %v491, %v153
    %v494 = vadd.f32 %v492, %v153
    %v495 = vsel %vm339, %v493, -inf
    %496 = vmax.xlane.f32.xlu0 %v495
    %v497 = vpop.xlane.xlu0 %496
    %v498 = vsel %vm339, %v494, -inf
    %499 = vmax.xlane.f32.xlu0 %v498
    %v500 = vpop.xlane.xlu0 %499
    %v501 = vsub.f32 %v493, %v497
    %v502 = vsub.f32 %v494, %v500
    %v503 = vmul.f32 %v501, 1.442695
    %v504 = vpow.pop %v503
    %v505 = vmul.f32 %v502, 1.442695
    %v506 = vpow.pop %v505
    %v507 = vsel %vm339, %v504, 0.0
    %508 = vadd.xlane.f32.xlu0 %v507
    %v509 = vpop.xlane.xlu0 %508
    %v510 = vsel %vm339, %v506, 0.0
    %511 = vadd.xlane.f32.xlu0 %v510
    %v512 = vpop.xlane.xlu0 %511
    %v513 = vrcp.pop %v509
    %v514 = vmul.f32 %v504, %v513
    %v515 = vrcp.pop %v512
    %v516 = vmul.f32 %v506, %v515
    %517 = vrot.lane.b32.xlu0 %v328, 64
    %v518 = vpop.permute.xlu0 %517
    %v521 = vsel %vm339, %v514, 0
    %523 = vmatprep.subr.mxu0 0.0
    %524 = vmatpush1.msra.mxu0 0.0
    %525 = vmatprep.subr.mxu0 0.0
    %526 = vmatpush1.msra.mxu0 0.0
    %527 = vmatprep.subr.mxu0 0.0
    %528 = vmatpush1.msra.mxu0 0.0
    %529 = vmatprep.subr.mxu0 0.0
    %530 = vmatpush1.msra.mxu0 0.0
    %531 = vmatprep.subr.mxu0 0.0
    %532 = vmatpush1.msra.mxu0 0.0
    %533 = vmatprep.subr.mxu0 0.0
    %534 = vmatpush1.msra.mxu0 0.0
    %535 = vmatprep.subr.mxu0 0.0
    %536 = vmatpush1.msra.mxu0 0.0
    %537 = vmatprep.subr.mxu0 0.0
    %538 = vmatpush1.msra.mxu0 0.0
    %539 = vmatprep.subr.mxu0 0.0
    %540 = vmatpush1.msra.mxu0 0.0
    %541 = vmatprep.subr.mxu0 0.0
    %542 = vmatpush1.msra.mxu0 0.0
    %543 = vmatprep.subr.mxu0 0.0
    %544 = vmatpush1.msra.mxu0 0.0
    %545 = vmatprep.subr.mxu0 0.0
    %546 = vmatpush1.msra.mxu0 0.0
    %547 = vmatprep.subr.mxu0 0.0
    %548 = vmatpush1.msra.mxu0 0.0
    %549 = vmatprep.subr.mxu0 0.0
    %550 = vmatpush1.msra.mxu0 0.0
    %551 = vmatprep.subr.mxu0 0.0
    %552 = vmatpush1.msra.mxu0 0.0
    %553 = vmatprep.subr.mxu0 0.0
    %554 = vmatpush1.msra.mxu0 %v518
    %555 = vmatprep.subr.mxu0 0.0
    %556 = vmatpush2.msra.mxu0 0.0
    %557 = vmatprep.subr.mxu0 0.0
    %558 = vmatpush2.msra.mxu0 0.0
    %559 = vmatprep.subr.mxu0 0.0
    %560 = vmatpush2.msra.mxu0 0.0
    %561 = vmatprep.subr.mxu0 0.0
    %562 = vmatpush2.msra.mxu0 0.0
    %563 = vmatprep.subr.mxu0 0.0
    %564 = vmatpush2.msra.mxu0 0.0
    %565 = vmatprep.subr.mxu0 0.0
    %566 = vmatpush2.msra.mxu0 0.0
    %567 = vmatprep.subr.mxu0 0.0
    %568 = vmatpush2.msra.mxu0 0.0
    %569 = vmatprep.subr.mxu0 0.0
    %570 = vmatpush2.msra.mxu0 0.0
    %571 = vmatprep.subr.mxu0 0.0
    %572 = vmatpush2.msra.mxu0 0.0
    %573 = vmatprep.subr.mxu0 0.0
    %574 = vmatpush2.msra.mxu0 0.0
    %575 = vmatprep.subr.mxu0 0.0
    %576 = vmatpush2.msra.mxu0 0.0
    %577 = vmatprep.subr.mxu0 0.0
    %578 = vmatpush2.msra.mxu0 0.0
    %579 = vmatprep.subr.mxu0 0.0
    %580 = vmatpush2.msra.mxu0 0.0
    %581 = vmatprep.subr.mxu0 0.0
    %582 = vmatpush2.msra.mxu0 0.0
    %583 = vmatprep.subr.mxu0 0.0
    %584 = vmatpush2.msra.mxu0 0.0
    %585 = vmatprep.subr.mxu0 0.0
    %586 = vmatpush2.msra.mxu0 0.0
    %587 = vmatprep.mubr.f32.mxu0 0.0
    %588 = vmatmul.mubr.f32.gmra.mxu0 %v521
    %v589 = vpop.f32.mrf.mxu0
    %v590 = vadd.f32 0.0, %v589
    %v591 = vpop.f32.mrf.mxu0
    %592 = vdwg.mxu0
    %593 = vrot.lane.b32.xlu0 %v333, 64
    %v594 = vpop.permute.xlu0 %593
    %v597 = vsel %vm339, %v516, 0
    %599 = vmatprep.subr.mxu0 0.0
    %600 = vmatpush1.msra.mxu0 0.0
    %601 = vmatprep.subr.mxu0 0.0
    %602 = vmatpush1.msra.mxu0 0.0
    %603 = vmatprep.subr.mxu0 0.0
    %604 = vmatpush1.msra.mxu0 0.0
    %605 = vmatprep.subr.mxu0 0.0
    %606 = vmatpush1.msra.mxu0 0.0
    %607 = vmatprep.subr.mxu0 0.0
    %608 = vmatpush1.msra.mxu0 0.0
    %609 = vmatprep.subr.mxu0 0.0
    %610 = vmatpush1.msra.mxu0 0.0
    %611 = vmatprep.subr.mxu0 0.0
    %612 = vmatpush1.msra.mxu0 0.0
    %613 = vmatprep.subr.mxu0 0.0
    %614 = vmatpush1.msra.mxu0 0.0
    %615 = vmatprep.subr.mxu0 0.0
    %616 = vmatpush1.msra.mxu0 0.0
    %617 = vmatprep.subr.mxu0 0.0
    %618 = vmatpush1.msra.mxu0 0.0
    %619 = vmatprep.subr.mxu0 0.0
    %620 = vmatpush1.msra.mxu0 0.0
    %621 = vmatprep.subr.mxu0 0.0
    %622 = vmatpush1.msra.mxu0 0.0
    %623 = vmatprep.subr.mxu0 0.0
    %624 = vmatpush1.msra.mxu0 0.0
    %625 = vmatprep.subr.mxu0 0.0
    %626 = vmatpush1.msra.mxu0 0.0
    %627 = vmatprep.subr.mxu0 0.0
    %628 = vmatpush1.msra.mxu0 0.0
    %629 = vmatprep.subr.mxu0 0.0
    %630 = vmatpush1.msra.mxu0 %v594
    %631 = vmatprep.subr.mxu0 0.0
    %632 = vmatpush2.msra.mxu0 0.0
    %633 = vmatprep.subr.mxu0 0.0
    %634 = vmatpush2.msra.mxu0 0.0
    %635 = vmatprep.subr.mxu0 0.0
    %636 = vmatpush2.msra.mxu0 0.0
    %637 = vmatprep.subr.mxu0 0.0
    %638 = vmatpush2.msra.mxu0 0.0
    %639 = vmatprep.subr.mxu0 0.0
    %640 = vmatpush2.msra.mxu0 0.0
    %641 = vmatprep.subr.mxu0 0.0
    %642 = vmatpush2.msra.mxu0 0.0
    %643 = vmatprep.subr.mxu0 0.0
    %644 = vmatpush2.msra.mxu0 0.0
    %645 = vmatprep.subr.mxu0 0.0
    %646 = vmatpush2.msra.mxu0 0.0
    %647 = vmatprep.subr.mxu0 0.0
    %648 = vmatpush2.msra.mxu0 0.0
    %649 = vmatprep.subr.mxu0 0.0
    %650 = vmatpush2.msra.mxu0 0.0
    %651 = vmatprep.subr.mxu0 0.0
    %652 = vmatpush2.msra.mxu0 0.0
    %653 = vmatprep.subr.mxu0 0.0
    %654 = vmatpush2.msra.mxu0 0.0
    %655 = vmatprep.subr.mxu0 0.0
    %656 = vmatpush2.msra.mxu0 0.0
    %657 = vmatprep.subr.mxu0 0.0
    %658 = vmatpush2.msra.mxu0 0.0
    %659 = vmatprep.subr.mxu0 0.0
    %660 = vmatpush2.msra.mxu0 0.0
    %661 = vmatprep.subr.mxu0 0.0
    %662 = vmatpush2.msra.mxu0 0.0
    %663 = vmatprep.mubr.f32.mxu0 0.0
    %664 = vmatmul.mubr.f32.gmra.mxu0 %v597
    %v665 = vpop.f32.mrf.mxu0
    %v666 = vadd.f32 0.0, %v665
    %v667 = vpop.f32.mrf.mxu0
    %668 = vdwg.mxu0
    %669 = vrot.lane.b32.xlu0 %v328, 120
    %v670 = vpop.permute.xlu0 %669
    %671 = vrot.lane.b32.xlu0 %v328, 88
    %v672 = vpop.permute.xlu0 %671
    %v673 = vsel %vm339, %v670, 0
    %v675 = vsel %vm339, %v672, 0
    %677 = vmatprep.subr.mxu0 0.0
    %678 = vmatpush1.xpose.msra.mxu0 0.0
    %679 = vmatprep.subr.mxu0 0.0
    %680 = vmatpush1.xpose.msra.mxu0 0.0
    %681 = vmatprep.subr.mxu0 0.0
    %682 = vmatpush1.xpose.msra.mxu0 0.0
    %683 = vmatprep.subr.mxu0 0.0
    %684 = vmatpush1.xpose.msra.mxu0 0.0
    %685 = vmatprep.subr.mxu0 0.0
    %686 = vmatpush1.xpose.msra.mxu0 0.0
    %687 = vmatprep.subr.mxu0 0.0
    %688 = vmatpush1.xpose.msra.mxu0 0.0
    %689 = vmatprep.subr.mxu0 0.0
    %690 = vmatpush1.xpose.msra.mxu0 0.0
    %691 = vmatprep.subr.mxu0 0.0
    %692 = vmatpush1.xpose.msra.mxu0 0.0
    %693 = vmatprep.subr.mxu0 0.0
    %694 = vmatpush1.xpose.msra.mxu0 0.0
    %695 = vmatprep.subr.mxu0 0.0
    %696 = vmatpush1.xpose.msra.mxu0 0.0
    %697 = vmatprep.subr.mxu0 0.0
    %698 = vmatpush1.xpose.msra.mxu0 0.0
    %699 = vmatprep.subr.mxu0 0.0
    %700 = vmatpush1.xpose.msra.mxu0 0.0
    %701 = vmatprep.subr.mxu0 0.0
    %702 = vmatpush1.xpose.msra.mxu0 0.0
    %703 = vmatprep.subr.mxu0 0.0
    %704 = vmatpush1.xpose.msra.mxu0 0.0
    %705 = vmatprep.subr.mxu0 0.0
    %706 = vmatpush1.xpose.msra.mxu0 0.0
    %707 = vmatprep.subr.mxu0 0.0
    %708 = vmatpush1.xpose.msra.mxu0 %v675
    %709 = vmatprep.subr.mxu0 0.0
    %710 = vmatpush2.xpose.msra.mxu0 0.0
    %711 = vmatprep.subr.mxu0 0.0
    %712 = vmatpush2.xpose.msra.mxu0 0.0
    %713 = vmatprep.subr.mxu0 0.0
    %714 = vmatpush2.xpose.msra.mxu0 0.0
    %715 = vmatprep.subr.mxu0 0.0
    %716 = vmatpush2.xpose.msra.mxu0 0.0
    %717 = vmatprep.subr.mxu0 0.0
    %718 = vmatpush2.xpose.msra.mxu0 0.0
    %719 = vmatprep.subr.mxu0 0.0
    %720 = vmatpush2.xpose.msra.mxu0 0.0
    %721 = vmatprep.subr.mxu0 0.0
    %722 = vmatpush2.xpose.msra.mxu0 0.0
    %723 = vmatprep.subr.mxu0 0.0
    %724 = vmatpush2.xpose.msra.mxu0 0.0
    %725 = vmatprep.subr.mxu0 0.0
    %726 = vmatpush2.xpose.msra.mxu0 0.0
    %727 = vmatprep.subr.mxu0 0.0
    %728 = vmatpush2.xpose.msra.mxu0 0.0
    %729 = vmatprep.subr.mxu0 0.0
    %730 = vmatpush2.xpose.msra.mxu0 0.0
    %731 = vmatprep.subr.mxu0 0.0
    %732 = vmatpush2.xpose.msra.mxu0 0.0
    %733 = vmatprep.subr.mxu0 0.0
    %734 = vmatpush2.xpose.msra.mxu0 0.0
    %735 = vmatprep.subr.mxu0 0.0
    %736 = vmatpush2.xpose.msra.mxu0 0.0
    %737 = vmatprep.subr.mxu0 0.0
    %738 = vmatpush2.xpose.msra.mxu0 0.0
    %739 = vmatprep.subr.mxu0 0.0
    %740 = vmatpush2.xpose.msra.mxu0 0.0
    %741 = vmatprep.mubr.f32.mxu0 0.0
    %742 = vmatmul.mubr.f32.gmra.mxu0 %v673
    %v743 = vpop.f32.mrf.mxu0
    %v744 = vadd.f32 0.0, %v743
    %v745 = vpop.f32.mrf.mxu0
    %746 = vdwg.mxu0
    %747 = vrot.lane.b32.xlu0 %v333, 120
    %v748 = vpop.permute.xlu0 %747
    %749 = vrot.lane.b32.xlu0 %v333, 88
    %v750 = vpop.permute.xlu0 %749
    %v751 = vsel %vm339, %v748, 0
    %v753 = vsel %vm339, %v750, 0
    %755 = vmatprep.subr.mxu0 0.0
    %756 = vmatpush1.xpose.msra.mxu0 0.0
    %757 = vmatprep.subr.mxu0 0.0
    %758 = vmatpush1.xpose.msra.mxu0 0.0
    %759 = vmatprep.subr.mxu0 0.0
    %760 = vmatpush1.xpose.msra.mxu0 0.0
    %761 = vmatprep.subr.mxu0 0.0
    %762 = vmatpush1.xpose.msra.mxu0 0.0
    %763 = vmatprep.subr.mxu0 0.0
    %764 = vmatpush1.xpose.msra.mxu0 0.0
    %765 = vmatprep.subr.mxu0 0.0
    %766 = vmatpush1.xpose.msra.mxu0 0.0
    %767 = vmatprep.subr.mxu0 0.0
    %768 = vmatpush1.xpose.msra.mxu0 0.0
    %769 = vmatprep.subr.mxu0 0.0
    %770 = vmatpush1.xpose.msra.mxu0 0.0
    %771 = vmatprep.subr.mxu0 0.0
    %772 = vmatpush1.xpose.msra.mxu0 0.0
    %773 = vmatprep.subr.mxu0 0.0
    %774 = vmatpush1.xpose.msra.mxu0 0.0
    %775 = vmatprep.subr.mxu0 0.0
    %776 = vmatpush1.xpose.msra.mxu0 0.0
    %777 = vmatprep.subr.mxu0 0.0
    %778 = vmatpush1.xpose.msra.mxu0 0.0
    %779 = vmatprep.subr.mxu0 0.0
    %780 = vmatpush1.xpose.msra.mxu0 0.0
    %781 = vmatprep.subr.mxu0 0.0
    %782 = vmatpush1.xpose.msra.mxu0 0.0
    %783 = vmatprep.subr.mxu0 0.0
    %784 = vmatpush1.xpose.msra.mxu0 0.0
    %785 = vmatprep.subr.mxu0 0.0
    %786 = vmatpush1.xpose.msra.mxu0 %v753
    %787 = vmatprep.subr.mxu0 0.0
    %788 = vmatpush2.xpose.msra.mxu0 0.0
    %789 = vmatprep.subr.mxu0 0.0
    %790 = vmatpush2.xpose.msra.mxu0 0.0
    %791 = vmatprep.subr.mxu0 0.0
    %792 = vmatpush2.xpose.msra.mxu0 0.0
    %793 = vmatprep.subr.mxu0 0.0
    %794 = vmatpush2.xpose.msra.mxu0 0.0
    %795 = vmatprep.subr.mxu0 0.0
    %796 = vmatpush2.xpose.msra.mxu0 0.0
    %797 = vmatprep.subr.mxu0 0.0
    %798 = vmatpush2.xpose.msra.mxu0 0.0
    %799 = vmatprep.subr.mxu0 0.0
    %800 = vmatpush2.xpose.msra.mxu0 0.0
    %801 = vmatprep.subr.mxu0 0.0
    %802 = vmatpush2.xpose.msra.mxu0 0.0
    %803 = vmatprep.subr.mxu0 0.0
    %804 = vmatpush2.xpose.msra.mxu0 0.0
    %805 = vmatprep.subr.mxu0 0.0
    %806 = vmatpush2.xpose.msra.mxu0 0.0
    %807 = vmatprep.subr.mxu0 0.0
    %808 = vmatpush2.xpose.msra.mxu0 0.0
    %809 = vmatprep.subr.mxu0 0.0
    %810 = vmatpush2.xpose.msra.mxu0 0.0
    %811 = vmatprep.subr.mxu0 0.0
    %812 = vmatpush2.xpose.msra.mxu0 0.0
    %813 = vmatprep.subr.mxu0 0.0
    %814 = vmatpush2.xpose.msra.mxu0 0.0
    %815 = vmatprep.subr.mxu0 0.0
    %816 = vmatpush2.xpose.msra.mxu0 0.0
    %817 = vmatprep.subr.mxu0 0.0
    %818 = vmatpush2.xpose.msra.mxu0 0.0
    %819 = vmatprep.mubr.f32.mxu0 0.0
    %820 = vmatmul.mubr.f32.gmra.mxu0 %v751
    %v821 = vpop.f32.mrf.mxu0
    %v822 = vadd.f32 0.0, %v821
    %v823 = vpop.f32.mrf.mxu0
    %824 = vdwg.mxu0
    %v825 = vmul.f32 %v744, 0.35355338
    %v826 = vmul.f32 %v822, 0.35355338
    %v827 = vadd.f32 %v825, %v153
    %v828 = vadd.f32 %v826, %v153
    %v829 = vsel %vm339, %v827, -inf
    %830 = vmax.xlane.f32.xlu0 %v829
    %v831 = vpop.xlane.xlu0 %830
    %v832 = vsel %vm339, %v828, -inf
    %833 = vmax.xlane.f32.xlu0 %v832
    %v834 = vpop.xlane.xlu0 %833
    %v835 = vsub.f32 %v827, %v831
    %v836 = vsub.f32 %v828, %v834
    %v837 = vmul.f32 %v835, 1.442695
    %v838 = vpow.pop %v837
    %v839 = vmul.f32 %v836, 1.442695
    %v840 = vpow.pop %v839
    %v841 = vsel %vm339, %v838, 0.0
    %842 = vadd.xlane.f32.xlu0 %v841
    %v843 = vpop.xlane.xlu0 %842
    %v844 = vsel %vm339, %v840, 0.0
    %845 = vadd.xlane.f32.xlu0 %v844
    %v846 = vpop.xlane.xlu0 %845
    %v847 = vrcp.pop %v843
    %v848 = vmul.f32 %v838, %v847
    %v849 = vrcp.pop %v846
    %v850 = vmul.f32 %v840, %v849
    %851 = vrot.lane.b32.xlu0 %v328, 56
    %v852 = vpop.permute.xlu0 %851
    %v855 = vsel %vm339, %v848, 0
    %857 = vmatprep.subr.mxu0 0.0
    %858 = vmatpush1.msra.mxu0 0.0
    %859 = vmatprep.subr.mxu0 0.0
    %860 = vmatpush1.msra.mxu0 0.0
    %861 = vmatprep.subr.mxu0 0.0
    %862 = vmatpush1.msra.mxu0 0.0
    %863 = vmatprep.subr.mxu0 0.0
    %864 = vmatpush1.msra.mxu0 0.0
    %865 = vmatprep.subr.mxu0 0.0
    %866 = vmatpush1.msra.mxu0 0.0
    %867 = vmatprep.subr.mxu0 0.0
    %868 = vmatpush1.msra.mxu0 0.0
    %869 = vmatprep.subr.mxu0 0.0
    %870 = vmatpush1.msra.mxu0 0.0
    %871 = vmatprep.subr.mxu0 0.0
    %872 = vmatpush1.msra.mxu0 0.0
    %873 = vmatprep.subr.mxu0 0.0
    %874 = vmatpush1.msra.mxu0 0.0
    %875 = vmatprep.subr.mxu0 0.0
    %876 = vmatpush1.msra.mxu0 0.0
    %877 = vmatprep.subr.mxu0 0.0
    %878 = vmatpush1.msra.mxu0 0.0
    %879 = vmatprep.subr.mxu0 0.0
    %880 = vmatpush1.msra.mxu0 0.0
    %881 = vmatprep.subr.mxu0 0.0
    %882 = vmatpush1.msra.mxu0 0.0
    %883 = vmatprep.subr.mxu0 0.0
    %884 = vmatpush1.msra.mxu0 0.0
    %885 = vmatprep.subr.mxu0 0.0
    %886 = vmatpush1.msra.mxu0 0.0
    %887 = vmatprep.subr.mxu0 0.0
    %888 = vmatpush1.msra.mxu0 %v852
    %889 = vmatprep.subr.mxu0 0.0
    %890 = vmatpush2.msra.mxu0 0.0
    %891 = vmatprep.subr.mxu0 0.0
    %892 = vmatpush2.msra.mxu0 0.0
    %893 = vmatprep.subr.mxu0 0.0
    %894 = vmatpush2.msra.mxu0 0.0
    %895 = vmatprep.subr.mxu0 0.0
    %896 = vmatpush2.msra.mxu0 0.0
    %897 = vmatprep.subr.mxu0 0.0
    %898 = vmatpush2.msra.mxu0 0.0
    %899 = vmatprep.subr.mxu0 0.0
    %900 = vmatpush2.msra.mxu0 0.0
    %901 = vmatprep.subr.mxu0 0.0
    %902 = vmatpush2.msra.mxu0 0.0
    %903 = vmatprep.subr.mxu0 0.0
    %904 = vmatpush2.msra.mxu0 0.0
    %905 = vmatprep.subr.mxu0 0.0
    %906 = vmatpush2.msra.mxu0 0.0
    %907 = vmatprep.subr.mxu0 0.0
    %908 = vmatpush2.msra.mxu0 0.0
    %909 = vmatprep.subr.mxu0 0.0
    %910 = vmatpush2.msra.mxu0 0.0
    %911 = vmatprep.subr.mxu0 0.0
    %912 = vmatpush2.msra.mxu0 0.0
    %913 = vmatprep.subr.mxu0 0.0
    %914 = vmatpush2.msra.mxu0 0.0
    %915 = vmatprep.subr.mxu0 0.0
    %916 = vmatpush2.msra.mxu0 0.0
    %917 = vmatprep.subr.mxu0 0.0
    %918 = vmatpush2.msra.mxu0 0.0
    %919 = vmatprep.subr.mxu0 0.0
    %920 = vmatpush2.msra.mxu0 0.0
    %921 = vmatprep.mubr.f32.mxu0 0.0
    %922 = vmatmul.mubr.f32.gmra.mxu0 %v855
    %v923 = vpop.f32.mrf.mxu0
    %v924 = vadd.f32 0.0, %v923
    %v925 = vpop.f32.mrf.mxu0
    %926 = vdwg.mxu0
    %927 = vrot.lane.b32.xlu0 %v333, 56
    %v928 = vpop.permute.xlu0 %927
    %v931 = vsel %vm339, %v850, 0
    %933 = vmatprep.subr.mxu0 0.0
    %934 = vmatpush1.msra.mxu0 0.0
    %935 = vmatprep.subr.mxu0 0.0
    %936 = vmatpush1.msra.mxu0 0.0
    %937 = vmatprep.subr.mxu0 0.0
    %938 = vmatpush1.msra.mxu0 0.0
    %939 = vmatprep.subr.mxu0 0.0
    %940 = vmatpush1.msra.mxu0 0.0
    %941 = vmatprep.subr.mxu0 0.0
    %942 = vmatpush1.msra.mxu0 0.0
    %943 = vmatprep.subr.mxu0 0.0
    %944 = vmatpush1.msra.mxu0 0.0
    %945 = vmatprep.subr.mxu0 0.0
    %946 = vmatpush1.msra.mxu0 0.0
    %947 = vmatprep.subr.mxu0 0.0
    %948 = vmatpush1.msra.mxu0 0.0
    %949 = vmatprep.subr.mxu0 0.0
    %950 = vmatpush1.msra.mxu0 0.0
    %951 = vmatprep.subr.mxu0 0.0
    %952 = vmatpush1.msra.mxu0 0.0
    %953 = vmatprep.subr.mxu0 0.0
    %954 = vmatpush1.msra.mxu0 0.0
    %955 = vmatprep.subr.mxu0 0.0
    %956 = vmatpush1.msra.mxu0 0.0
    %957 = vmatprep.subr.mxu0 0.0
    %958 = vmatpush1.msra.mxu0 0.0
    %959 = vmatprep.subr.mxu0 0.0
    %960 = vmatpush1.msra.mxu0 0.0
    %961 = vmatprep.subr.mxu0 0.0
    %962 = vmatpush1.msra.mxu0 0.0
    %963 = vmatprep.subr.mxu0 0.0
    %964 = vmatpush1.msra.mxu0 %v928
    %965 = vmatprep.subr.mxu0 0.0
    %966 = vmatpush2.msra.mxu0 0.0
    %967 = vmatprep.subr.mxu0 0.0
    %968 = vmatpush2.msra.mxu0 0.0
    %969 = vmatprep.subr.mxu0 0.0
    %970 = vmatpush2.msra.mxu0 0.0
    %971 = vmatprep.subr.mxu0 0.0
    %972 = vmatpush2.msra.mxu0 0.0
    %973 = vmatprep.subr.mxu0 0.0
    %974 = vmatpush2.msra.mxu0 0.0
    %975 = vmatprep.subr.mxu0 0.0
    %976 = vmatpush2.msra.mxu0 0.0
    %977 = vmatprep.subr.mxu0 0.0
    %978 = vmatpush2.msra.mxu0 0.0
    %979 = vmatprep.subr.mxu0 0.0
    %980 = vmatpush2.msra.mxu0 0.0
    %981 = vmatprep.subr.mxu0 0.0
    %982 = vmatpush2.msra.mxu0 0.0
    %983 = vmatprep.subr.mxu0 0.0
    %984 = vmatpush2.msra.mxu0 0.0
    %985 = vmatprep.subr.mxu0 0.0
    %986 = vmatpush2.msra.mxu0 0.0
    %987 = vmatprep.subr.mxu0 0.0
    %988 = vmatpush2.msra.mxu0 0.0
    %989 = vmatprep.subr.mxu0 0.0
    %990 = vmatpush2.msra.mxu0 0.0
    %991 = vmatprep.subr.mxu0 0.0
    %992 = vmatpush2.msra.mxu0 0.0
    %993 = vmatprep.subr.mxu0 0.0
    %994 = vmatpush2.msra.mxu0 0.0
    %995 = vmatprep.subr.mxu0 0.0
    %996 = vmatpush2.msra.mxu0 0.0
    %997 = vmatprep.mubr.f32.mxu0 0.0
    %998 = vmatmul.mubr.f32.gmra.mxu0 %v931
    %v999 = vpop.f32.mrf.mxu0
    %v1000 = vadd.f32 0.0, %v999
    %v1001 = vpop.f32.mrf.mxu0
    %1002 = vdwg.mxu0
    %1003 = vrot.lane.b32.xlu0 %v328, 112
    %v1004 = vpop.permute.xlu0 %1003
    %1005 = vrot.lane.b32.xlu0 %v328, 80
    %v1006 = vpop.permute.xlu0 %1005
    %v1007 = vsel %vm339, %v1004, 0
    %v1009 = vsel %vm339, %v1006, 0
    %1011 = vmatprep.subr.mxu0 0.0
    %1012 = vmatpush1.xpose.msra.mxu0 0.0
    %1013 = vmatprep.subr.mxu0 0.0
    %1014 = vmatpush1.xpose.msra.mxu0 0.0
    %1015 = vmatprep.subr.mxu0 0.0
    %1016 = vmatpush1.xpose.msra.mxu0 0.0
    %1017 = vmatprep.subr.mxu0 0.0
    %1018 = vmatpush1.xpose.msra.mxu0 0.0
    %1019 = vmatprep.subr.mxu0 0.0
    %1020 = vmatpush1.xpose.msra.mxu0 0.0
    %1021 = vmatprep.subr.mxu0 0.0
    %1022 = vmatpush1.xpose.msra.mxu0 0.0
    %1023 = vmatprep.subr.mxu0 0.0
    %1024 = vmatpush1.xpose.msra.mxu0 0.0
    %1025 = vmatprep.subr.mxu0 0.0
    %1026 = vmatpush1.xpose.msra.mxu0 0.0
    %1027 = vmatprep.subr.mxu0 0.0
    %1028 = vmatpush1.xpose.msra.mxu0 0.0
    %1029 = vmatprep.subr.mxu0 0.0
    %1030 = vmatpush1.xpose.msra.mxu0 0.0
    %1031 = vmatprep.subr.mxu0 0.0
    %1032 = vmatpush1.xpose.msra.mxu0 0.0
    %1033 = vmatprep.subr.mxu0 0.0
    %1034 = vmatpush1.xpose.msra.mxu0 0.0
    %1035 = vmatprep.subr.mxu0 0.0
    %1036 = vmatpush1.xpose.msra.mxu0 0.0
    %1037 = vmatprep.subr.mxu0 0.0
    %1038 = vmatpush1.xpose.msra.mxu0 0.0
    %1039 = vmatprep.subr.mxu0 0.0
    %1040 = vmatpush1.xpose.msra.mxu0 0.0
    %1041 = vmatprep.subr.mxu0 0.0
    %1042 = vmatpush1.xpose.msra.mxu0 %v1009
    %1043 = vmatprep.subr.mxu0 0.0
    %1044 = vmatpush2.xpose.msra.mxu0 0.0
    %1045 = vmatprep.subr.mxu0 0.0
    %1046 = vmatpush2.xpose.msra.mxu0 0.0
    %1047 = vmatprep.subr.mxu0 0.0
    %1048 = vmatpush2.xpose.msra.mxu0 0.0
    %1049 = vmatprep.subr.mxu0 0.0
    %1050 = vmatpush2.xpose.msra.mxu0 0.0
    %1051 = vmatprep.subr.mxu0 0.0
    %1052 = vmatpush2.xpose.msra.mxu0 0.0
    %1053 = vmatprep.subr.mxu0 0.0
    %1054 = vmatpush2.xpose.msra.mxu0 0.0
    %1055 = vmatprep.subr.mxu0 0.0
    %1056 = vmatpush2.xpose.msra.mxu0 0.0
    %1057 = vmatprep.subr.mxu0 0.0
    %1058 = vmatpush2.xpose.msra.mxu0 0.0
    %1059 = vmatprep.subr.mxu0 0.0
    %1060 = vmatpush2.xpose.msra.mxu0 0.0
    %1061 = vmatprep.subr.mxu0 0.0
    %1062 = vmatpush2.xpose.msra.mxu0 0.0
    %1063 = vmatprep.subr.mxu0 0.0
    %1064 = vmatpush2.xpose.msra.mxu0 0.0
    %1065 = vmatprep.subr.mxu0 0.0
    %1066 = vmatpush2.xpose.msra.mxu0 0.0
    %1067 = vmatprep.subr.mxu0 0.0
    %1068 = vmatpush2.xpose.msra.mxu0 0.0
    %1069 = vmatprep.subr.mxu0 0.0
    %1070 = vmatpush2.xpose.msra.mxu0 0.0
    %1071 = vmatprep.subr.mxu0 0.0
    %1072 = vmatpush2.xpose.msra.mxu0 0.0
    %1073 = vmatprep.subr.mxu0 0.0
    %1074 = vmatpush2.xpose.msra.mxu0 0.0
    %1075 = vmatprep.mubr.f32.mxu0 0.0
    %1076 = vmatmul.mubr.f32.gmra.mxu0 %v1007
    %v1077 = vpop.f32.mrf.mxu0
    %v1078 = vadd.f32 0.0, %v1077
    %v1079 = vpop.f32.mrf.mxu0
    %1080 = vdwg.mxu0
    %1081 = vrot.lane.b32.xlu0 %v333, 112
    %v1082 = vpop.permute.xlu0 %1081
    %1083 = vrot.lane.b32.xlu0 %v333, 80
    %v1084 = vpop.permute.xlu0 %1083
    %v1085 = vsel %vm339, %v1082, 0
    %v1087 = vsel %vm339, %v1084, 0
    %1089 = vmatprep.subr.mxu0 0.0
    %1090 = vmatpush1.xpose.msra.mxu0 0.0
    %1091 = vmatprep.subr.mxu0 0.0
    %1092 = vmatpush1.xpose.msra.mxu0 0.0
    %1093 = vmatprep.subr.mxu0 0.0
    %1094 = vmatpush1.xpose.msra.mxu0 0.0
    %1095 = vmatprep.subr.mxu0 0.0
    %1096 = vmatpush1.xpose.msra.mxu0 0.0
    %1097 = vmatprep.subr.mxu0 0.0
    %1098 = vmatpush1.xpose.msra.mxu0 0.0
    %1099 = vmatprep.subr.mxu0 0.0
    %1100 = vmatpush1.xpose.msra.mxu0 0.0
    %1101 = vmatprep.subr.mxu0 0.0
    %1102 = vmatpush1.xpose.msra.mxu0 0.0
    %1103 = vmatprep.subr.mxu0 0.0
    %1104 = vmatpush1.xpose.msra.mxu0 0.0
    %1105 = vmatprep.subr.mxu0 0.0
    %1106 = vmatpush1.xpose.msra.mxu0 0.0
    %1107 = vmatprep.subr.mxu0 0.0
    %1108 = vmatpush1.xpose.msra.mxu0 0.0
    %1109 = vmatprep.subr.mxu0 0.0
    %1110 = vmatpush1.xpose.msra.mxu0 0.0
    %1111 = vmatprep.subr.mxu0 0.0
    %1112 = vmatpush1.xpose.msra.mxu0 0.0
    %1113 = vmatprep.subr.mxu0 0.0
    %1114 = vmatpush1.xpose.msra.mxu0 0.0
    %1115 = vmatprep.subr.mxu0 0.0
    %1116 = vmatpush1.xpose.msra.mxu0 0.0
    %1117 = vmatprep.subr.mxu0 0.0
    %1118 = vmatpush1.xpose.msra.mxu0 0.0
    %1119 = vmatprep.subr.mxu0 0.0
    %1120 = vmatpush1.xpose.msra.mxu0 %v1087
    %1121 = vmatprep.subr.mxu0 0.0
    %1122 = vmatpush2.xpose.msra.mxu0 0.0
    %1123 = vmatprep.subr.mxu0 0.0
    %1124 = vmatpush2.xpose.msra.mxu0 0.0
    %1125 = vmatprep.subr.mxu0 0.0
    %1126 = vmatpush2.xpose.msra.mxu0 0.0
    %1127 = vmatprep.subr.mxu0 0.0
    %1128 = vmatpush2.xpose.msra.mxu0 0.0
    %1129 = vmatprep.subr.mxu0 0.0
    %1130 = vmatpush2.xpose.msra.mxu0 0.0
    %1131 = vmatprep.subr.mxu0 0.0
    %1132 = vmatpush2.xpose.msra.mxu0 0.0
    %1133 = vmatprep.subr.mxu0 0.0
    %1134 = vmatpush2.xpose.msra.mxu0 0.0
    %1135 = vmatprep.subr.mxu0 0.0
    %1136 = vmatpush2.xpose.msra.mxu0 0.0
    %1137 = vmatprep.subr.mxu0 0.0
    %1138 = vmatpush2.xpose.msra.mxu0 0.0
    %1139 = vmatprep.subr.mxu0 0.0
    %1140 = vmatpush2.xpose.msra.mxu0 0.0
    %1141 = vmatprep.subr.mxu0 0.0
    %1142 = vmatpush2.xpose.msra.mxu0 0.0
    %1143 = vmatprep.subr.mxu0 0.0
    %1144 = vmatpush2.xpose.msra.mxu0 0.0
    %1145 = vmatprep.subr.mxu0 0.0
    %1146 = vmatpush2.xpose.msra.mxu0 0.0
    %1147 = vmatprep.subr.mxu0 0.0
    %1148 = vmatpush2.xpose.msra.mxu0 0.0
    %1149 = vmatprep.subr.mxu0 0.0
    %1150 = vmatpush2.xpose.msra.mxu0 0.0
    %1151 = vmatprep.subr.mxu0 0.0
    %1152 = vmatpush2.xpose.msra.mxu0 0.0
    %1153 = vmatprep.mubr.f32.mxu0 0.0
    %1154 = vmatmul.mubr.f32.gmra.mxu0 %v1085
    %v1155 = vpop.f32.mrf.mxu0
    %v1156 = vadd.f32 0.0, %v1155
    %v1157 = vpop.f32.mrf.mxu0
    %1158 = vdwg.mxu0
    %v1159 = vmul.f32 %v1078, 0.35355338
    %v1160 = vmul.f32 %v1156, 0.35355338
    %v1161 = vadd.f32 %v1159, %v153
    %v1162 = vadd.f32 %v1160, %v153
    %v1163 = vsel %vm339, %v1161, -inf
    %1164 = vmax.xlane.f32.xlu0 %v1163
    %v1165 = vpop.xlane.xlu0 %1164
    %v1166 = vsel %vm339, %v1162, -inf
    %1167 = vmax.xlane.f32.xlu0 %v1166
    %v1168 = vpop.xlane.xlu0 %1167
    %v1169 = vsub.f32 %v1161, %v1165
    %v1170 = vsub.f32 %v1162, %v1168
    %v1171 = vmul.f32 %v1169, 1.442695
    %v1172 = vpow.pop %v1171
    %v1173 = vmul.f32 %v1170, 1.442695
    %v1174 = vpow.pop %v1173
    %v1175 = vsel %vm339, %v1172, 0.0
    %1176 = vadd.xlane.f32.xlu0 %v1175
    %v1177 = vpop.xlane.xlu0 %1176
    %v1178 = vsel %vm339, %v1174, 0.0
    %1179 = vadd.xlane.f32.xlu0 %v1178
    %v1180 = vpop.xlane.xlu0 %1179
    %v1181 = vrcp.pop %v1177
    %v1182 = vmul.f32 %v1172, %v1181
    %v1183 = vrcp.pop %v1180
    %v1184 = vmul.f32 %v1174, %v1183
    %1185 = vrot.lane.b32.xlu0 %v328, 48
    %v1186 = vpop.permute.xlu0 %1185
    %v1189 = vsel %vm339, %v1182, 0
    %1191 = vmatprep.subr.mxu0 0.0
    %1192 = vmatpush1.msra.mxu0 0.0
    %1193 = vmatprep.subr.mxu0 0.0
    %1194 = vmatpush1.msra.mxu0 0.0
    %1195 = vmatprep.subr.mxu0 0.0
    %1196 = vmatpush1.msra.mxu0 0.0
    %1197 = vmatprep.subr.mxu0 0.0
    %1198 = vmatpush1.msra.mxu0 0.0
    %1199 = vmatprep.subr.mxu0 0.0
    %1200 = vmatpush1.msra.mxu0 0.0
    %1201 = vmatprep.subr.mxu0 0.0
    %1202 = vmatpush1.msra.mxu0 0.0
    %1203 = vmatprep.subr.mxu0 0.0
    %1204 = vmatpush1.msra.mxu0 0.0
    %1205 = vmatprep.subr.mxu0 0.0
    %1206 = vmatpush1.msra.mxu0 0.0
    %1207 = vmatprep.subr.mxu0 0.0
    %1208 = vmatpush1.msra.mxu0 0.0
    %1209 = vmatprep.subr.mxu0 0.0
    %1210 = vmatpush1.msra.mxu0 0.0
    %1211 = vmatprep.subr.mxu0 0.0
    %1212 = vmatpush1.msra.mxu0 0.0
    %1213 = vmatprep.subr.mxu0 0.0
    %1214 = vmatpush1.msra.mxu0 0.0
    %1215 = vmatprep.subr.mxu0 0.0
    %1216 = vmatpush1.msra.mxu0 0.0
    %1217 = vmatprep.subr.mxu0 0.0
    %1218 = vmatpush1.msra.mxu0 0.0
    %1219 = vmatprep.subr.mxu0 0.0
    %1220 = vmatpush1.msra.mxu0 0.0
    %1221 = vmatprep.subr.mxu0 0.0
    %1222 = vmatpush1.msra.mxu0 %v1186
    %1223 = vmatprep.subr.mxu0 0.0
    %1224 = vmatpush2.msra.mxu0 0.0
    %1225 = vmatprep.subr.mxu0 0.0
    %1226 = vmatpush2.msra.mxu0 0.0
    %1227 = vmatprep.subr.mxu0 0.0
    %1228 = vmatpush2.msra.mxu0 0.0
    %1229 = vmatprep.subr.mxu0 0.0
    %1230 = vmatpush2.msra.mxu0 0.0
    %1231 = vmatprep.subr.mxu0 0.0
    %1232 = vmatpush2.msra.mxu0 0.0
    %1233 = vmatprep.subr.mxu0 0.0
    %1234 = vmatpush2.msra.mxu0 0.0
    %1235 = vmatprep.subr.mxu0 0.0
    %1236 = vmatpush2.msra.mxu0 0.0
    %1237 = vmatprep.subr.mxu0 0.0
    %1238 = vmatpush2.msra.mxu0 0.0
    %1239 = vmatprep.subr.mxu0 0.0
    %1240 = vmatpush2.msra.mxu0 0.0
    %1241 = vmatprep.subr.mxu0 0.0
    %1242 = vmatpush2.msra.mxu0 0.0
    %1243 = vmatprep.subr.mxu0 0.0
    %1244 = vmatpush2.msra.mxu0 0.0
    %1245 = vmatprep.subr.mxu0 0.0
    %1246 = vmatpush2.msra.mxu0 0.0
    %1247 = vmatprep.subr.mxu0 0.0
    %1248 = vmatpush2.msra.mxu0 0.0
    %1249 = vmatprep.subr.mxu0 0.0
    %1250 = vmatpush2.msra.mxu0 0.0
    %1251 = vmatprep.subr.mxu0 0.0
    %1252 = vmatpush2.msra.mxu0 0.0
    %1253 = vmatprep.subr.mxu0 0.0
    %1254 = vmatpush2.msra.mxu0 0.0
    %1255 = vmatprep.mubr.f32.mxu0 0.0
    %1256 = vmatmul.mubr.f32.gmra.mxu0 %v1189
    %v1257 = vpop.f32.mrf.mxu0
    %v1258 = vadd.f32 0.0, %v1257
    %v1259 = vpop.f32.mrf.mxu0
    %1260 = vdwg.mxu0
    %1261 = vrot.lane.b32.xlu0 %v333, 48
    %v1262 = vpop.permute.xlu0 %1261
    %v1265 = vsel %vm339, %v1184, 0
    %1267 = vmatprep.subr.mxu0 0.0
    %1268 = vmatpush1.msra.mxu0 0.0
    %1269 = vmatprep.subr.mxu0 0.0
    %1270 = vmatpush1.msra.mxu0 0.0
    %1271 = vmatprep.subr.mxu0 0.0
    %1272 = vmatpush1.msra.mxu0 0.0
    %1273 = vmatprep.subr.mxu0 0.0
    %1274 = vmatpush1.msra.mxu0 0.0
    %1275 = vmatprep.subr.mxu0 0.0
    %1276 = vmatpush1.msra.mxu0 0.0
    %1277 = vmatprep.subr.mxu0 0.0
    %1278 = vmatpush1.msra.mxu0 0.0
    %1279 = vmatprep.subr.mxu0 0.0
    %1280 = vmatpush1.msra.mxu0 0.0
    %1281 = vmatprep.subr.mxu0 0.0
    %1282 = vmatpush1.msra.mxu0 0.0
    %1283 = vmatprep.subr.mxu0 0.0
    %1284 = vmatpush1.msra.mxu0 0.0
    %1285 = vmatprep.subr.mxu0 0.0
    %1286 = vmatpush1.msra.mxu0 0.0
    %1287 = vmatprep.subr.mxu0 0.0
    %1288 = vmatpush1.msra.mxu0 0.0
    %1289 = vmatprep.subr.mxu0 0.0
    %1290 = vmatpush1.msra.mxu0 0.0
    %1291 = vmatprep.subr.mxu0 0.0
    %1292 = vmatpush1.msra.mxu0 0.0
    %1293 = vmatprep.subr.mxu0 0.0
    %1294 = vmatpush1.msra.mxu0 0.0
    %1295 = vmatprep.subr.mxu0 0.0
    %1296 = vmatpush1.msra.mxu0 0.0
    %1297 = vmatprep.subr.mxu0 0.0
    %1298 = vmatpush1.msra.mxu0 %v1262
    %1299 = vmatprep.subr.mxu0 0.0
    %1300 = vmatpush2.msra.mxu0 0.0
    %1301 = vmatprep.subr.mxu0 0.0
    %1302 = vmatpush2.msra.mxu0 0.0
    %1303 = vmatprep.subr.mxu0 0.0
    %1304 = vmatpush2.msra.mxu0 0.0
    %1305 = vmatprep.subr.mxu0 0.0
    %1306 = vmatpush2.msra.mxu0 0.0
    %1307 = vmatprep.subr.mxu0 0.0
    %1308 = vmatpush2.msra.mxu0 0.0
    %1309 = vmatprep.subr.mxu0 0.0
    %1310 = vmatpush2.msra.mxu0 0.0
    %1311 = vmatprep.subr.mxu0 0.0
    %1312 = vmatpush2.msra.mxu0 0.0
    %1313 = vmatprep.subr.mxu0 0.0
    %1314 = vmatpush2.msra.mxu0 0.0
    %1315 = vmatprep.subr.mxu0 0.0
    %1316 = vmatpush2.msra.mxu0 0.0
    %1317 = vmatprep.subr.mxu0 0.0
    %1318 = vmatpush2.msra.mxu0 0.0
    %1319 = vmatprep.subr.mxu0 0.0
    %1320 = vmatpush2.msra.mxu0 0.0
    %1321 = vmatprep.subr.mxu0 0.0
    %1322 = vmatpush2.msra.mxu0 0.0
    %1323 = vmatprep.subr.mxu0 0.0
    %1324 = vmatpush2.msra.mxu0 0.0
    %1325 = vmatprep.subr.mxu0 0.0
    %1326 = vmatpush2.msra.mxu0 0.0
    %1327 = vmatprep.subr.mxu0 0.0
    %1328 = vmatpush2.msra.mxu0 0.0
    %1329 = vmatprep.subr.mxu0 0.0
    %1330 = vmatpush2.msra.mxu0 0.0
    %1331 = vmatprep.mubr.f32.mxu0 0.0
    %1332 = vmatmul.mubr.f32.gmra.mxu0 %v1265
    %v1333 = vpop.f32.mrf.mxu0
    %v1334 = vadd.f32 0.0, %v1333
    %v1335 = vpop.f32.mrf.mxu0
    %1336 = vdwg.mxu0
    %1337 = vrot.lane.b32.xlu0 %v328, 104
    %v1338 = vpop.permute.xlu0 %1337
    %1339 = vrot.lane.b32.xlu0 %v328, 72
    %v1340 = vpop.permute.xlu0 %1339
    %v1341 = vsel %vm339, %v1338, 0
    %v1343 = vsel %vm339, %v1340, 0
    %1345 = vmatprep.subr.mxu0 0.0
    %1346 = vmatpush1.xpose.msra.mxu0 0.0
    %1347 = vmatprep.subr.mxu0 0.0
    %1348 = vmatpush1.xpose.msra.mxu0 0.0
    %1349 = vmatprep.subr.mxu0 0.0
    %1350 = vmatpush1.xpose.msra.mxu0 0.0
    %1351 = vmatprep.subr.mxu0 0.0
    %1352 = vmatpush1.xpose.msra.mxu0 0.0
    %1353 = vmatprep.subr.mxu0 0.0
    %1354 = vmatpush1.xpose.msra.mxu0 0.0
    %1355 = vmatprep.subr.mxu0 0.0
    %1356 = vmatpush1.xpose.msra.mxu0 0.0
    %1357 = vmatprep.subr.mxu0 0.0
    %1358 = vmatpush1.xpose.msra.mxu0 0.0
    %1359 = vmatprep.subr.mxu0 0.0
    %1360 = vmatpush1.xpose.msra.mxu0 0.0
    %1361 = vmatprep.subr.mxu0 0.0
    %1362 = vmatpush1.xpose.msra.mxu0 0.0
    %1363 = vmatprep.subr.mxu0 0.0
    %1364 = vmatpush1.xpose.msra.mxu0 0.0
    %1365 = vmatprep.subr.mxu0 0.0
    %1366 = vmatpush1.xpose.msra.mxu0 0.0
    %1367 = vmatprep.subr.mxu0 0.0
    %1368 = vmatpush1.xpose.msra.mxu0 0.0
    %1369 = vmatprep.subr.mxu0 0.0
    %1370 = vmatpush1.xpose.msra.mxu0 0.0
    %1371 = vmatprep.subr.mxu0 0.0
    %1372 = vmatpush1.xpose.msra.mxu0 0.0
    %1373 = vmatprep.subr.mxu0 0.0
    %1374 = vmatpush1.xpose.msra.mxu0 0.0
    %1375 = vmatprep.subr.mxu0 0.0
    %1376 = vmatpush1.xpose.msra.mxu0 %v1343
    %1377 = vmatprep.subr.mxu0 0.0
    %1378 = vmatpush2.xpose.msra.mxu0 0.0
    %1379 = vmatprep.subr.mxu0 0.0
    %1380 = vmatpush2.xpose.msra.mxu0 0.0
    %1381 = vmatprep.subr.mxu0 0.0
    %1382 = vmatpush2.xpose.msra.mxu0 0.0
    %1383 = vmatprep.subr.mxu0 0.0
    %1384 = vmatpush2.xpose.msra.mxu0 0.0
    %1385 = vmatprep.subr.mxu0 0.0
    %1386 = vmatpush2.xpose.msra.mxu0 0.0
    %1387 = vmatprep.subr.mxu0 0.0
    %1388 = vmatpush2.xpose.msra.mxu0 0.0
    %1389 = vmatprep.subr.mxu0 0.0
    %1390 = vmatpush2.xpose.msra.mxu0 0.0
    %1391 = vmatprep.subr.mxu0 0.0
    %1392 = vmatpush2.xpose.msra.mxu0 0.0
    %1393 = vmatprep.subr.mxu0 0.0
    %1394 = vmatpush2.xpose.msra.mxu0 0.0
    %1395 = vmatprep.subr.mxu0 0.0
    %1396 = vmatpush2.xpose.msra.mxu0 0.0
    %1397 = vmatprep.subr.mxu0 0.0
    %1398 = vmatpush2.xpose.msra.mxu0 0.0
    %1399 = vmatprep.subr.mxu0 0.0
    %1400 = vmatpush2.xpose.msra.mxu0 0.0
    %1401 = vmatprep.subr.mxu0 0.0
    %1402 = vmatpush2.xpose.msra.mxu0 0.0
    %1403 = vmatprep.subr.mxu0 0.0
    %1404 = vmatpush2.xpose.msra.mxu0 0.0
    %1405 = vmatprep.subr.mxu0 0.0
    %1406 = vmatpush2.xpose.msra.mxu0 0.0
    %1407 = vmatprep.subr.mxu0 0.0
    %1408 = vmatpush2.xpose.msra.mxu0 0.0
    %1409 = vmatprep.mubr.f32.mxu0 0.0
    %1410 = vmatmul.mubr.f32.gmra.mxu0 %v1341
    %v1411 = vpop.f32.mrf.mxu0
    %v1412 = vadd.f32 0.0, %v1411
    %v1413 = vpop.f32.mrf.mxu0
    %1414 = vdwg.mxu0
    %1415 = vrot.lane.b32.xlu0 %v333, 104
    %v1416 = vpop.permute.xlu0 %1415
    %1417 = vrot.lane.b32.xlu0 %v333, 72
    %v1418 = vpop.permute.xlu0 %1417
    %v1419 = vsel %vm339, %v1416, 0
    %v1421 = vsel %vm339, %v1418, 0
    %1423 = vmatprep.subr.mxu0 0.0
    %1424 = vmatpush1.xpose.msra.mxu0 0.0
    %1425 = vmatprep.subr.mxu0 0.0
    %1426 = vmatpush1.xpose.msra.mxu0 0.0
    %1427 = vmatprep.subr.mxu0 0.0
    %1428 = vmatpush1.xpose.msra.mxu0 0.0
    %1429 = vmatprep.subr.mxu0 0.0
    %1430 = vmatpush1.xpose.msra.mxu0 0.0
    %1431 = vmatprep.subr.mxu0 0.0
    %1432 = vmatpush1.xpose.msra.mxu0 0.0
    %1433 = vmatprep.subr.mxu0 0.0
    %1434 = vmatpush1.xpose.msra.mxu0 0.0
    %1435 = vmatprep.subr.mxu0 0.0
    %1436 = vmatpush1.xpose.msra.mxu0 0.0
    %1437 = vmatprep.subr.mxu0 0.0
    %1438 = vmatpush1.xpose.msra.mxu0 0.0
    %1439 = vmatprep.subr.mxu0 0.0
    %1440 = vmatpush1.xpose.msra.mxu0 0.0
    %1441 = vmatprep.subr.mxu0 0.0
    %1442 = vmatpush1.xpose.msra.mxu0 0.0
    %1443 = vmatprep.subr.mxu0 0.0
    %1444 = vmatpush1.xpose.msra.mxu0 0.0
    %1445 = vmatprep.subr.mxu0 0.0
    %1446 = vmatpush1.xpose.msra.mxu0 0.0
    %1447 = vmatprep.subr.mxu0 0.0
    %1448 = vmatpush1.xpose.msra.mxu0 0.0
    %1449 = vmatprep.subr.mxu0 0.0
    %1450 = vmatpush1.xpose.msra.mxu0 0.0
    %1451 = vmatprep.subr.mxu0 0.0
    %1452 = vmatpush1.xpose.msra.mxu0 0.0
    %1453 = vmatprep.subr.mxu0 0.0
    %1454 = vmatpush1.xpose.msra.mxu0 %v1421
    %1455 = vmatprep.subr.mxu0 0.0
    %1456 = vmatpush2.xpose.msra.mxu0 0.0
    %1457 = vmatprep.subr.mxu0 0.0
    %1458 = vmatpush2.xpose.msra.mxu0 0.0
    %1459 = vmatprep.subr.mxu0 0.0
    %1460 = vmatpush2.xpose.msra.mxu0 0.0
    %1461 = vmatprep.subr.mxu0 0.0
    %1462 = vmatpush2.xpose.msra.mxu0 0.0
    %1463 = vmatprep.subr.mxu0 0.0
    %1464 = vmatpush2.xpose.msra.mxu0 0.0
    %1465 = vmatprep.subr.mxu0 0.0
    %1466 = vmatpush2.xpose.msra.mxu0 0.0
    %1467 = vmatprep.subr.mxu0 0.0
    %1468 = vmatpush2.xpose.msra.mxu0 0.0
    %1469 = vmatprep.subr.mxu0 0.0
    %1470 = vmatpush2.xpose.msra.mxu0 0.0
    %1471 = vmatprep.subr.mxu0 0.0
    %1472 = vmatpush2.xpose.msra.mxu0 0.0
    %1473 = vmatprep.subr.mxu0 0.0
    %1474 = vmatpush2.xpose.msra.mxu0 0.0
    %1475 = vmatprep.subr.mxu0 0.0
    %1476 = vmatpush2.xpose.msra.mxu0 0.0
    %1477 = vmatprep.subr.mxu0 0.0
    %1478 = vmatpush2.xpose.msra.mxu0 0.0
    %1479 = vmatprep.subr.mxu0 0.0
    %1480 = vmatpush2.xpose.msra.mxu0 0.0
    %1481 = vmatprep.subr.mxu0 0.0
    %1482 = vmatpush2.xpose.msra.mxu0 0.0
    %1483 = vmatprep.subr.mxu0 0.0
    %1484 = vmatpush2.xpose.msra.mxu0 0.0
    %1485 = vmatprep.subr.mxu0 0.0
    %1486 = vmatpush2.xpose.msra.mxu0 0.0
    %1487 = vmatprep.mubr.f32.mxu0 0.0
    %1488 = vmatmul.mubr.f32.gmra.mxu0 %v1419
    %v1489 = vpop.f32.mrf.mxu0
    %v1490 = vadd.f32 0.0, %v1489
    %v1491 = vpop.f32.mrf.mxu0
    %1492 = vdwg.mxu0
    %v1493 = vmul.f32 %v1412, 0.35355338
    %v1494 = vmul.f32 %v1490, 0.35355338
    %v1495 = vadd.f32 %v1493, %v153
    %v1496 = vadd.f32 %v1494, %v153
    %v1497 = vsel %vm339, %v1495, -inf
    %1498 = vmax.xlane.f32.xlu0 %v1497
    %v1499 = vpop.xlane.xlu0 %1498
    %v1500 = vsel %vm339, %v1496, -inf
    %1501 = vmax.xlane.f32.xlu0 %v1500
    %v1502 = vpop.xlane.xlu0 %1501
    %v1503 = vsub.f32 %v1495, %v1499
    %v1504 = vsub.f32 %v1496, %v1502
    %v1505 = vmul.f32 %v1503, 1.442695
    %v1506 = vpow.pop %v1505
    %v1507 = vmul.f32 %v1504, 1.442695
    %v1508 = vpow.pop %v1507
    %v1509 = vsel %vm339, %v1506, 0.0
    %1510 = vadd.xlane.f32.xlu0 %v1509
    %v1511 = vpop.xlane.xlu0 %1510
    %v1512 = vsel %vm339, %v1508, 0.0
    %1513 = vadd.xlane.f32.xlu0 %v1512
    %v1514 = vpop.xlane.xlu0 %1513
    %v1515 = vrcp.pop %v1511
    %v1516 = vmul.f32 %v1506, %v1515
    %v1517 = vrcp.pop %v1514
    %v1518 = vmul.f32 %v1508, %v1517
    %1519 = vrot.lane.b32.xlu0 %v328, 40
    %v1520 = vpop.permute.xlu0 %1519
    %v1523 = vsel %vm339, %v1516, 0
    %1525 = vmatprep.subr.mxu0 0.0
    %1526 = vmatpush1.msra.mxu0 0.0
    %1527 = vmatprep.subr.mxu0 0.0
    %1528 = vmatpush1.msra.mxu0 0.0
    %1529 = vmatprep.subr.mxu0 0.0
    %1530 = vmatpush1.msra.mxu0 0.0
    %1531 = vmatprep.subr.mxu0 0.0
    %1532 = vmatpush1.msra.mxu0 0.0
    %1533 = vmatprep.subr.mxu0 0.0
    %1534 = vmatpush1.msra.mxu0 0.0
    %1535 = vmatprep.subr.mxu0 0.0
    %1536 = vmatpush1.msra.mxu0 0.0
    %1537 = vmatprep.subr.mxu0 0.0
    %1538 = vmatpush1.msra.mxu0 0.0
    %1539 = vmatprep.subr.mxu0 0.0
    %1540 = vmatpush1.msra.mxu0 0.0
    %1541 = vmatprep.subr.mxu0 0.0
    %1542 = vmatpush1.msra.mxu0 0.0
    %1543 = vmatprep.subr.mxu0 0.0
    %1544 = vmatpush1.msra.mxu0 0.0
    %1545 = vmatprep.subr.mxu0 0.0
    %1546 = vmatpush1.msra.mxu0 0.0
    %1547 = vmatprep.subr.mxu0 0.0
    %1548 = vmatpush1.msra.mxu0 0.0
    %1549 = vmatprep.subr.mxu0 0.0
    %1550 = vmatpush1.msra.mxu0 0.0
    %1551 = vmatprep.subr.mxu0 0.0
    %1552 = vmatpush1.msra.mxu0 0.0
    %1553 = vmatprep.subr.mxu0 0.0
    %1554 = vmatpush1.msra.mxu0 0.0
    %1555 = vmatprep.subr.mxu0 0.0
    %1556 = vmatpush1.msra.mxu0 %v1520
    %1557 = vmatprep.subr.mxu0 0.0
    %1558 = vmatpush2.msra.mxu0 0.0
    %1559 = vmatprep.subr.mxu0 0.0
    %1560 = vmatpush2.msra.mxu0 0.0
    %1561 = vmatprep.subr.mxu0 0.0
    %1562 = vmatpush2.msra.mxu0 0.0
    %1563 = vmatprep.subr.mxu0 0.0
    %1564 = vmatpush2.msra.mxu0 0.0
    %1565 = vmatprep.subr.mxu0 0.0
    %1566 = vmatpush2.msra.mxu0 0.0
    %1567 = vmatprep.subr.mxu0 0.0
    %1568 = vmatpush2.msra.mxu0 0.0
    %1569 = vmatprep.subr.mxu0 0.0
    %1570 = vmatpush2.msra.mxu0 0.0
    %1571 = vmatprep.subr.mxu0 0.0
    %1572 = vmatpush2.msra.mxu0 0.0
    %1573 = vmatprep.subr.mxu0 0.0
    %1574 = vmatpush2.msra.mxu0 0.0
    %1575 = vmatprep.subr.mxu0 0.0
    %1576 = vmatpush2.msra.mxu0 0.0
    %1577 = vmatprep.subr.mxu0 0.0
    %1578 = vmatpush2.msra.mxu0 0.0
    %1579 = vmatprep.subr.mxu0 0.0
    %1580 = vmatpush2.msra.mxu0 0.0
    %1581 = vmatprep.subr.mxu0 0.0
    %1582 = vmatpush2.msra.mxu0 0.0
    %1583 = vmatprep.subr.mxu0 0.0
    %1584 = vmatpush2.msra.mxu0 0.0
    %1585 = vmatprep.subr.mxu0 0.0
    %1586 = vmatpush2.msra.mxu0 0.0
    %1587 = vmatprep.subr.mxu0 0.0
    %1588 = vmatpush2.msra.mxu0 0.0
    %1589 = vmatprep.mubr.f32.mxu0 0.0
    %1590 = vmatmul.mubr.f32.gmra.mxu0 %v1523
    %v1591 = vpop.f32.mrf.mxu0
    %v1592 = vadd.f32 0.0, %v1591
    %v1593 = vpop.f32.mrf.mxu0
    %1594 = vdwg.mxu0
    %1595 = vrot.lane.b32.xlu0 %v333, 40
    %v1596 = vpop.permute.xlu0 %1595
    %v1599 = vsel %vm339, %v1518, 0
    %1601 = vmatprep.subr.mxu0 0.0
    %1602 = vmatpush1.msra.mxu0 0.0
    %1603 = vmatprep.subr.mxu0 0.0
    %1604 = vmatpush1.msra.mxu0 0.0
    %1605 = vmatprep.subr.mxu0 0.0
    %1606 = vmatpush1.msra.mxu0 0.0
    %1607 = vmatprep.subr.mxu0 0.0
    %1608 = vmatpush1.msra.mxu0 0.0
    %1609 = vmatprep.subr.mxu0 0.0
    %1610 = vmatpush1.msra.mxu0 0.0
    %1611 = vmatprep.subr.mxu0 0.0
    %1612 = vmatpush1.msra.mxu0 0.0
    %1613 = vmatprep.subr.mxu0 0.0
    %1614 = vmatpush1.msra.mxu0 0.0
    %1615 = vmatprep.subr.mxu0 0.0
    %1616 = vmatpush1.msra.mxu0 0.0
    %1617 = vmatprep.subr.mxu0 0.0
    %1618 = vmatpush1.msra.mxu0 0.0
    %1619 = vmatprep.subr.mxu0 0.0
    %1620 = vmatpush1.msra.mxu0 0.0
    %1621 = vmatprep.subr.mxu0 0.0
    %1622 = vmatpush1.msra.mxu0 0.0
    %1623 = vmatprep.subr.mxu0 0.0
    %1624 = vmatpush1.msra.mxu0 0.0
    %1625 = vmatprep.subr.mxu0 0.0
    %1626 = vmatpush1.msra.mxu0 0.0
    %1627 = vmatprep.subr.mxu0 0.0
    %1628 = vmatpush1.msra.mxu0 0.0
    %1629 = vmatprep.subr.mxu0 0.0
    %1630 = vmatpush1.msra.mxu0 0.0
    %1631 = vmatprep.subr.mxu0 0.0
    %1632 = vmatpush1.msra.mxu0 %v1596
    %1633 = vmatprep.subr.mxu0 0.0
    %1634 = vmatpush2.msra.mxu0 0.0
    %1635 = vmatprep.subr.mxu0 0.0
    %1636 = vmatpush2.msra.mxu0 0.0
    %1637 = vmatprep.subr.mxu0 0.0
    %1638 = vmatpush2.msra.mxu0 0.0
    %1639 = vmatprep.subr.mxu0 0.0
    %1640 = vmatpush2.msra.mxu0 0.0
    %1641 = vmatprep.subr.mxu0 0.0
    %1642 = vmatpush2.msra.mxu0 0.0
    %1643 = vmatprep.subr.mxu0 0.0
    %1644 = vmatpush2.msra.mxu0 0.0
    %1645 = vmatprep.subr.mxu0 0.0
    %1646 = vmatpush2.msra.mxu0 0.0
    %1647 = vmatprep.subr.mxu0 0.0
    %1648 = vmatpush2.msra.mxu0 0.0
    %1649 = vmatprep.subr.mxu0 0.0
    %1650 = vmatpush2.msra.mxu0 0.0
    %1651 = vmatprep.subr.mxu0 0.0
    %1652 = vmatpush2.msra.mxu0 0.0
    %1653 = vmatprep.subr.mxu0 0.0
    %1654 = vmatpush2.msra.mxu0 0.0
    %1655 = vmatprep.subr.mxu0 0.0
    %1656 = vmatpush2.msra.mxu0 0.0
    %1657 = vmatprep.subr.mxu0 0.0
    %1658 = vmatpush2.msra.mxu0 0.0
    %1659 = vmatprep.subr.mxu0 0.0
    %1660 = vmatpush2.msra.mxu0 0.0
    %1661 = vmatprep.subr.mxu0 0.0
    %1662 = vmatpush2.msra.mxu0 0.0
    %1663 = vmatprep.subr.mxu0 0.0
    %1664 = vmatpush2.msra.mxu0 0.0
    %1665 = vmatprep.mubr.f32.mxu0 0.0
    %1666 = vmatmul.mubr.f32.gmra.mxu0 %v1599
    %v1667 = vpop.f32.mrf.mxu0
    %v1668 = vadd.f32 0.0, %v1667
    %v1669 = vpop.f32.mrf.mxu0
    %1670 = vdwg.mxu0
    %1673 = vrot.lane.b32.xlu0 %v924, 8
    %v1674 = vpop.permute.xlu0 %1673
    %1675 = vrot.lane.b32.xlu0 %v1000, 8
    %v1676 = vpop.permute.xlu0 %1675
    %1681 = vrot.lane.b32.xlu0 %v1258, 16
    %v1682 = vpop.permute.xlu0 %1681
    %1683 = vrot.lane.b32.xlu0 %v1334, 16
    %v1684 = vpop.permute.xlu0 %1683
    %1689 = vrot.lane.b32.xlu0 %v1592, 24
    %v1690 = vpop.permute.xlu0 %1689
    %1691 = vrot.lane.b32.xlu0 %v1668, 24
    %v1692 = vpop.permute.xlu0 %1691
    %v1695 = vsel %vm339, %v590, %v1674
    %v1696 = vsel %vm339, %v666, %v1676
    %vm1697 = vcmask 130048
    %v1698 = vsel %vm1697, %v1695, %v1682
    %v1699 = vsel %vm1697, %v1696, %v1684
    %vm1700 = vcmask 195584
    %v1701 = vsel %vm1700, %v1698, %v1690
    %v1702 = vsel %vm1700, %v1699, %v1692
    %v1704 = vsel %vm211, %v1701, 0
    %v1707 = vsel %vm211, %v1702, 0
    %1709 = vmatprep.subr.mxu0 0.0
    %1710 = vmatpush1.msra.mxu0 0.0
    %1711 = vmatprep.subr.mxu0 0.0
    %1712 = vmatpush1.msra.mxu0 0.0
    %1713 = vmatprep.subr.mxu0 0.0
    %1714 = vmatpush1.msra.mxu0 0.0
    %1715 = vmatprep.subr.mxu0 0.0
    %1716 = vmatpush1.msra.mxu0 0.0
    %1717 = vmatprep.subr.mxu0 0.0
    %1718 = vmatpush1.msra.mxu0 0.0
    %1719 = vmatprep.subr.mxu0 0.0
    %1720 = vmatpush1.msra.mxu0 0.0
    %1721 = vmatprep.subr.mxu0 0.0
    %1722 = vmatpush1.msra.mxu0 0.0
    %1723 = vmatprep.subr.mxu0 0.0
    %1724 = vmatpush1.msra.mxu0 0.0
    %1725 = vmatprep.subr.mxu0 0.0
    %1726 = vmatpush1.msra.mxu0 0.0
    %1727 = vmatprep.subr.mxu0 0.0
    %1728 = vmatpush1.msra.mxu0 0.0
    %1729 = vmatprep.subr.mxu0 0.0
    %1730 = vmatpush1.msra.mxu0 0.0
    %1731 = vmatprep.subr.mxu0 0.0
    %1732 = vmatpush1.msra.mxu0 0.0
    %1733 = vmatprep.subr.mxu0 0.0
    %1734 = vmatpush1.msra.mxu0 %v170
    %1735 = vmatprep.subr.mxu0 0.0
    %1736 = vmatpush1.msra.mxu0 %v169
    %1737 = vmatprep.subr.mxu0 0.0
    %1738 = vmatpush1.msra.mxu0 %v168
    %1739 = vmatprep.subr.mxu0 0.0
    %1740 = vmatpush1.msra.mxu0 %v167
    %1741 = vmatprep.subr.mxu0 0.0
    %1742 = vmatpush2.msra.mxu0 0.0
    %1743 = vmatprep.subr.mxu0 0.0
    %1744 = vmatpush2.msra.mxu0 0.0
    %1745 = vmatprep.subr.mxu0 0.0
    %1746 = vmatpush2.msra.mxu0 0.0
    %1747 = vmatprep.subr.mxu0 0.0
    %1748 = vmatpush2.msra.mxu0 0.0
    %1749 = vmatprep.subr.mxu0 0.0
    %1750 = vmatpush2.msra.mxu0 0.0
    %1751 = vmatprep.subr.mxu0 0.0
    %1752 = vmatpush2.msra.mxu0 0.0
    %1753 = vmatprep.subr.mxu0 0.0
    %1754 = vmatpush2.msra.mxu0 0.0
    %1755 = vmatprep.subr.mxu0 0.0
    %1756 = vmatpush2.msra.mxu0 0.0
    %1757 = vmatprep.subr.mxu0 0.0
    %1758 = vmatpush2.msra.mxu0 0.0
    %1759 = vmatprep.subr.mxu0 0.0
    %1760 = vmatpush2.msra.mxu0 0.0
    %1761 = vmatprep.subr.mxu0 0.0
    %1762 = vmatpush2.msra.mxu0 0.0
    %1763 = vmatprep.subr.mxu0 0.0
    %1764 = vmatpush2.msra.mxu0 0.0
    %1765 = vmatprep.subr.mxu0 0.0
    %1766 = vmatpush2.msra.mxu0 0.0
    %1767 = vmatprep.subr.mxu0 0.0
    %1768 = vmatpush2.msra.mxu0 0.0
    %1769 = vmatprep.subr.mxu0 0.0
    %1770 = vmatpush2.msra.mxu0 0.0
    %1771 = vmatprep.subr.mxu0 0.0
    %1772 = vmatpush2.msra.mxu0 0.0
    %1773 = vmatprep.mubr.f32.mxu0 0.0
    %1774 = vmatmul.mubr.f32.gmra.mxu0 %v1704
    %v1775 = vpop.f32.mrf.mxu0
    %v1776 = vadd.f32 0.0, %v1775
    %v1777 = vpop.f32.mrf.mxu0
    %1778 = vmatprep.mubr.f32.mxu0 0.0
    %1779 = vmatmul.mubr.f32.gmra.mxu0 %v1707
    %v1780 = vpop.f32.mrf.mxu0
    %v1781 = vadd.f32 0.0, %v1780
    %v1782 = vpop.f32.mrf.mxu0
    %1783 = vdwg.mxu0
    %v1784 = vadd.f32 %v148, %v1776
    %v1785 = vadd.f32 %v149, %v1781
    %v1786 = vlaneseq
    %v1787 = vshrl.u32 %v1786, 7
    %v1788 = vsub.s32 4, %v1787
    %v1789 = vrot.slane %v154, %v1788
    %v1790 = vadd.f32 %v1784, %v1789
    %v1791 = vadd.f32 %v1785, %v1789
    %v1792 = vsel %vm211, %v1790, 0.0
    %1793 = vadd.xlane.f32.xlu0 %v1792
    %v1794 = vpop.xlane.xlu0 %1793
    %v1795 = vsel %vm211, %v1791, 0.0
    %1796 = vadd.xlane.f32.xlu0 %v1795
    %v1797 = vpop.xlane.xlu0 %1796
    %v1798 = vmul.f32 %v1794, %v218
    %v1799 = vmul.f32 %v1797, %v218
    %v1800 = vsub.f32 %v1790, %v1798
    %v1801 = vsub.f32 %v1791, %v1799
    %v1802 = vmul.f32 %v1800, %v1800
    %v1803 = vmul.f32 %v1801, %v1801
    %v1804 = vsel %vm211, %v1802, 0.0
    %1805 = vadd.xlane.f32.xlu0 %v1804
    %v1806 = vpop.xlane.xlu0 %1805
    %v1807 = vsel %vm211, %v1803, 0.0
    %1808 = vadd.xlane.f32.xlu0 %v1807
    %v1809 = vpop.xlane.xlu0 %1808
    %v1810 = vmul.f32 %v1806, %v218
    %v1811 = vmul.f32 %v1809, %v218
    %v1812 = vadd.f32 %v1810, 1e-05
    %v1813 = vadd.f32 %v1811, 1e-05
    %v1814 = vrsqrt.pop %v1812
    %v1815 = vrsqrt.pop %v1813
    %v1816 = vmul.f32 %v1800, %v1814
    %v1817 = vmul.f32 %v1801, %v1815
    %v1818 = vlaneseq
    %v1819 = vshrl.u32 %v1818, 7
    %v1820 = vsub.s32 2, %v1819
    %v1821 = vrot.slane %v154, %v1820
    %v1822 = vmul.f32 %v1816, %v1821
    %v1823 = vmul.f32 %v1817, %v1821
    %v1824 = vlaneseq
    %v1825 = vshrl.u32 %v1824, 7
    %v1826 = vsub.s32 3, %v1825
    %v1827 = vrot.slane %v154, %v1826
    %v1828 = vadd.f32 %v1822, %v1827
    %v1829 = vadd.f32 %v1823, %v1827
    %v1830 = vlaneseq
    %v1831 = vshrl.u32 %v1830, 7
    %v1832 = vsub.s32 6, %v1831
    %v1833 = vrot.slane %v154, %v1832
    %v1835 = vsel %vm211, %v1828, 0
    %v1838 = vsel %vm211, %v1829, 0
    %1840 = vmatprep.subr.mxu0 0.0
    %1841 = vmatpush1.msra.mxu0 0.0
    %1842 = vmatprep.subr.mxu0 0.0
    %1843 = vmatpush1.msra.mxu0 0.0
    %1844 = vmatprep.subr.mxu0 0.0
    %1845 = vmatpush1.msra.mxu0 0.0
    %1846 = vmatprep.subr.mxu0 0.0
    %1847 = vmatpush1.msra.mxu0 0.0
    %1848 = vmatprep.subr.mxu0 0.0
    %1849 = vmatpush1.msra.mxu0 0.0
    %1850 = vmatprep.subr.mxu0 0.0
    %1851 = vmatpush1.msra.mxu0 0.0
    %1852 = vmatprep.subr.mxu0 0.0
    %1853 = vmatpush1.msra.mxu0 0.0
    %1854 = vmatprep.subr.mxu0 0.0
    %1855 = vmatpush1.msra.mxu0 0.0
    %1856 = vmatprep.subr.mxu0 0.0
    %1857 = vmatpush1.msra.mxu0 0.0
    %1858 = vmatprep.subr.mxu0 0.0
    %1859 = vmatpush1.msra.mxu0 0.0
    %1860 = vmatprep.subr.mxu0 0.0
    %1861 = vmatpush1.msra.mxu0 0.0
    %1862 = vmatprep.subr.mxu0 0.0
    %1863 = vmatpush1.msra.mxu0 0.0
    %1864 = vmatprep.subr.mxu0 0.0
    %1865 = vmatpush1.msra.mxu0 %v178
    %1866 = vmatprep.subr.mxu0 0.0
    %1867 = vmatpush1.msra.mxu0 %v177
    %1868 = vmatprep.subr.mxu0 0.0
    %1869 = vmatpush1.msra.mxu0 %v176
    %1870 = vmatprep.subr.mxu0 0.0
    %1871 = vmatpush1.msra.mxu0 %v175
    %1872 = vmatprep.subr.mxu0 0.0
    %1873 = vmatpush2.msra.mxu0 0.0
    %1874 = vmatprep.subr.mxu0 0.0
    %1875 = vmatpush2.msra.mxu0 0.0
    %1876 = vmatprep.subr.mxu0 0.0
    %1877 = vmatpush2.msra.mxu0 0.0
    %1878 = vmatprep.subr.mxu0 0.0
    %1879 = vmatpush2.msra.mxu0 0.0
    %1880 = vmatprep.subr.mxu0 0.0
    %1881 = vmatpush2.msra.mxu0 0.0
    %1882 = vmatprep.subr.mxu0 0.0
    %1883 = vmatpush2.msra.mxu0 0.0
    %1884 = vmatprep.subr.mxu0 0.0
    %1885 = vmatpush2.msra.mxu0 0.0
    %1886 = vmatprep.subr.mxu0 0.0
    %1887 = vmatpush2.msra.mxu0 0.0
    %1888 = vmatprep.subr.mxu0 0.0
    %1889 = vmatpush2.msra.mxu0 0.0
    %1890 = vmatprep.subr.mxu0 0.0
    %1891 = vmatpush2.msra.mxu0 0.0
    %1892 = vmatprep.subr.mxu0 0.0
    %1893 = vmatpush2.msra.mxu0 0.0
    %1894 = vmatprep.subr.mxu0 0.0
    %1895 = vmatpush2.msra.mxu0 0.0
    %1896 = vmatprep.subr.mxu0 0.0
    %1897 = vmatpush2.msra.mxu0 0.0
    %1898 = vmatprep.subr.mxu0 0.0
    %1899 = vmatpush2.msra.mxu0 0.0
    %1900 = vmatprep.subr.mxu0 0.0
    %1901 = vmatpush2.msra.mxu0 0.0
    %1902 = vmatprep.subr.mxu0 0.0
    %1903 = vmatpush2.msra.mxu0 0.0
    %1904 = vmatprep.mubr.f32.mxu0 0.0
    %1905 = vmatmul.mubr.f32.gmra.mxu0 %v1835
    %v1906 = vpop.f32.mrf.mxu0
    %v1907 = vadd.f32 %v1833, %v1906
    %v1908 = vpop.f32.mrf.mxu0
    %1909 = vmatprep.mubr.f32.mxu0 0.0
    %1910 = vmatmul.mubr.f32.gmra.mxu0 %v1838
    %v1911 = vpop.f32.mrf.mxu0
    %v1912 = vadd.f32 %v1833, %v1911
    %v1913 = vpop.f32.mrf.mxu0
    %1914 = vdwg.mxu0
    %1915 = vmax.xlane.f32.xlu0 %v1907
    %v1916 = vpop.xlane.xlu0 %1915
    %1917 = vmax.xlane.f32.xlu0 %v1912
    %v1918 = vpop.xlane.xlu0 %1917
    %vm1919 = vcmp.ge.f32.partialorder %v1907, %v1916
    %vm1920 = vcmp.ge.f32.partialorder %v1912, %v1918
    %v1921 = vsel %vm1919, -1e+30, %v1907
    %v1922 = vsel %vm1920, -1e+30, %v1912
    %1923 = vmax.xlane.f32.xlu0 %v1921
    %v1924 = vpop.xlane.xlu0 %1923
    %1925 = vmax.xlane.f32.xlu0 %v1922
    %v1926 = vpop.xlane.xlu0 %1925
    %vm1927 = vcmp.ge.f32.partialorder %v1921, %v1924
    %vm1928 = vcmp.ge.f32.partialorder %v1922, %v1926
    %v1929 = vsel %vm1927, -1e+30, %v1921
    %v1930 = vsel %vm1928, -1e+30, %v1922
    %1931 = vmax.xlane.f32.xlu0 %v1929
    %v1932 = vpop.xlane.xlu0 %1931
    %1933 = vmax.xlane.f32.xlu0 %v1930
    %v1934 = vpop.xlane.xlu0 %1933
    %vm1935 = vcmp.ge.f32.partialorder %v1929, %v1932
    %vm1936 = vcmp.ge.f32.partialorder %v1930, %v1934
    %v1937 = vsel %vm1935, -1e+30, %v1929
    %v1938 = vsel %vm1936, -1e+30, %v1930
    %1939 = vmax.xlane.f32.xlu0 %v1937
    %v1940 = vpop.xlane.xlu0 %1939
    %1941 = vmax.xlane.f32.xlu0 %v1938
    %v1942 = vpop.xlane.xlu0 %1941
    %vm1943 = vcmp.ge.f32.partialorder %v1937, %v1940
    %vm1944 = vcmp.ge.f32.partialorder %v1938, %v1942
    %v1945 = vsel %vm1943, -1e+30, %v1937
    %v1946 = vsel %vm1944, -1e+30, %v1938
    %1947 = vmax.xlane.f32.xlu0 %v1945
    %v1948 = vpop.xlane.xlu0 %1947
    %1949 = vmax.xlane.f32.xlu0 %v1946
    %v1950 = vpop.xlane.xlu0 %1949
    %vm1951 = vcmp.ge.f32.partialorder %v1945, %v1948
    %vm1952 = vcmp.ge.f32.partialorder %v1946, %v1950
    %v1953 = vsel %vm1951, -1e+30, %v1945
    %v1954 = vsel %vm1952, -1e+30, %v1946
    %1955 = vmax.xlane.f32.xlu0 %v1953
    %v1956 = vpop.xlane.xlu0 %1955
    %1957 = vmax.xlane.f32.xlu0 %v1954
    %v1958 = vpop.xlane.xlu0 %1957
    %vm1959 = vcmp.ge.f32.partialorder %v1953, %v1956
    %vm1960 = vcmp.ge.f32.partialorder %v1954, %v1958
    %v1961 = vsel %vm1959, -1e+30, %v1953
    %v1962 = vsel %vm1960, -1e+30, %v1954
    %1963 = vmax.xlane.f32.xlu0 %v1961
    %v1964 = vpop.xlane.xlu0 %1963
    %1965 = vmax.xlane.f32.xlu0 %v1962
    %v1966 = vpop.xlane.xlu0 %1965
    %vm1967 = vcmp.ge.f32.partialorder %v1961, %v1964
    %vm1968 = vcmp.ge.f32.partialorder %v1962, %v1966
    %v1969 = vsel %vm1967, -1e+30, %v1961
    %v1970 = vsel %vm1968, -1e+30, %v1962
    %1971 = vmax.xlane.f32.xlu0 %v1969
    %v1972 = vpop.xlane.xlu0 %1971
    %1973 = vmax.xlane.f32.xlu0 %v1970
    %v1974 = vpop.xlane.xlu0 %1973
    %vm1975 = vcmp.ge.f32.partialorder %v1969, %v1972
    %vm1976 = vcmp.ge.f32.partialorder %v1970, %v1974
    %v1977 = vsel %vm1975, -1e+30, %v1969
    %v1978 = vsel %vm1976, -1e+30, %v1970
    %1979 = vmax.xlane.f32.xlu0 %v1977
    %v1980 = vpop.xlane.xlu0 %1979
    %1981 = vmax.xlane.f32.xlu0 %v1978
    %v1982 = vpop.xlane.xlu0 %1981
    %vm1983 = vcmp.ge.f32.partialorder %v1977, %v1980
    %vm1984 = vcmp.ge.f32.partialorder %v1978, %v1982
    %v1985 = vsel %vm1983, -1e+30, %v1977
    %v1986 = vsel %vm1984, -1e+30, %v1978
    %1987 = vmax.xlane.f32.xlu0 %v1985
    %v1988 = vpop.xlane.xlu0 %1987
    %1989 = vmax.xlane.f32.xlu0 %v1986
    %v1990 = vpop.xlane.xlu0 %1989
    %vm1991 = vcmp.ge.f32.partialorder %v1985, %v1988
    %vm1992 = vcmp.ge.f32.partialorder %v1986, %v1990
    %v1993 = vsel %vm1991, -1e+30, %v1985
    %v1994 = vsel %vm1992, -1e+30, %v1986
    %1995 = vmax.xlane.f32.xlu0 %v1993
    %v1996 = vpop.xlane.xlu0 %1995
    %1997 = vmax.xlane.f32.xlu0 %v1994
    %v1998 = vpop.xlane.xlu0 %1997
    %vm1999 = vcmp.ge.f32.partialorder %v1993, %v1996
    %vm2000 = vcmp.ge.f32.partialorder %v1994, %v1998
    %v2001 = vsel %vm1999, -1e+30, %v1993
    %v2002 = vsel %vm2000, -1e+30, %v1994
    %2003 = vmax.xlane.f32.xlu0 %v2001
    %v2004 = vpop.xlane.xlu0 %2003
    %2005 = vmax.xlane.f32.xlu0 %v2002
    %v2006 = vpop.xlane.xlu0 %2005
    %vm2007 = vcmp.ge.f32.partialorder %v2001, %v2004
    %vm2008 = vcmp.ge.f32.partialorder %v2002, %v2006
    %v2009 = vsel %vm2007, -1e+30, %v2001
    %v2010 = vsel %vm2008, -1e+30, %v2002
    %2011 = vmax.xlane.f32.xlu0 %v2009
    %v2012 = vpop.xlane.xlu0 %2011
    %2013 = vmax.xlane.f32.xlu0 %v2010
    %v2014 = vpop.xlane.xlu0 %2013
    %vm2015 = vcmp.ge.f32.partialorder %v2009, %v2012
    %vm2016 = vcmp.ge.f32.partialorder %v2010, %v2014
    %v2017 = vsel %vm2015, -1e+30, %v2009
    %v2018 = vsel %vm2016, -1e+30, %v2010
    %2019 = vmax.xlane.f32.xlu0 %v2017
    %v2020 = vpop.xlane.xlu0 %2019
    %2021 = vmax.xlane.f32.xlu0 %v2018
    %v2022 = vpop.xlane.xlu0 %2021
    %vm2023 = vcmp.ge.f32.partialorder %v2017, %v2020
    %vm2024 = vcmp.ge.f32.partialorder %v2018, %v2022
    %v2025 = vsel %vm2023, -1e+30, %v2017
    %v2026 = vsel %vm2024, -1e+30, %v2018
    %2027 = vmax.xlane.f32.xlu0 %v2025
    %v2028 = vpop.xlane.xlu0 %2027
    %2029 = vmax.xlane.f32.xlu0 %v2026
    %v2030 = vpop.xlane.xlu0 %2029
    %vm2031 = vcmp.ge.f32.partialorder %v2025, %v2028
    %vm2032 = vcmp.ge.f32.partialorder %v2026, %v2030
    %v2033 = vsel %vm2031, -1e+30, %v2025
    %v2034 = vsel %vm2032, -1e+30, %v2026
    %2035 = vmax.xlane.f32.xlu0 %v2033
    %v2036 = vpop.xlane.xlu0 %2035
    %2037 = vmax.xlane.f32.xlu0 %v2034
    %v2038 = vpop.xlane.xlu0 %2037
    %vm2039 = vcmp.ge.f32.partialorder %v2033, %v2036
    %vm2040 = vcmp.ge.f32.partialorder %v2034, %v2038
    %v2041 = vsel %vm2039, -1e+30, %v2033
    %v2042 = vsel %vm2040, -1e+30, %v2034
    %2043 = vmax.xlane.f32.xlu0 %v2041
    %v2044 = vpop.xlane.xlu0 %2043
    %2045 = vmax.xlane.f32.xlu0 %v2042
    %v2046 = vpop.xlane.xlu0 %2045
    %vm2047 = vcmp.ge.f32.partialorder %v2041, %v2044
    %vm2048 = vcmp.ge.f32.partialorder %v2042, %v2046
    %v2049 = vsel %vm2047, -1e+30, %v2041
    %v2050 = vsel %vm2048, -1e+30, %v2042
    %2051 = vmax.xlane.f32.xlu0 %v2049
    %v2052 = vpop.xlane.xlu0 %2051
    %2053 = vmax.xlane.f32.xlu0 %v2050
    %v2054 = vpop.xlane.xlu0 %2053
    %vm2055 = vcmp.ge.f32.partialorder %v2049, %v2052
    %vm2056 = vcmp.ge.f32.partialorder %v2050, %v2054
    %v2057 = vsel %vm2055, -1e+30, %v2049
    %v2058 = vsel %vm2056, -1e+30, %v2050
    %2059 = vmax.xlane.f32.xlu0 %v2057
    %v2060 = vpop.xlane.xlu0 %2059
    %2061 = vmax.xlane.f32.xlu0 %v2058
    %v2062 = vpop.xlane.xlu0 %2061
    %vm2063 = vcmp.ge.f32.partialorder %v2057, %v2060
    %vm2064 = vcmp.ge.f32.partialorder %v2058, %v2062
    %v2065 = vsel %vm2063, -1e+30, %v2057
    %v2066 = vsel %vm2064, -1e+30, %v2058
    %2067 = vmax.xlane.f32.xlu0 %v2065
    %v2068 = vpop.xlane.xlu0 %2067
    %2069 = vmax.xlane.f32.xlu0 %v2066
    %v2070 = vpop.xlane.xlu0 %2069
    %vm2071 = vcmp.ge.f32.partialorder %v2065, %v2068
    %vm2072 = vcmp.ge.f32.partialorder %v2066, %v2070
    %v2073 = vsel %vm2071, -1e+30, %v2065
    %v2074 = vsel %vm2072, -1e+30, %v2066
    %2075 = vmax.xlane.f32.xlu0 %v2073
    %v2076 = vpop.xlane.xlu0 %2075
    %2077 = vmax.xlane.f32.xlu0 %v2074
    %v2078 = vpop.xlane.xlu0 %2077
    %vm2079 = vcmp.ge.f32.partialorder %v2073, %v2076
    %vm2080 = vcmp.ge.f32.partialorder %v2074, %v2078
    %v2081 = vsel %vm2079, -1e+30, %v2073
    %v2082 = vsel %vm2080, -1e+30, %v2074
    %2083 = vmax.xlane.f32.xlu0 %v2081
    %v2084 = vpop.xlane.xlu0 %2083
    %2085 = vmax.xlane.f32.xlu0 %v2082
    %v2086 = vpop.xlane.xlu0 %2085
    %vm2087 = vcmp.ge.f32.partialorder %v2081, %v2084
    %vm2088 = vcmp.ge.f32.partialorder %v2082, %v2086
    %v2089 = vsel %vm2087, -1e+30, %v2081
    %v2090 = vsel %vm2088, -1e+30, %v2082
    %2091 = vmax.xlane.f32.xlu0 %v2089
    %v2092 = vpop.xlane.xlu0 %2091
    %2093 = vmax.xlane.f32.xlu0 %v2090
    %v2094 = vpop.xlane.xlu0 %2093
    %vm2095 = vcmp.ge.f32.partialorder %v2089, %v2092
    %vm2096 = vcmp.ge.f32.partialorder %v2090, %v2094
    %v2097 = vsel %vm2095, -1e+30, %v2089
    %v2098 = vsel %vm2096, -1e+30, %v2090
    %2099 = vmax.xlane.f32.xlu0 %v2097
    %v2100 = vpop.xlane.xlu0 %2099
    %2101 = vmax.xlane.f32.xlu0 %v2098
    %v2102 = vpop.xlane.xlu0 %2101
    %vm2103 = vcmp.ge.f32.partialorder %v2097, %v2100
    %vm2104 = vcmp.ge.f32.partialorder %v2098, %v2102
    %v2105 = vsel %vm2103, -1e+30, %v2097
    %v2106 = vsel %vm2104, -1e+30, %v2098
    %2107 = vmax.xlane.f32.xlu0 %v2105
    %v2108 = vpop.xlane.xlu0 %2107
    %2109 = vmax.xlane.f32.xlu0 %v2106
    %v2110 = vpop.xlane.xlu0 %2109
    %vm2111 = vcmp.ge.f32.partialorder %v2105, %v2108
    %vm2112 = vcmp.ge.f32.partialorder %v2106, %v2110
    %v2113 = vsel %vm2111, -1e+30, %v2105
    %v2114 = vsel %vm2112, -1e+30, %v2106
    %2115 = vmax.xlane.f32.xlu0 %v2113
    %v2116 = vpop.xlane.xlu0 %2115
    %2117 = vmax.xlane.f32.xlu0 %v2114
    %v2118 = vpop.xlane.xlu0 %2117
    %vm2119 = vcmp.ge.f32.partialorder %v1907, %v2116
    %vm2120 = vcmp.ge.f32.partialorder %v1912, %v2118
    %v2121 = vsel %vm2119, %v1907, 0.0
    %v2122 = vsel %vm2120, %v1912, 0.0
    %v2123 = vmul.f32 %v2121, 0.5
    %v2124 = vmul.f32 %v2122, 0.5
    %v2125 = vrcp.pop 1.4142135
    %v2126 = vmul.f32 %v2121, %v2125
    %v2127 = vmul.f32 %v2122, %v2125
    %v2128 = verf.f32.pop %v2126
    %v2129 = verf.f32.pop %v2127
    %v2130 = vadd.f32 %v2128, 1.0
    %v2131 = vadd.f32 %v2129, 1.0
    %v2132 = vmul.f32 %v2123, %v2130
    %v2133 = vmul.f32 %v2124, %v2131
    %v2134 = vlaneseq
    %v2135 = vshrl.u32 %v2134, 7
    %v2136 = vsub.s32 5, %v2135
    %v2137 = vrot.slane %v154, %v2136
    %2138 = vmatprep.subr.mxu0 0.0
    %2139 = vmatpush1.msra.mxu0 %v210
    %2140 = vmatprep.subr.mxu0 0.0
    %2141 = vmatpush1.msra.mxu0 %v209
    %2142 = vmatprep.subr.mxu0 0.0
    %2143 = vmatpush1.msra.mxu0 %v208
    %2144 = vmatprep.subr.mxu0 0.0
    %2145 = vmatpush1.msra.mxu0 %v207
    %2146 = vmatprep.subr.mxu0 0.0
    %2147 = vmatpush1.msra.mxu0 %v206
    %2148 = vmatprep.subr.mxu0 0.0
    %2149 = vmatpush1.msra.mxu0 %v205
    %2150 = vmatprep.subr.mxu0 0.0
    %2151 = vmatpush1.msra.mxu0 %v204
    %2152 = vmatprep.subr.mxu0 0.0
    %2153 = vmatpush1.msra.mxu0 %v203
    %2154 = vmatprep.subr.mxu0 0.0
    %2155 = vmatpush1.msra.mxu0 %v202
    %2156 = vmatprep.subr.mxu0 0.0
    %2157 = vmatpush1.msra.mxu0 %v201
    %2158 = vmatprep.subr.mxu0 0.0
    %2159 = vmatpush1.msra.mxu0 %v200
    %2160 = vmatprep.subr.mxu0 0.0
    %2161 = vmatpush1.msra.mxu0 %v199
    %2162 = vmatprep.subr.mxu0 0.0
    %2163 = vmatpush1.msra.mxu0 %v198
    %2164 = vmatprep.subr.mxu0 0.0
    %2165 = vmatpush1.msra.mxu0 %v197
    %2166 = vmatprep.subr.mxu0 0.0
    %2167 = vmatpush1.msra.mxu0 %v196
    %2168 = vmatprep.subr.mxu0 0.0
    %2169 = vmatpush1.msra.mxu0 %v195
    %2170 = vmatprep.subr.mxu0 0.0
    %2171 = vmatpush2.msra.mxu0 0.0
    %2172 = vmatprep.subr.mxu0 0.0
    %2173 = vmatpush2.msra.mxu0 0.0
    %2174 = vmatprep.subr.mxu0 0.0
    %2175 = vmatpush2.msra.mxu0 0.0
    %2176 = vmatprep.subr.mxu0 0.0
    %2177 = vmatpush2.msra.mxu0 0.0
    %2178 = vmatprep.subr.mxu0 0.0
    %2179 = vmatpush2.msra.mxu0 0.0
    %2180 = vmatprep.subr.mxu0 0.0
    %2181 = vmatpush2.msra.mxu0 0.0
    %2182 = vmatprep.subr.mxu0 0.0
    %2183 = vmatpush2.msra.mxu0 0.0
    %2184 = vmatprep.subr.mxu0 0.0
    %2185 = vmatpush2.msra.mxu0 0.0
    %2186 = vmatprep.subr.mxu0 0.0
    %2187 = vmatpush2.msra.mxu0 0.0
    %2188 = vmatprep.subr.mxu0 0.0
    %2189 = vmatpush2.msra.mxu0 0.0
    %2190 = vmatprep.subr.mxu0 0.0
    %2191 = vmatpush2.msra.mxu0 0.0
    %2192 = vmatprep.subr.mxu0 0.0
    %2193 = vmatpush2.msra.mxu0 0.0
    %2194 = vmatprep.subr.mxu0 0.0
    %2195 = vmatpush2.msra.mxu0 0.0
    %2196 = vmatprep.subr.mxu0 0.0
    %2197 = vmatpush2.msra.mxu0 0.0
    %2198 = vmatprep.subr.mxu0 0.0
    %2199 = vmatpush2.msra.mxu0 0.0
    %2200 = vmatprep.subr.mxu0 0.0
    %2201 = vmatpush2.msra.mxu0 0.0
    %2202 = vmatprep.mubr.f32.mxu0 0.0
    %2203 = vmatmul.mubr.f32.gmra.mxu0 %v2132
    %v2204 = vpop.f32.mrf.mxu0
    %v2205 = vadd.f32 %v2137, %v2204
    %v2206 = vpop.f32.mrf.mxu0
    %2207 = vmatprep.mubr.f32.mxu0 0.0
    %2208 = vmatmul.mubr.f32.gmra.mxu0 %v2133
    %v2209 = vpop.f32.mrf.mxu0
    %v2210 = vadd.f32 %v2137, %v2209
    %v2211 = vpop.f32.mrf.mxu0
    %2212 = vdwg.mxu0
    %v2213 = vsel %vm211, %v2205, -inf
    %2214 = vmax.xlane.f32.xlu0 %v2213
    %v2215 = vpop.xlane.xlu0 %2214
    %v2216 = vsel %vm211, %v2210, -inf
    %2217 = vmax.xlane.f32.xlu0 %v2216
    %v2218 = vpop.xlane.xlu0 %2217
    %vm2219 = vcmp.ge.f32.partialorder %v2205, %v2215
    %vm2220 = vcmp.ge.f32.partialorder %v2210, %v2218
    %v2221 = vsel %vm2219, -1e+30, %v2205
    %v2222 = vsel %vm2220, -1e+30, %v2210
    %v2223 = vsel %vm211, %v2221, -inf
    %2224 = vmax.xlane.f32.xlu0 %v2223
    %v2225 = vpop.xlane.xlu0 %2224
    %v2226 = vsel %vm211, %v2222, -inf
    %2227 = vmax.xlane.f32.xlu0 %v2226
    %v2228 = vpop.xlane.xlu0 %2227
    %vm2229 = vcmp.ge.f32.partialorder %v2221, %v2225
    %vm2230 = vcmp.ge.f32.partialorder %v2222, %v2228
    %v2231 = vsel %vm2229, -1e+30, %v2221
    %v2232 = vsel %vm2230, -1e+30, %v2222
    %v2233 = vsel %vm211, %v2231, -inf
    %2234 = vmax.xlane.f32.xlu0 %v2233
    %v2235 = vpop.xlane.xlu0 %2234
    %v2236 = vsel %vm211, %v2232, -inf
    %2237 = vmax.xlane.f32.xlu0 %v2236
    %v2238 = vpop.xlane.xlu0 %2237
    %vm2239 = vcmp.ge.f32.partialorder %v2231, %v2235
    %vm2240 = vcmp.ge.f32.partialorder %v2232, %v2238
    %v2241 = vsel %vm2239, -1e+30, %v2231
    %v2242 = vsel %vm2240, -1e+30, %v2232
    %v2243 = vsel %vm211, %v2241, -inf
    %2244 = vmax.xlane.f32.xlu0 %v2243
    %v2245 = vpop.xlane.xlu0 %2244
    %v2246 = vsel %vm211, %v2242, -inf
    %2247 = vmax.xlane.f32.xlu0 %v2246
    %v2248 = vpop.xlane.xlu0 %2247
    %vm2249 = vcmp.ge.f32.partialorder %v2241, %v2245
    %vm2250 = vcmp.ge.f32.partialorder %v2242, %v2248
    %v2251 = vsel %vm2249, -1e+30, %v2241
    %v2252 = vsel %vm2250, -1e+30, %v2242
    %v2253 = vsel %vm211, %v2251, -inf
    %2254 = vmax.xlane.f32.xlu0 %v2253
    %v2255 = vpop.xlane.xlu0 %2254
    %v2256 = vsel %vm211, %v2252, -inf
    %2257 = vmax.xlane.f32.xlu0 %v2256
    %v2258 = vpop.xlane.xlu0 %2257
    %vm2259 = vcmp.ge.f32.partialorder %v2251, %v2255
    %vm2260 = vcmp.ge.f32.partialorder %v2252, %v2258
    %v2261 = vsel %vm2259, -1e+30, %v2251
    %v2262 = vsel %vm2260, -1e+30, %v2252
    %v2263 = vsel %vm211, %v2261, -inf
    %2264 = vmax.xlane.f32.xlu0 %v2263
    %v2265 = vpop.xlane.xlu0 %2264
    %v2266 = vsel %vm211, %v2262, -inf
    %2267 = vmax.xlane.f32.xlu0 %v2266
    %v2268 = vpop.xlane.xlu0 %2267
    %vm2269 = vcmp.ge.f32.partialorder %v2205, %v2265
    %vm2270 = vcmp.ge.f32.partialorder %v2210, %v2268
    %v2271 = vsel %vm2269, %v2205, 0.0
    %v2272 = vsel %vm2270, %v2210, 0.0
    %v2273 = vadd.f32 %v1790, %v2271
    %v2274 = vadd.f32 %v1791, %v2272
    %s2275 = scalar_lea.vmem %s3, 8
    %v2276 = vld [vmem:[%s2275] sm:$0xff]
    %s2277 = scalar_lea.vmem %s4, 16
    %v2278 = vld [vmem:[%s2277] sm:$0xf]
    %v2279 = vld [vmem:[%s2277 + $0x4] sm:$0xf]
    %v2280 = vld [vmem:[%s2277 + $0x8] sm:$0xf]
    %v2281 = vld [vmem:[%s2277 + $0xc] sm:$0xf]
    %v2282 = vunpack.c.l.bf16 %v2278
    %v2283 = vunpack.c.l.bf16 %v2279
    %v2284 = vunpack.c.l.bf16 %v2280
    %v2285 = vunpack.c.l.bf16 %v2281
    %s2286 = scalar_lea.vmem %s5, 16
    %v2287 = vld [vmem:[%s2286] sm:$0xf]
    %v2288 = vld [vmem:[%s2286 + $0x4] sm:$0xf]
    %v2289 = vld [vmem:[%s2286 + $0x8] sm:$0xf]
    %v2290 = vld [vmem:[%s2286 + $0xc] sm:$0xf]
    %v2291 = vunpack.c.l.bf16 %v2287
    %v2292 = vunpack.c.l.bf16 %v2288
    %v2293 = vunpack.c.l.bf16 %v2289
    %v2294 = vunpack.c.l.bf16 %v2290
    %s2295 = scalar_lea.vmem %s6, 16
    %v2296 = vld [vmem:[%s2295] sm:$0xf]
    %v2297 = vld [vmem:[%s2295 + $0x4] sm:$0xf]
    %v2298 = vld [vmem:[%s2295 + $0x8] sm:$0xf]
    %v2299 = vld [vmem:[%s2295 + $0xc] sm:$0xf]
    %v2300 = vunpack.c.l.bf16 %v2296
    %v2301 = vunpack.c.l.bf16 %v2297
    %v2302 = vunpack.c.l.bf16 %v2298
    %v2303 = vunpack.c.l.bf16 %v2299
    %s2304 = scalar_lea.vmem %s7, 64
    %v2305 = vld [vmem:[%s2304] sm:$0xf]
    %v2306 = vld [vmem:[%s2304 + $0x4] sm:$0xf]
    %v2307 = vld [vmem:[%s2304 + $0x8] sm:$0xf]
    %v2308 = vld [vmem:[%s2304 + $0xc] sm:$0xf]
    %v2309 = vld [vmem:[%s2304 + $0x10] sm:$0xf]
    %v2310 = vld [vmem:[%s2304 + $0x14] sm:$0xf]
    %v2311 = vld [vmem:[%s2304 + $0x18] sm:$0xf]
    %v2312 = vld [vmem:[%s2304 + $0x1c] sm:$0xf]
    %v2313 = vld [vmem:[%s2304 + $0x20] sm:$0xf]
    %v2314 = vld [vmem:[%s2304 + $0x24] sm:$0xf]
    %v2315 = vld [vmem:[%s2304 + $0x28] sm:$0xf]
    %v2316 = vld [vmem:[%s2304 + $0x2c] sm:$0xf]
    %v2317 = vld [vmem:[%s2304 + $0x30] sm:$0xf]
    %v2318 = vld [vmem:[%s2304 + $0x34] sm:$0xf]
    %v2319 = vld [vmem:[%s2304 + $0x38] sm:$0xf]
    %v2320 = vld [vmem:[%s2304 + $0x3c] sm:$0xf]
    %v2321 = vunpack.c.l.bf16 %v2305
    %v2322 = vunpack.c.l.bf16 %v2306
    %v2323 = vunpack.c.l.bf16 %v2307
    %v2324 = vunpack.c.l.bf16 %v2308
    %v2325 = vunpack.c.l.bf16 %v2309
    %v2326 = vunpack.c.l.bf16 %v2310
    %v2327 = vunpack.c.l.bf16 %v2311
    %v2328 = vunpack.c.l.bf16 %v2312
    %v2329 = vunpack.c.l.bf16 %v2313
    %v2330 = vunpack.c.l.bf16 %v2314
    %v2331 = vunpack.c.l.bf16 %v2315
    %v2332 = vunpack.c.l.bf16 %v2316
    %v2333 = vunpack.c.l.bf16 %v2317
    %v2334 = vunpack.c.l.bf16 %v2318
    %v2335 = vunpack.c.l.bf16 %v2319
    %v2336 = vunpack.c.l.bf16 %v2320
    %v2337 = vsel %vm211, %v2273, 0.0
    %2338 = vadd.xlane.f32.xlu0 %v2337
    %v2339 = vpop.xlane.xlu0 %2338
    %v2340 = vsel %vm211, %v2274, 0.0
    %2341 = vadd.xlane.f32.xlu0 %v2340
    %v2342 = vpop.xlane.xlu0 %2341
    %v2343 = vmul.f32 %v2339, %v218
    %v2344 = vmul.f32 %v2342, %v218
    %v2345 = vsub.f32 %v2273, %v2343
    %v2346 = vsub.f32 %v2274, %v2344
    %v2347 = vmul.f32 %v2345, %v2345
    %v2348 = vmul.f32 %v2346, %v2346
    %v2349 = vsel %vm211, %v2347, 0.0
    %2350 = vadd.xlane.f32.xlu0 %v2349
    %v2351 = vpop.xlane.xlu0 %2350
    %v2352 = vsel %vm211, %v2348, 0.0
    %2353 = vadd.xlane.f32.xlu0 %v2352
    %v2354 = vpop.xlane.xlu0 %2353
    %v2355 = vmul.f32 %v2351, %v218
    %v2356 = vmul.f32 %v2354, %v218
    %v2357 = vadd.f32 %v2355, 1e-05
    %v2358 = vadd.f32 %v2356, 1e-05
    %v2359 = vrsqrt.pop %v2357
    %v2360 = vrsqrt.pop %v2358
    %v2361 = vmul.f32 %v2345, %v2359
    %v2362 = vmul.f32 %v2346, %v2360
    %v2363 = vlaneseq
    %v2364 = vshrl.u32 %v2363, 7
    %v2365 = vsub.s32 0, %v2364
    %v2366 = vrot.slane %v2276, %v2365
    %v2367 = vmul.f32 %v2361, %v2366
    %v2368 = vmul.f32 %v2362, %v2366
    %v2369 = vlaneseq
    %v2370 = vshrl.u32 %v2369, 7
    %v2371 = vsub.s32 1, %v2370
    %v2372 = vrot.slane %v2276, %v2371
    %v2373 = vadd.f32 %v2367, %v2372
    %v2374 = vadd.f32 %v2368, %v2372
    %v2375 = vlaneseq
    %v2376 = vshrl.u32 %v2375, 7
    %v2377 = vsub.s32 7, %v2376
    %v2378 = vrot.slane %v2276, %v2377
    %v2380 = vsel %vm211, %v2373, 0
    %v2383 = vsel %vm211, %v2374, 0
    %2385 = vmatprep.subr.mxu0 0.0
    %2386 = vmatpush1.msra.mxu0 0.0
    %2387 = vmatprep.subr.mxu0 0.0
    %2388 = vmatpush1.msra.mxu0 0.0
    %2389 = vmatprep.subr.mxu0 0.0
    %2390 = vmatpush1.msra.mxu0 0.0
    %2391 = vmatprep.subr.mxu0 0.0
    %2392 = vmatpush1.msra.mxu0 0.0
    %2393 = vmatprep.subr.mxu0 0.0
    %2394 = vmatpush1.msra.mxu0 0.0
    %2395 = vmatprep.subr.mxu0 0.0
    %2396 = vmatpush1.msra.mxu0 0.0
    %2397 = vmatprep.subr.mxu0 0.0
    %2398 = vmatpush1.msra.mxu0 0.0
    %2399 = vmatprep.subr.mxu0 0.0
    %2400 = vmatpush1.msra.mxu0 0.0
    %2401 = vmatprep.subr.mxu0 0.0
    %2402 = vmatpush1.msra.mxu0 0.0
    %2403 = vmatprep.subr.mxu0 0.0
    %2404 = vmatpush1.msra.mxu0 0.0
    %2405 = vmatprep.subr.mxu0 0.0
    %2406 = vmatpush1.msra.mxu0 0.0
    %2407 = vmatprep.subr.mxu0 0.0
    %2408 = vmatpush1.msra.mxu0 0.0
    %2409 = vmatprep.subr.mxu0 0.0
    %2410 = vmatpush1.msra.mxu0 %v2285
    %2411 = vmatprep.subr.mxu0 0.0
    %2412 = vmatpush1.msra.mxu0 %v2284
    %2413 = vmatprep.subr.mxu0 0.0
    %2414 = vmatpush1.msra.mxu0 %v2283
    %2415 = vmatprep.subr.mxu0 0.0
    %2416 = vmatpush1.msra.mxu0 %v2282
    %2417 = vmatprep.subr.mxu0 0.0
    %2418 = vmatpush2.msra.mxu0 0.0
    %2419 = vmatprep.subr.mxu0 0.0
    %2420 = vmatpush2.msra.mxu0 0.0
    %2421 = vmatprep.subr.mxu0 0.0
    %2422 = vmatpush2.msra.mxu0 0.0
    %2423 = vmatprep.subr.mxu0 0.0
    %2424 = vmatpush2.msra.mxu0 0.0
    %2425 = vmatprep.subr.mxu0 0.0
    %2426 = vmatpush2.msra.mxu0 0.0
    %2427 = vmatprep.subr.mxu0 0.0
    %2428 = vmatpush2.msra.mxu0 0.0
    %2429 = vmatprep.subr.mxu0 0.0
    %2430 = vmatpush2.msra.mxu0 0.0
    %2431 = vmatprep.subr.mxu0 0.0
    %2432 = vmatpush2.msra.mxu0 0.0
    %2433 = vmatprep.subr.mxu0 0.0
    %2434 = vmatpush2.msra.mxu0 0.0
    %2435 = vmatprep.subr.mxu0 0.0
    %2436 = vmatpush2.msra.mxu0 0.0
    %2437 = vmatprep.subr.mxu0 0.0
    %2438 = vmatpush2.msra.mxu0 0.0
    %2439 = vmatprep.subr.mxu0 0.0
    %2440 = vmatpush2.msra.mxu0 0.0
    %2441 = vmatprep.subr.mxu0 0.0
    %2442 = vmatpush2.msra.mxu0 0.0
    %2443 = vmatprep.subr.mxu0 0.0
    %2444 = vmatpush2.msra.mxu0 0.0
    %2445 = vmatprep.subr.mxu0 0.0
    %2446 = vmatpush2.msra.mxu0 0.0
    %2447 = vmatprep.subr.mxu0 0.0
    %2448 = vmatpush2.msra.mxu0 0.0
    %2449 = vmatprep.mubr.f32.mxu0 0.0
    %2450 = vmatmul.mubr.f32.gmra.mxu0 %v2380
    %v2451 = vpop.f32.mrf.mxu0
    %v2452 = vadd.f32 %v2378, %v2451
    %v2453 = vpop.f32.mrf.mxu0
    %2454 = vmatprep.mubr.f32.mxu0 0.0
    %2455 = vmatmul.mubr.f32.gmra.mxu0 %v2383
    %v2456 = vpop.f32.mrf.mxu0
    %v2457 = vadd.f32 %v2378, %v2456
    %v2458 = vpop.f32.mrf.mxu0
    %2459 = vdwg.mxu0
    %2461 = vrot.lane.b32.xlu0 %v2452, 96
    %v2462 = vpop.permute.xlu0 %2461
    %v2463 = vsel %vm339, %v2452, 0
    %v2465 = vsel %vm339, %v2462, 0
    %2467 = vmatprep.subr.mxu0 0.0
    %2468 = vmatpush1.xpose.msra.mxu0 0.0
    %2469 = vmatprep.subr.mxu0 0.0
    %2470 = vmatpush1.xpose.msra.mxu0 0.0
    %2471 = vmatprep.subr.mxu0 0.0
    %2472 = vmatpush1.xpose.msra.mxu0 0.0
    %2473 = vmatprep.subr.mxu0 0.0
    %2474 = vmatpush1.xpose.msra.mxu0 0.0
    %2475 = vmatprep.subr.mxu0 0.0
    %2476 = vmatpush1.xpose.msra.mxu0 0.0
    %2477 = vmatprep.subr.mxu0 0.0
    %2478 = vmatpush1.xpose.msra.mxu0 0.0
    %2479 = vmatprep.subr.mxu0 0.0
    %2480 = vmatpush1.xpose.msra.mxu0 0.0
    %2481 = vmatprep.subr.mxu0 0.0
    %2482 = vmatpush1.xpose.msra.mxu0 0.0
    %2483 = vmatprep.subr.mxu0 0.0
    %2484 = vmatpush1.xpose.msra.mxu0 0.0
    %2485 = vmatprep.subr.mxu0 0.0
    %2486 = vmatpush1.xpose.msra.mxu0 0.0
    %2487 = vmatprep.subr.mxu0 0.0
    %2488 = vmatpush1.xpose.msra.mxu0 0.0
    %2489 = vmatprep.subr.mxu0 0.0
    %2490 = vmatpush1.xpose.msra.mxu0 0.0
    %2491 = vmatprep.subr.mxu0 0.0
    %2492 = vmatpush1.xpose.msra.mxu0 0.0
    %2493 = vmatprep.subr.mxu0 0.0
    %2494 = vmatpush1.xpose.msra.mxu0 0.0
    %2495 = vmatprep.subr.mxu0 0.0
    %2496 = vmatpush1.xpose.msra.mxu0 0.0
    %2497 = vmatprep.subr.mxu0 0.0
    %2498 = vmatpush1.xpose.msra.mxu0 %v2465
    %2499 = vmatprep.subr.mxu0 0.0
    %2500 = vmatpush2.xpose.msra.mxu0 0.0
    %2501 = vmatprep.subr.mxu0 0.0
    %2502 = vmatpush2.xpose.msra.mxu0 0.0
    %2503 = vmatprep.subr.mxu0 0.0
    %2504 = vmatpush2.xpose.msra.mxu0 0.0
    %2505 = vmatprep.subr.mxu0 0.0
    %2506 = vmatpush2.xpose.msra.mxu0 0.0
    %2507 = vmatprep.subr.mxu0 0.0
    %2508 = vmatpush2.xpose.msra.mxu0 0.0
    %2509 = vmatprep.subr.mxu0 0.0
    %2510 = vmatpush2.xpose.msra.mxu0 0.0
    %2511 = vmatprep.subr.mxu0 0.0
    %2512 = vmatpush2.xpose.msra.mxu0 0.0
    %2513 = vmatprep.subr.mxu0 0.0
    %2514 = vmatpush2.xpose.msra.mxu0 0.0
    %2515 = vmatprep.subr.mxu0 0.0
    %2516 = vmatpush2.xpose.msra.mxu0 0.0
    %2517 = vmatprep.subr.mxu0 0.0
    %2518 = vmatpush2.xpose.msra.mxu0 0.0
    %2519 = vmatprep.subr.mxu0 0.0
    %2520 = vmatpush2.xpose.msra.mxu0 0.0
    %2521 = vmatprep.subr.mxu0 0.0
    %2522 = vmatpush2.xpose.msra.mxu0 0.0
    %2523 = vmatprep.subr.mxu0 0.0
    %2524 = vmatpush2.xpose.msra.mxu0 0.0
    %2525 = vmatprep.subr.mxu0 0.0
    %2526 = vmatpush2.xpose.msra.mxu0 0.0
    %2527 = vmatprep.subr.mxu0 0.0
    %2528 = vmatpush2.xpose.msra.mxu0 0.0
    %2529 = vmatprep.subr.mxu0 0.0
    %2530 = vmatpush2.xpose.msra.mxu0 0.0
    %2531 = vmatprep.mubr.f32.mxu0 0.0
    %2532 = vmatmul.mubr.f32.gmra.mxu0 %v2463
    %v2533 = vpop.f32.mrf.mxu0
    %v2534 = vadd.f32 0.0, %v2533
    %v2535 = vpop.f32.mrf.mxu0
    %2536 = vdwg.mxu0
    %2538 = vrot.lane.b32.xlu0 %v2457, 96
    %v2539 = vpop.permute.xlu0 %2538
    %v2540 = vsel %vm339, %v2457, 0
    %v2542 = vsel %vm339, %v2539, 0
    %2544 = vmatprep.subr.mxu0 0.0
    %2545 = vmatpush1.xpose.msra.mxu0 0.0
    %2546 = vmatprep.subr.mxu0 0.0
    %2547 = vmatpush1.xpose.msra.mxu0 0.0
    %2548 = vmatprep.subr.mxu0 0.0
    %2549 = vmatpush1.xpose.msra.mxu0 0.0
    %2550 = vmatprep.subr.mxu0 0.0
    %2551 = vmatpush1.xpose.msra.mxu0 0.0
    %2552 = vmatprep.subr.mxu0 0.0
    %2553 = vmatpush1.xpose.msra.mxu0 0.0
    %2554 = vmatprep.subr.mxu0 0.0
    %2555 = vmatpush1.xpose.msra.mxu0 0.0
    %2556 = vmatprep.subr.mxu0 0.0
    %2557 = vmatpush1.xpose.msra.mxu0 0.0
    %2558 = vmatprep.subr.mxu0 0.0
    %2559 = vmatpush1.xpose.msra.mxu0 0.0
    %2560 = vmatprep.subr.mxu0 0.0
    %2561 = vmatpush1.xpose.msra.mxu0 0.0
    %2562 = vmatprep.subr.mxu0 0.0
    %2563 = vmatpush1.xpose.msra.mxu0 0.0
    %2564 = vmatprep.subr.mxu0 0.0
    %2565 = vmatpush1.xpose.msra.mxu0 0.0
    %2566 = vmatprep.subr.mxu0 0.0
    %2567 = vmatpush1.xpose.msra.mxu0 0.0
    %2568 = vmatprep.subr.mxu0 0.0
    %2569 = vmatpush1.xpose.msra.mxu0 0.0
    %2570 = vmatprep.subr.mxu0 0.0
    %2571 = vmatpush1.xpose.msra.mxu0 0.0
    %2572 = vmatprep.subr.mxu0 0.0
    %2573 = vmatpush1.xpose.msra.mxu0 0.0
    %2574 = vmatprep.subr.mxu0 0.0
    %2575 = vmatpush1.xpose.msra.mxu0 %v2542
    %2576 = vmatprep.subr.mxu0 0.0
    %2577 = vmatpush2.xpose.msra.mxu0 0.0
    %2578 = vmatprep.subr.mxu0 0.0
    %2579 = vmatpush2.xpose.msra.mxu0 0.0
    %2580 = vmatprep.subr.mxu0 0.0
    %2581 = vmatpush2.xpose.msra.mxu0 0.0
    %2582 = vmatprep.subr.mxu0 0.0
    %2583 = vmatpush2.xpose.msra.mxu0 0.0
    %2584 = vmatprep.subr.mxu0 0.0
    %2585 = vmatpush2.xpose.msra.mxu0 0.0
    %2586 = vmatprep.subr.mxu0 0.0
    %2587 = vmatpush2.xpose.msra.mxu0 0.0
    %2588 = vmatprep.subr.mxu0 0.0
    %2589 = vmatpush2.xpose.msra.mxu0 0.0
    %2590 = vmatprep.subr.mxu0 0.0
    %2591 = vmatpush2.xpose.msra.mxu0 0.0
    %2592 = vmatprep.subr.mxu0 0.0
    %2593 = vmatpush2.xpose.msra.mxu0 0.0
    %2594 = vmatprep.subr.mxu0 0.0
    %2595 = vmatpush2.xpose.msra.mxu0 0.0
    %2596 = vmatprep.subr.mxu0 0.0
    %2597 = vmatpush2.xpose.msra.mxu0 0.0
    %2598 = vmatprep.subr.mxu0 0.0
    %2599 = vmatpush2.xpose.msra.mxu0 0.0
    %2600 = vmatprep.subr.mxu0 0.0
    %2601 = vmatpush2.xpose.msra.mxu0 0.0
    %2602 = vmatprep.subr.mxu0 0.0
    %2603 = vmatpush2.xpose.msra.mxu0 0.0
    %2604 = vmatprep.subr.mxu0 0.0
    %2605 = vmatpush2.xpose.msra.mxu0 0.0
    %2606 = vmatprep.subr.mxu0 0.0
    %2607 = vmatpush2.xpose.msra.mxu0 0.0
    %2608 = vmatprep.mubr.f32.mxu0 0.0
    %2609 = vmatmul.mubr.f32.gmra.mxu0 %v2540
    %v2610 = vpop.f32.mrf.mxu0
    %v2611 = vadd.f32 0.0, %v2610
    %v2612 = vpop.f32.mrf.mxu0
    %2613 = vdwg.mxu0
    %v2614 = vmul.f32 %v2534, 0.35355338
    %v2615 = vmul.f32 %v2611, 0.35355338
    %v2616 = vadd.f32 %v2614, %v153
    %v2617 = vadd.f32 %v2615, %v153
    %v2618 = vsel %vm339, %v2616, -inf
    %2619 = vmax.xlane.f32.xlu0 %v2618
    %v2620 = vpop.xlane.xlu0 %2619
    %v2621 = vsel %vm339, %v2617, -inf
    %2622 = vmax.xlane.f32.xlu0 %v2621
    %v2623 = vpop.xlane.xlu0 %2622
    %v2624 = vsub.f32 %v2616, %v2620
    %v2625 = vsub.f32 %v2617, %v2623
    %v2626 = vmul.f32 %v2624, 1.442695
    %v2627 = vpow.pop %v2626
    %v2628 = vmul.f32 %v2625, 1.442695
    %v2629 = vpow.pop %v2628
    %v2630 = vsel %vm339, %v2627, 0.0
    %2631 = vadd.xlane.f32.xlu0 %v2630
    %v2632 = vpop.xlane.xlu0 %2631
    %v2633 = vsel %vm339, %v2629, 0.0
    %2634 = vadd.xlane.f32.xlu0 %v2633
    %v2635 = vpop.xlane.xlu0 %2634
    %v2636 = vrcp.pop %v2632
    %v2637 = vmul.f32 %v2627, %v2636
    %v2638 = vrcp.pop %v2635
    %v2639 = vmul.f32 %v2629, %v2638
    %2640 = vrot.lane.b32.xlu0 %v2452, 64
    %v2641 = vpop.permute.xlu0 %2640
    %v2644 = vsel %vm339, %v2637, 0
    %2646 = vmatprep.subr.mxu0 0.0
    %2647 = vmatpush1.msra.mxu0 0.0
    %2648 = vmatprep.subr.mxu0 0.0
    %2649 = vmatpush1.msra.mxu0 0.0
    %2650 = vmatprep.subr.mxu0 0.0
    %2651 = vmatpush1.msra.mxu0 0.0
    %2652 = vmatprep.subr.mxu0 0.0
    %2653 = vmatpush1.msra.mxu0 0.0
    %2654 = vmatprep.subr.mxu0 0.0
    %2655 = vmatpush1.msra.mxu0 0.0
    %2656 = vmatprep.subr.mxu0 0.0
    %2657 = vmatpush1.msra.mxu0 0.0
    %2658 = vmatprep.subr.mxu0 0.0
    %2659 = vmatpush1.msra.mxu0 0.0
    %2660 = vmatprep.subr.mxu0 0.0
    %2661 = vmatpush1.msra.mxu0 0.0
    %2662 = vmatprep.subr.mxu0 0.0
    %2663 = vmatpush1.msra.mxu0 0.0
    %2664 = vmatprep.subr.mxu0 0.0
    %2665 = vmatpush1.msra.mxu0 0.0
    %2666 = vmatprep.subr.mxu0 0.0
    %2667 = vmatpush1.msra.mxu0 0.0
    %2668 = vmatprep.subr.mxu0 0.0
    %2669 = vmatpush1.msra.mxu0 0.0
    %2670 = vmatprep.subr.mxu0 0.0
    %2671 = vmatpush1.msra.mxu0 0.0
    %2672 = vmatprep.subr.mxu0 0.0
    %2673 = vmatpush1.msra.mxu0 0.0
    %2674 = vmatprep.subr.mxu0 0.0
    %2675 = vmatpush1.msra.mxu0 0.0
    %2676 = vmatprep.subr.mxu0 0.0
    %2677 = vmatpush1.msra.mxu0 %v2641
    %2678 = vmatprep.subr.mxu0 0.0
    %2679 = vmatpush2.msra.mxu0 0.0
    %2680 = vmatprep.subr.mxu0 0.0
    %2681 = vmatpush2.msra.mxu0 0.0
    %2682 = vmatprep.subr.mxu0 0.0
    %2683 = vmatpush2.msra.mxu0 0.0
    %2684 = vmatprep.subr.mxu0 0.0
    %2685 = vmatpush2.msra.mxu0 0.0
    %2686 = vmatprep.subr.mxu0 0.0
    %2687 = vmatpush2.msra.mxu0 0.0
    %2688 = vmatprep.subr.mxu0 0.0
    %2689 = vmatpush2.msra.mxu0 0.0
    %2690 = vmatprep.subr.mxu0 0.0
    %2691 = vmatpush2.msra.mxu0 0.0
    %2692 = vmatprep.subr.mxu0 0.0
    %2693 = vmatpush2.msra.mxu0 0.0
    %2694 = vmatprep.subr.mxu0 0.0
    %2695 = vmatpush2.msra.mxu0 0.0
    %2696 = vmatprep.subr.mxu0 0.0
    %2697 = vmatpush2.msra.mxu0 0.0
    %2698 = vmatprep.subr.mxu0 0.0
    %2699 = vmatpush2.msra.mxu0 0.0
    %2700 = vmatprep.subr.mxu0 0.0
    %2701 = vmatpush2.msra.mxu0 0.0
    %2702 = vmatprep.subr.mxu0 0.0
    %2703 = vmatpush2.msra.mxu0 0.0
    %2704 = vmatprep.subr.mxu0 0.0
    %2705 = vmatpush2.msra.mxu0 0.0
    %2706 = vmatprep.subr.mxu0 0.0
    %2707 = vmatpush2.msra.mxu0 0.0
    %2708 = vmatprep.subr.mxu0 0.0
    %2709 = vmatpush2.msra.mxu0 0.0
    %2710 = vmatprep.mubr.f32.mxu0 0.0
    %2711 = vmatmul.mubr.f32.gmra.mxu0 %v2644
    %v2712 = vpop.f32.mrf.mxu0
    %v2713 = vadd.f32 0.0, %v2712
    %v2714 = vpop.f32.mrf.mxu0
    %2715 = vdwg.mxu0
    %2716 = vrot.lane.b32.xlu0 %v2457, 64
    %v2717 = vpop.permute.xlu0 %2716
    %v2720 = vsel %vm339, %v2639, 0
    %2722 = vmatprep.subr.mxu0 0.0
    %2723 = vmatpush1.msra.mxu0 0.0
    %2724 = vmatprep.subr.mxu0 0.0
    %2725 = vmatpush1.msra.mxu0 0.0
    %2726 = vmatprep.subr.mxu0 0.0
    %2727 = vmatpush1.msra.mxu0 0.0
    %2728 = vmatprep.subr.mxu0 0.0
    %2729 = vmatpush1.msra.mxu0 0.0
    %2730 = vmatprep.subr.mxu0 0.0
    %2731 = vmatpush1.msra.mxu0 0.0
    %2732 = vmatprep.subr.mxu0 0.0
    %2733 = vmatpush1.msra.mxu0 0.0
    %2734 = vmatprep.subr.mxu0 0.0
    %2735 = vmatpush1.msra.mxu0 0.0
    %2736 = vmatprep.subr.mxu0 0.0
    %2737 = vmatpush1.msra.mxu0 0.0
    %2738 = vmatprep.subr.mxu0 0.0
    %2739 = vmatpush1.msra.mxu0 0.0
    %2740 = vmatprep.subr.mxu0 0.0
    %2741 = vmatpush1.msra.mxu0 0.0
    %2742 = vmatprep.subr.mxu0 0.0
    %2743 = vmatpush1.msra.mxu0 0.0
    %2744 = vmatprep.subr.mxu0 0.0
    %2745 = vmatpush1.msra.mxu0 0.0
    %2746 = vmatprep.subr.mxu0 0.0
    %2747 = vmatpush1.msra.mxu0 0.0
    %2748 = vmatprep.subr.mxu0 0.0
    %2749 = vmatpush1.msra.mxu0 0.0
    %2750 = vmatprep.subr.mxu0 0.0
    %2751 = vmatpush1.msra.mxu0 0.0
    %2752 = vmatprep.subr.mxu0 0.0
    %2753 = vmatpush1.msra.mxu0 %v2717
    %2754 = vmatprep.subr.mxu0 0.0
    %2755 = vmatpush2.msra.mxu0 0.0
    %2756 = vmatprep.subr.mxu0 0.0
    %2757 = vmatpush2.msra.mxu0 0.0
    %2758 = vmatprep.subr.mxu0 0.0
    %2759 = vmatpush2.msra.mxu0 0.0
    %2760 = vmatprep.subr.mxu0 0.0
    %2761 = vmatpush2.msra.mxu0 0.0
    %2762 = vmatprep.subr.mxu0 0.0
    %2763 = vmatpush2.msra.mxu0 0.0
    %2764 = vmatprep.subr.mxu0 0.0
    %2765 = vmatpush2.msra.mxu0 0.0
    %2766 = vmatprep.subr.mxu0 0.0
    %2767 = vmatpush2.msra.mxu0 0.0
    %2768 = vmatprep.subr.mxu0 0.0
    %2769 = vmatpush2.msra.mxu0 0.0
    %2770 = vmatprep.subr.mxu0 0.0
    %2771 = vmatpush2.msra.mxu0 0.0
    %2772 = vmatprep.subr.mxu0 0.0
    %2773 = vmatpush2.msra.mxu0 0.0
    %2774 = vmatprep.subr.mxu0 0.0
    %2775 = vmatpush2.msra.mxu0 0.0
    %2776 = vmatprep.subr.mxu0 0.0
    %2777 = vmatpush2.msra.mxu0 0.0
    %2778 = vmatprep.subr.mxu0 0.0
    %2779 = vmatpush2.msra.mxu0 0.0
    %2780 = vmatprep.subr.mxu0 0.0
    %2781 = vmatpush2.msra.mxu0 0.0
    %2782 = vmatprep.subr.mxu0 0.0
    %2783 = vmatpush2.msra.mxu0 0.0
    %2784 = vmatprep.subr.mxu0 0.0
    %2785 = vmatpush2.msra.mxu0 0.0
    %2786 = vmatprep.mubr.f32.mxu0 0.0
    %2787 = vmatmul.mubr.f32.gmra.mxu0 %v2720
    %v2788 = vpop.f32.mrf.mxu0
    %v2789 = vadd.f32 0.0, %v2788
    %v2790 = vpop.f32.mrf.mxu0
    %2791 = vdwg.mxu0
    %2792 = vrot.lane.b32.xlu0 %v2452, 120
    %v2793 = vpop.permute.xlu0 %2792
    %2794 = vrot.lane.b32.xlu0 %v2452, 88
    %v2795 = vpop.permute.xlu0 %2794
    %v2796 = vsel %vm339, %v2793, 0
    %v2798 = vsel %vm339, %v2795, 0
    %2800 = vmatprep.subr.mxu0 0.0
    %2801 = vmatpush1.xpose.msra.mxu0 0.0
    %2802 = vmatprep.subr.mxu0 0.0
    %2803 = vmatpush1.xpose.msra.mxu0 0.0
    %2804 = vmatprep.subr.mxu0 0.0
    %2805 = vmatpush1.xpose.msra.mxu0 0.0
    %2806 = vmatprep.subr.mxu0 0.0
    %2807 = vmatpush1.xpose.msra.mxu0 0.0
    %2808 = vmatprep.subr.mxu0 0.0
    %2809 = vmatpush1.xpose.msra.mxu0 0.0
    %2810 = vmatprep.subr.mxu0 0.0
    %2811 = vmatpush1.xpose.msra.mxu0 0.0
    %2812 = vmatprep.subr.mxu0 0.0
    %2813 = vmatpush1.xpose.msra.mxu0 0.0
    %2814 = vmatprep.subr.mxu0 0.0
    %2815 = vmatpush1.xpose.msra.mxu0 0.0
    %2816 = vmatprep.subr.mxu0 0.0
    %2817 = vmatpush1.xpose.msra.mxu0 0.0
    %2818 = vmatprep.subr.mxu0 0.0
    %2819 = vmatpush1.xpose.msra.mxu0 0.0
    %2820 = vmatprep.subr.mxu0 0.0
    %2821 = vmatpush1.xpose.msra.mxu0 0.0
    %2822 = vmatprep.subr.mxu0 0.0
    %2823 = vmatpush1.xpose.msra.mxu0 0.0
    %2824 = vmatprep.subr.mxu0 0.0
    %2825 = vmatpush1.xpose.msra.mxu0 0.0
    %2826 = vmatprep.subr.mxu0 0.0
    %2827 = vmatpush1.xpose.msra.mxu0 0.0
    %2828 = vmatprep.subr.mxu0 0.0
    %2829 = vmatpush1.xpose.msra.mxu0 0.0
    %2830 = vmatprep.subr.mxu0 0.0
    %2831 = vmatpush1.xpose.msra.mxu0 %v2798
    %2832 = vmatprep.subr.mxu0 0.0
    %2833 = vmatpush2.xpose.msra.mxu0 0.0
    %2834 = vmatprep.subr.mxu0 0.0
    %2835 = vmatpush2.xpose.msra.mxu0 0.0
    %2836 = vmatprep.subr.mxu0 0.0
    %2837 = vmatpush2.xpose.msra.mxu0 0.0
    %2838 = vmatprep.subr.mxu0 0.0
    %2839 = vmatpush2.xpose.msra.mxu0 0.0
    %2840 = vmatprep.subr.mxu0 0.0
    %2841 = vmatpush2.xpose.msra.mxu0 0.0
    %2842 = vmatprep.subr.mxu0 0.0
    %2843 = vmatpush2.xpose.msra.mxu0 0.0
    %2844 = vmatprep.subr.mxu0 0.0
    %2845 = vmatpush2.xpose.msra.mxu0 0.0
    %2846 = vmatprep.subr.mxu0 0.0
    %2847 = vmatpush2.xpose.msra.mxu0 0.0
    %2848 = vmatprep.subr.mxu0 0.0
    %2849 = vmatpush2.xpose.msra.mxu0 0.0
    %2850 = vmatprep.subr.mxu0 0.0
    %2851 = vmatpush2.xpose.msra.mxu0 0.0
    %2852 = vmatprep.subr.mxu0 0.0
    %2853 = vmatpush2.xpose.msra.mxu0 0.0
    %2854 = vmatprep.subr.mxu0 0.0
    %2855 = vmatpush2.xpose.msra.mxu0 0.0
    %2856 = vmatprep.subr.mxu0 0.0
    %2857 = vmatpush2.xpose.msra.mxu0 0.0
    %2858 = vmatprep.subr.mxu0 0.0
    %2859 = vmatpush2.xpose.msra.mxu0 0.0
    %2860 = vmatprep.subr.mxu0 0.0
    %2861 = vmatpush2.xpose.msra.mxu0 0.0
    %2862 = vmatprep.subr.mxu0 0.0
    %2863 = vmatpush2.xpose.msra.mxu0 0.0
    %2864 = vmatprep.mubr.f32.mxu0 0.0
    %2865 = vmatmul.mubr.f32.gmra.mxu0 %v2796
    %v2866 = vpop.f32.mrf.mxu0
    %v2867 = vadd.f32 0.0, %v2866
    %v2868 = vpop.f32.mrf.mxu0
    %2869 = vdwg.mxu0
    %2870 = vrot.lane.b32.xlu0 %v2457, 120
    %v2871 = vpop.permute.xlu0 %2870
    %2872 = vrot.lane.b32.xlu0 %v2457, 88
    %v2873 = vpop.permute.xlu0 %2872
    %v2874 = vsel %vm339, %v2871, 0
    %v2876 = vsel %vm339, %v2873, 0
    %2878 = vmatprep.subr.mxu0 0.0
    %2879 = vmatpush1.xpose.msra.mxu0 0.0
    %2880 = vmatprep.subr.mxu0 0.0
    %2881 = vmatpush1.xpose.msra.mxu0 0.0
    %2882 = vmatprep.subr.mxu0 0.0
    %2883 = vmatpush1.xpose.msra.mxu0 0.0
    %2884 = vmatprep.subr.mxu0 0.0
    %2885 = vmatpush1.xpose.msra.mxu0 0.0
    %2886 = vmatprep.subr.mxu0 0.0
    %2887 = vmatpush1.xpose.msra.mxu0 0.0
    %2888 = vmatprep.subr.mxu0 0.0
    %2889 = vmatpush1.xpose.msra.mxu0 0.0
    %2890 = vmatprep.subr.mxu0 0.0
    %2891 = vmatpush1.xpose.msra.mxu0 0.0
    %2892 = vmatprep.subr.mxu0 0.0
    %2893 = vmatpush1.xpose.msra.mxu0 0.0
    %2894 = vmatprep.subr.mxu0 0.0
    %2895 = vmatpush1.xpose.msra.mxu0 0.0
    %2896 = vmatprep.subr.mxu0 0.0
    %2897 = vmatpush1.xpose.msra.mxu0 0.0
    %2898 = vmatprep.subr.mxu0 0.0
    %2899 = vmatpush1.xpose.msra.mxu0 0.0
    %2900 = vmatprep.subr.mxu0 0.0
    %2901 = vmatpush1.xpose.msra.mxu0 0.0
    %2902 = vmatprep.subr.mxu0 0.0
    %2903 = vmatpush1.xpose.msra.mxu0 0.0
    %2904 = vmatprep.subr.mxu0 0.0
    %2905 = vmatpush1.xpose.msra.mxu0 0.0
    %2906 = vmatprep.subr.mxu0 0.0
    %2907 = vmatpush1.xpose.msra.mxu0 0.0
    %2908 = vmatprep.subr.mxu0 0.0
    %2909 = vmatpush1.xpose.msra.mxu0 %v2876
    %2910 = vmatprep.subr.mxu0 0.0
    %2911 = vmatpush2.xpose.msra.mxu0 0.0
    %2912 = vmatprep.subr.mxu0 0.0
    %2913 = vmatpush2.xpose.msra.mxu0 0.0
    %2914 = vmatprep.subr.mxu0 0.0
    %2915 = vmatpush2.xpose.msra.mxu0 0.0
    %2916 = vmatprep.subr.mxu0 0.0
    %2917 = vmatpush2.xpose.msra.mxu0 0.0
    %2918 = vmatprep.subr.mxu0 0.0
    %2919 = vmatpush2.xpose.msra.mxu0 0.0
    %2920 = vmatprep.subr.mxu0 0.0
    %2921 = vmatpush2.xpose.msra.mxu0 0.0
    %2922 = vmatprep.subr.mxu0 0.0
    %2923 = vmatpush2.xpose.msra.mxu0 0.0
    %2924 = vmatprep.subr.mxu0 0.0
    %2925 = vmatpush2.xpose.msra.mxu0 0.0
    %2926 = vmatprep.subr.mxu0 0.0
    %2927 = vmatpush2.xpose.msra.mxu0 0.0
    %2928 = vmatprep.subr.mxu0 0.0
    %2929 = vmatpush2.xpose.msra.mxu0 0.0
    %2930 = vmatprep.subr.mxu0 0.0
    %2931 = vmatpush2.xpose.msra.mxu0 0.0
    %2932 = vmatprep.subr.mxu0 0.0
    %2933 = vmatpush2.xpose.msra.mxu0 0.0
    %2934 = vmatprep.subr.mxu0 0.0
    %2935 = vmatpush2.xpose.msra.mxu0 0.0
    %2936 = vmatprep.subr.mxu0 0.0
    %2937 = vmatpush2.xpose.msra.mxu0 0.0
    %2938 = vmatprep.subr.mxu0 0.0
    %2939 = vmatpush2.xpose.msra.mxu0 0.0
    %2940 = vmatprep.subr.mxu0 0.0
    %2941 = vmatpush2.xpose.msra.mxu0 0.0
    %2942 = vmatprep.mubr.f32.mxu0 0.0
    %2943 = vmatmul.mubr.f32.gmra.mxu0 %v2874
    %v2944 = vpop.f32.mrf.mxu0
    %v2945 = vadd.f32 0.0, %v2944
    %v2946 = vpop.f32.mrf.mxu0
    %2947 = vdwg.mxu0
    %v2948 = vmul.f32 %v2867, 0.35355338
    %v2949 = vmul.f32 %v2945, 0.35355338
    %v2950 = vadd.f32 %v2948, %v153
    %v2951 = vadd.f32 %v2949, %v153
    %v2952 = vsel %vm339, %v2950, -inf
    %2953 = vmax.xlane.f32.xlu0 %v2952
    %v2954 = vpop.xlane.xlu0 %2953
    %v2955 = vsel %vm339, %v2951, -inf
    %2956 = vmax.xlane.f32.xlu0 %v2955
    %v2957 = vpop.xlane.xlu0 %2956
    %v2958 = vsub.f32 %v2950, %v2954
    %v2959 = vsub.f32 %v2951, %v2957
    %v2960 = vmul.f32 %v2958, 1.442695
    %v2961 = vpow.pop %v2960
    %v2962 = vmul.f32 %v2959, 1.442695
    %v2963 = vpow.pop %v2962
    %v2964 = vsel %vm339, %v2961, 0.0
    %2965 = vadd.xlane.f32.xlu0 %v2964
    %v2966 = vpop.xlane.xlu0 %2965
    %v2967 = vsel %vm339, %v2963, 0.0
    %2968 = vadd.xlane.f32.xlu0 %v2967
    %v2969 = vpop.xlane.xlu0 %2968
    %v2970 = vrcp.pop %v2966
    %v2971 = vmul.f32 %v2961, %v2970
    %v2972 = vrcp.pop %v2969
    %v2973 = vmul.f32 %v2963, %v2972
    %2974 = vrot.lane.b32.xlu0 %v2452, 56
    %v2975 = vpop.permute.xlu0 %2974
    %v2978 = vsel %vm339, %v2971, 0
    %2980 = vmatprep.subr.mxu0 0.0
    %2981 = vmatpush1.msra.mxu0 0.0
    %2982 = vmatprep.subr.mxu0 0.0
    %2983 = vmatpush1.msra.mxu0 0.0
    %2984 = vmatprep.subr.mxu0 0.0
    %2985 = vmatpush1.msra.mxu0 0.0
    %2986 = vmatprep.subr.mxu0 0.0
    %2987 = vmatpush1.msra.mxu0 0.0
    %2988 = vmatprep.subr.mxu0 0.0
    %2989 = vmatpush1.msra.mxu0 0.0
    %2990 = vmatprep.subr.mxu0 0.0
    %2991 = vmatpush1.msra.mxu0 0.0
    %2992 = vmatprep.subr.mxu0 0.0
    %2993 = vmatpush1.msra.mxu0 0.0
    %2994 = vmatprep.subr.mxu0 0.0
    %2995 = vmatpush1.msra.mxu0 0.0
    %2996 = vmatprep.subr.mxu0 0.0
    %2997 = vmatpush1.msra.mxu0 0.0
    %2998 = vmatprep.subr.mxu0 0.0
    %2999 = vmatpush1.msra.mxu0 0.0
    %3000 = vmatprep.subr.mxu0 0.0
    %3001 = vmatpush1.msra.mxu0 0.0
    %3002 = vmatprep.subr.mxu0 0.0
    %3003 = vmatpush1.msra.mxu0 0.0
    %3004 = vmatprep.subr.mxu0 0.0
    %3005 = vmatpush1.msra.mxu0 0.0
    %3006 = vmatprep.subr.mxu0 0.0
    %3007 = vmatpush1.msra.mxu0 0.0
    %3008 = vmatprep.subr.mxu0 0.0
    %3009 = vmatpush1.msra.mxu0 0.0
    %3010 = vmatprep.subr.mxu0 0.0
    %3011 = vmatpush1.msra.mxu0 %v2975
    %3012 = vmatprep.subr.mxu0 0.0
    %3013 = vmatpush2.msra.mxu0 0.0
    %3014 = vmatprep.subr.mxu0 0.0
    %3015 = vmatpush2.msra.mxu0 0.0
    %3016 = vmatprep.subr.mxu0 0.0
    %3017 = vmatpush2.msra.mxu0 0.0
    %3018 = vmatprep.subr.mxu0 0.0
    %3019 = vmatpush2.msra.mxu0 0.0
    %3020 = vmatprep.subr.mxu0 0.0
    %3021 = vmatpush2.msra.mxu0 0.0
    %3022 = vmatprep.subr.mxu0 0.0
    %3023 = vmatpush2.msra.mxu0 0.0
    %3024 = vmatprep.subr.mxu0 0.0
    %3025 = vmatpush2.msra.mxu0 0.0
    %3026 = vmatprep.subr.mxu0 0.0
    %3027 = vmatpush2.msra.mxu0 0.0
    %3028 = vmatprep.subr.mxu0 0.0
    %3029 = vmatpush2.msra.mxu0 0.0
    %3030 = vmatprep.subr.mxu0 0.0
    %3031 = vmatpush2.msra.mxu0 0.0
    %3032 = vmatprep.subr.mxu0 0.0
    %3033 = vmatpush2.msra.mxu0 0.0
    %3034 = vmatprep.subr.mxu0 0.0
    %3035 = vmatpush2.msra.mxu0 0.0
    %3036 = vmatprep.subr.mxu0 0.0
    %3037 = vmatpush2.msra.mxu0 0.0
    %3038 = vmatprep.subr.mxu0 0.0
    %3039 = vmatpush2.msra.mxu0 0.0
    %3040 = vmatprep.subr.mxu0 0.0
    %3041 = vmatpush2.msra.mxu0 0.0
    %3042 = vmatprep.subr.mxu0 0.0
    %3043 = vmatpush2.msra.mxu0 0.0
    %3044 = vmatprep.mubr.f32.mxu0 0.0
    %3045 = vmatmul.mubr.f32.gmra.mxu0 %v2978
    %v3046 = vpop.f32.mrf.mxu0
    %v3047 = vadd.f32 0.0, %v3046
    %v3048 = vpop.f32.mrf.mxu0
    %3049 = vdwg.mxu0
    %3050 = vrot.lane.b32.xlu0 %v2457, 56
    %v3051 = vpop.permute.xlu0 %3050
    %v3054 = vsel %vm339, %v2973, 0
    %3056 = vmatprep.subr.mxu0 0.0
    %3057 = vmatpush1.msra.mxu0 0.0
    %3058 = vmatprep.subr.mxu0 0.0
    %3059 = vmatpush1.msra.mxu0 0.0
    %3060 = vmatprep.subr.mxu0 0.0
    %3061 = vmatpush1.msra.mxu0 0.0
    %3062 = vmatprep.subr.mxu0 0.0
    %3063 = vmatpush1.msra.mxu0 0.0
    %3064 = vmatprep.subr.mxu0 0.0
    %3065 = vmatpush1.msra.mxu0 0.0
    %3066 = vmatprep.subr.mxu0 0.0
    %3067 = vmatpush1.msra.mxu0 0.0
    %3068 = vmatprep.subr.mxu0 0.0
    %3069 = vmatpush1.msra.mxu0 0.0
    %3070 = vmatprep.subr.mxu0 0.0
    %3071 = vmatpush1.msra.mxu0 0.0
    %3072 = vmatprep.subr.mxu0 0.0
    %3073 = vmatpush1.msra.mxu0 0.0
    %3074 = vmatprep.subr.mxu0 0.0
    %3075 = vmatpush1.msra.mxu0 0.0
    %3076 = vmatprep.subr.mxu0 0.0
    %3077 = vmatpush1.msra.mxu0 0.0
    %3078 = vmatprep.subr.mxu0 0.0
    %3079 = vmatpush1.msra.mxu0 0.0
    %3080 = vmatprep.subr.mxu0 0.0
    %3081 = vmatpush1.msra.mxu0 0.0
    %3082 = vmatprep.subr.mxu0 0.0
    %3083 = vmatpush1.msra.mxu0 0.0
    %3084 = vmatprep.subr.mxu0 0.0
    %3085 = vmatpush1.msra.mxu0 0.0
    %3086 = vmatprep.subr.mxu0 0.0
    %3087 = vmatpush1.msra.mxu0 %v3051
    %3088 = vmatprep.subr.mxu0 0.0
    %3089 = vmatpush2.msra.mxu0 0.0
    %3090 = vmatprep.subr.mxu0 0.0
    %3091 = vmatpush2.msra.mxu0 0.0
    %3092 = vmatprep.subr.mxu0 0.0
    %3093 = vmatpush2.msra.mxu0 0.0
    %3094 = vmatprep.subr.mxu0 0.0
    %3095 = vmatpush2.msra.mxu0 0.0
    %3096 = vmatprep.subr.mxu0 0.0
    %3097 = vmatpush2.msra.mxu0 0.0
    %3098 = vmatprep.subr.mxu0 0.0
    %3099 = vmatpush2.msra.mxu0 0.0
    %3100 = vmatprep.subr.mxu0 0.0
    %3101 = vmatpush2.msra.mxu0 0.0
    %3102 = vmatprep.subr.mxu0 0.0
    %3103 = vmatpush2.msra.mxu0 0.0
    %3104 = vmatprep.subr.mxu0 0.0
    %3105 = vmatpush2.msra.mxu0 0.0
    %3106 = vmatprep.subr.mxu0 0.0
    %3107 = vmatpush2.msra.mxu0 0.0
    %3108 = vmatprep.subr.mxu0 0.0
    %3109 = vmatpush2.msra.mxu0 0.0
    %3110 = vmatprep.subr.mxu0 0.0
    %3111 = vmatpush2.msra.mxu0 0.0
    %3112 = vmatprep.subr.mxu0 0.0
    %3113 = vmatpush2.msra.mxu0 0.0
    %3114 = vmatprep.subr.mxu0 0.0
    %3115 = vmatpush2.msra.mxu0 0.0
    %3116 = vmatprep.subr.mxu0 0.0
    %3117 = vmatpush2.msra.mxu0 0.0
    %3118 = vmatprep.subr.mxu0 0.0
    %3119 = vmatpush2.msra.mxu0 0.0
    %3120 = vmatprep.mubr.f32.mxu0 0.0
    %3121 = vmatmul.mubr.f32.gmra.mxu0 %v3054
    %v3122 = vpop.f32.mrf.mxu0
    %v3123 = vadd.f32 0.0, %v3122
    %v3124 = vpop.f32.mrf.mxu0
    %3125 = vdwg.mxu0
    %3126 = vrot.lane.b32.xlu0 %v2452, 112
    %v3127 = vpop.permute.xlu0 %3126
    %3128 = vrot.lane.b32.xlu0 %v2452, 80
    %v3129 = vpop.permute.xlu0 %3128
    %v3130 = vsel %vm339, %v3127, 0
    %v3132 = vsel %vm339, %v3129, 0
    %3134 = vmatprep.subr.mxu0 0.0
    %3135 = vmatpush1.xpose.msra.mxu0 0.0
    %3136 = vmatprep.subr.mxu0 0.0
    %3137 = vmatpush1.xpose.msra.mxu0 0.0
    %3138 = vmatprep.subr.mxu0 0.0
    %3139 = vmatpush1.xpose.msra.mxu0 0.0
    %3140 = vmatprep.subr.mxu0 0.0
    %3141 = vmatpush1.xpose.msra.mxu0 0.0
    %3142 = vmatprep.subr.mxu0 0.0
    %3143 = vmatpush1.xpose.msra.mxu0 0.0
    %3144 = vmatprep.subr.mxu0 0.0
    %3145 = vmatpush1.xpose.msra.mxu0 0.0
    %3146 = vmatprep.subr.mxu0 0.0
    %3147 = vmatpush1.xpose.msra.mxu0 0.0
    %3148 = vmatprep.subr.mxu0 0.0
    %3149 = vmatpush1.xpose.msra.mxu0 0.0
    %3150 = vmatprep.subr.mxu0 0.0
    %3151 = vmatpush1.xpose.msra.mxu0 0.0
    %3152 = vmatprep.subr.mxu0 0.0
    %3153 = vmatpush1.xpose.msra.mxu0 0.0
    %3154 = vmatprep.subr.mxu0 0.0
    %3155 = vmatpush1.xpose.msra.mxu0 0.0
    %3156 = vmatprep.subr.mxu0 0.0
    %3157 = vmatpush1.xpose.msra.mxu0 0.0
    %3158 = vmatprep.subr.mxu0 0.0
    %3159 = vmatpush1.xpose.msra.mxu0 0.0
    %3160 = vmatprep.subr.mxu0 0.0
    %3161 = vmatpush1.xpose.msra.mxu0 0.0
    %3162 = vmatprep.subr.mxu0 0.0
    %3163 = vmatpush1.xpose.msra.mxu0 0.0
    %3164 = vmatprep.subr.mxu0 0.0
    %3165 = vmatpush1.xpose.msra.mxu0 %v3132
    %3166 = vmatprep.subr.mxu0 0.0
    %3167 = vmatpush2.xpose.msra.mxu0 0.0
    %3168 = vmatprep.subr.mxu0 0.0
    %3169 = vmatpush2.xpose.msra.mxu0 0.0
    %3170 = vmatprep.subr.mxu0 0.0
    %3171 = vmatpush2.xpose.msra.mxu0 0.0
    %3172 = vmatprep.subr.mxu0 0.0
    %3173 = vmatpush2.xpose.msra.mxu0 0.0
    %3174 = vmatprep.subr.mxu0 0.0
    %3175 = vmatpush2.xpose.msra.mxu0 0.0
    %3176 = vmatprep.subr.mxu0 0.0
    %3177 = vmatpush2.xpose.msra.mxu0 0.0
    %3178 = vmatprep.subr.mxu0 0.0
    %3179 = vmatpush2.xpose.msra.mxu0 0.0
    %3180 = vmatprep.subr.mxu0 0.0
    %3181 = vmatpush2.xpose.msra.mxu0 0.0
    %3182 = vmatprep.subr.mxu0 0.0
    %3183 = vmatpush2.xpose.msra.mxu0 0.0
    %3184 = vmatprep.subr.mxu0 0.0
    %3185 = vmatpush2.xpose.msra.mxu0 0.0
    %3186 = vmatprep.subr.mxu0 0.0
    %3187 = vmatpush2.xpose.msra.mxu0 0.0
    %3188 = vmatprep.subr.mxu0 0.0
    %3189 = vmatpush2.xpose.msra.mxu0 0.0
    %3190 = vmatprep.subr.mxu0 0.0
    %3191 = vmatpush2.xpose.msra.mxu0 0.0
    %3192 = vmatprep.subr.mxu0 0.0
    %3193 = vmatpush2.xpose.msra.mxu0 0.0
    %3194 = vmatprep.subr.mxu0 0.0
    %3195 = vmatpush2.xpose.msra.mxu0 0.0
    %3196 = vmatprep.subr.mxu0 0.0
    %3197 = vmatpush2.xpose.msra.mxu0 0.0
    %3198 = vmatprep.mubr.f32.mxu0 0.0
    %3199 = vmatmul.mubr.f32.gmra.mxu0 %v3130
    %v3200 = vpop.f32.mrf.mxu0
    %v3201 = vadd.f32 0.0, %v3200
    %v3202 = vpop.f32.mrf.mxu0
    %3203 = vdwg.mxu0
    %3204 = vrot.lane.b32.xlu0 %v2457, 112
    %v3205 = vpop.permute.xlu0 %3204
    %3206 = vrot.lane.b32.xlu0 %v2457, 80
    %v3207 = vpop.permute.xlu0 %3206
    %v3208 = vsel %vm339, %v3205, 0
    %v3210 = vsel %vm339, %v3207, 0
    %3212 = vmatprep.subr.mxu0 0.0
    %3213 = vmatpush1.xpose.msra.mxu0 0.0
    %3214 = vmatprep.subr.mxu0 0.0
    %3215 = vmatpush1.xpose.msra.mxu0 0.0
    %3216 = vmatprep.subr.mxu0 0.0
    %3217 = vmatpush1.xpose.msra.mxu0 0.0
    %3218 = vmatprep.subr.mxu0 0.0
    %3219 = vmatpush1.xpose.msra.mxu0 0.0
    %3220 = vmatprep.subr.mxu0 0.0
    %3221 = vmatpush1.xpose.msra.mxu0 0.0
    %3222 = vmatprep.subr.mxu0 0.0
    %3223 = vmatpush1.xpose.msra.mxu0 0.0
    %3224 = vmatprep.subr.mxu0 0.0
    %3225 = vmatpush1.xpose.msra.mxu0 0.0
    %3226 = vmatprep.subr.mxu0 0.0
    %3227 = vmatpush1.xpose.msra.mxu0 0.0
    %3228 = vmatprep.subr.mxu0 0.0
    %3229 = vmatpush1.xpose.msra.mxu0 0.0
    %3230 = vmatprep.subr.mxu0 0.0
    %3231 = vmatpush1.xpose.msra.mxu0 0.0
    %3232 = vmatprep.subr.mxu0 0.0
    %3233 = vmatpush1.xpose.msra.mxu0 0.0
    %3234 = vmatprep.subr.mxu0 0.0
    %3235 = vmatpush1.xpose.msra.mxu0 0.0
    %3236 = vmatprep.subr.mxu0 0.0
    %3237 = vmatpush1.xpose.msra.mxu0 0.0
    %3238 = vmatprep.subr.mxu0 0.0
    %3239 = vmatpush1.xpose.msra.mxu0 0.0
    %3240 = vmatprep.subr.mxu0 0.0
    %3241 = vmatpush1.xpose.msra.mxu0 0.0
    %3242 = vmatprep.subr.mxu0 0.0
    %3243 = vmatpush1.xpose.msra.mxu0 %v3210
    %3244 = vmatprep.subr.mxu0 0.0
    %3245 = vmatpush2.xpose.msra.mxu0 0.0
    %3246 = vmatprep.subr.mxu0 0.0
    %3247 = vmatpush2.xpose.msra.mxu0 0.0
    %3248 = vmatprep.subr.mxu0 0.0
    %3249 = vmatpush2.xpose.msra.mxu0 0.0
    %3250 = vmatprep.subr.mxu0 0.0
    %3251 = vmatpush2.xpose.msra.mxu0 0.0
    %3252 = vmatprep.subr.mxu0 0.0
    %3253 = vmatpush2.xpose.msra.mxu0 0.0
    %3254 = vmatprep.subr.mxu0 0.0
    %3255 = vmatpush2.xpose.msra.mxu0 0.0
    %3256 = vmatprep.subr.mxu0 0.0
    %3257 = vmatpush2.xpose.msra.mxu0 0.0
    %3258 = vmatprep.subr.mxu0 0.0
    %3259 = vmatpush2.xpose.msra.mxu0 0.0
    %3260 = vmatprep.subr.mxu0 0.0
    %3261 = vmatpush2.xpose.msra.mxu0 0.0
    %3262 = vmatprep.subr.mxu0 0.0
    %3263 = vmatpush2.xpose.msra.mxu0 0.0
    %3264 = vmatprep.subr.mxu0 0.0
    %3265 = vmatpush2.xpose.msra.mxu0 0.0
    %3266 = vmatprep.subr.mxu0 0.0
    %3267 = vmatpush2.xpose.msra.mxu0 0.0
    %3268 = vmatprep.subr.mxu0 0.0
    %3269 = vmatpush2.xpose.msra.mxu0 0.0
    %3270 = vmatprep.subr.mxu0 0.0
    %3271 = vmatpush2.xpose.msra.mxu0 0.0
    %3272 = vmatprep.subr.mxu0 0.0
    %3273 = vmatpush2.xpose.msra.mxu0 0.0
    %3274 = vmatprep.subr.mxu0 0.0
    %3275 = vmatpush2.xpose.msra.mxu0 0.0
    %3276 = vmatprep.mubr.f32.mxu0 0.0
    %3277 = vmatmul.mubr.f32.gmra.mxu0 %v3208
    %v3278 = vpop.f32.mrf.mxu0
    %v3279 = vadd.f32 0.0, %v3278
    %v3280 = vpop.f32.mrf.mxu0
    %3281 = vdwg.mxu0
    %v3282 = vmul.f32 %v3201, 0.35355338
    %v3283 = vmul.f32 %v3279, 0.35355338
    %v3284 = vadd.f32 %v3282, %v153
    %v3285 = vadd.f32 %v3283, %v153
    %v3286 = vsel %vm339, %v3284, -inf
    %3287 = vmax.xlane.f32.xlu0 %v3286
    %v3288 = vpop.xlane.xlu0 %3287
    %v3289 = vsel %vm339, %v3285, -inf
    %3290 = vmax.xlane.f32.xlu0 %v3289
    %v3291 = vpop.xlane.xlu0 %3290
    %v3292 = vsub.f32 %v3284, %v3288
    %v3293 = vsub.f32 %v3285, %v3291
    %v3294 = vmul.f32 %v3292, 1.442695
    %v3295 = vpow.pop %v3294
    %v3296 = vmul.f32 %v3293, 1.442695
    %v3297 = vpow.pop %v3296
    %v3298 = vsel %vm339, %v3295, 0.0
    %3299 = vadd.xlane.f32.xlu0 %v3298
    %v3300 = vpop.xlane.xlu0 %3299
    %v3301 = vsel %vm339, %v3297, 0.0
    %3302 = vadd.xlane.f32.xlu0 %v3301
    %v3303 = vpop.xlane.xlu0 %3302
    %v3304 = vrcp.pop %v3300
    %v3305 = vmul.f32 %v3295, %v3304
    %v3306 = vrcp.pop %v3303
    %v3307 = vmul.f32 %v3297, %v3306
    %3308 = vrot.lane.b32.xlu0 %v2452, 48
    %v3309 = vpop.permute.xlu0 %3308
    %v3312 = vsel %vm339, %v3305, 0
    %3314 = vmatprep.subr.mxu0 0.0
    %3315 = vmatpush1.msra.mxu0 0.0
    %3316 = vmatprep.subr.mxu0 0.0
    %3317 = vmatpush1.msra.mxu0 0.0
    %3318 = vmatprep.subr.mxu0 0.0
    %3319 = vmatpush1.msra.mxu0 0.0
    %3320 = vmatprep.subr.mxu0 0.0
    %3321 = vmatpush1.msra.mxu0 0.0
    %3322 = vmatprep.subr.mxu0 0.0
    %3323 = vmatpush1.msra.mxu0 0.0
    %3324 = vmatprep.subr.mxu0 0.0
    %3325 = vmatpush1.msra.mxu0 0.0
    %3326 = vmatprep.subr.mxu0 0.0
    %3327 = vmatpush1.msra.mxu0 0.0
    %3328 = vmatprep.subr.mxu0 0.0
    %3329 = vmatpush1.msra.mxu0 0.0
    %3330 = vmatprep.subr.mxu0 0.0
    %3331 = vmatpush1.msra.mxu0 0.0
    %3332 = vmatprep.subr.mxu0 0.0
    %3333 = vmatpush1.msra.mxu0 0.0
    %3334 = vmatprep.subr.mxu0 0.0
    %3335 = vmatpush1.msra.mxu0 0.0
    %3336 = vmatprep.subr.mxu0 0.0
    %3337 = vmatpush1.msra.mxu0 0.0
    %3338 = vmatprep.subr.mxu0 0.0
    %3339 = vmatpush1.msra.mxu0 0.0
    %3340 = vmatprep.subr.mxu0 0.0
    %3341 = vmatpush1.msra.mxu0 0.0
    %3342 = vmatprep.subr.mxu0 0.0
    %3343 = vmatpush1.msra.mxu0 0.0
    %3344 = vmatprep.subr.mxu0 0.0
    %3345 = vmatpush1.msra.mxu0 %v3309
    %3346 = vmatprep.subr.mxu0 0.0
    %3347 = vmatpush2.msra.mxu0 0.0
    %3348 = vmatprep.subr.mxu0 0.0
    %3349 = vmatpush2.msra.mxu0 0.0
    %3350 = vmatprep.subr.mxu0 0.0
    %3351 = vmatpush2.msra.mxu0 0.0
    %3352 = vmatprep.subr.mxu0 0.0
    %3353 = vmatpush2.msra.mxu0 0.0
    %3354 = vmatprep.subr.mxu0 0.0
    %3355 = vmatpush2.msra.mxu0 0.0
    %3356 = vmatprep.subr.mxu0 0.0
    %3357 = vmatpush2.msra.mxu0 0.0
    %3358 = vmatprep.subr.mxu0 0.0
    %3359 = vmatpush2.msra.mxu0 0.0
    %3360 = vmatprep.subr.mxu0 0.0
    %3361 = vmatpush2.msra.mxu0 0.0
    %3362 = vmatprep.subr.mxu0 0.0
    %3363 = vmatpush2.msra.mxu0 0.0
    %3364 = vmatprep.subr.mxu0 0.0
    %3365 = vmatpush2.msra.mxu0 0.0
    %3366 = vmatprep.subr.mxu0 0.0
    %3367 = vmatpush2.msra.mxu0 0.0
    %3368 = vmatprep.subr.mxu0 0.0
    %3369 = vmatpush2.msra.mxu0 0.0
    %3370 = vmatprep.subr.mxu0 0.0
    %3371 = vmatpush2.msra.mxu0 0.0
    %3372 = vmatprep.subr.mxu0 0.0
    %3373 = vmatpush2.msra.mxu0 0.0
    %3374 = vmatprep.subr.mxu0 0.0
    %3375 = vmatpush2.msra.mxu0 0.0
    %3376 = vmatprep.subr.mxu0 0.0
    %3377 = vmatpush2.msra.mxu0 0.0
    %3378 = vmatprep.mubr.f32.mxu0 0.0
    %3379 = vmatmul.mubr.f32.gmra.mxu0 %v3312
    %v3380 = vpop.f32.mrf.mxu0
    %v3381 = vadd.f32 0.0, %v3380
    %v3382 = vpop.f32.mrf.mxu0
    %3383 = vdwg.mxu0
    %3384 = vrot.lane.b32.xlu0 %v2457, 48
    %v3385 = vpop.permute.xlu0 %3384
    %v3388 = vsel %vm339, %v3307, 0
    %3390 = vmatprep.subr.mxu0 0.0
    %3391 = vmatpush1.msra.mxu0 0.0
    %3392 = vmatprep.subr.mxu0 0.0
    %3393 = vmatpush1.msra.mxu0 0.0
    %3394 = vmatprep.subr.mxu0 0.0
    %3395 = vmatpush1.msra.mxu0 0.0
    %3396 = vmatprep.subr.mxu0 0.0
    %3397 = vmatpush1.msra.mxu0 0.0
    %3398 = vmatprep.subr.mxu0 0.0
    %3399 = vmatpush1.msra.mxu0 0.0
    %3400 = vmatprep.subr.mxu0 0.0
    %3401 = vmatpush1.msra.mxu0 0.0
    %3402 = vmatprep.subr.mxu0 0.0
    %3403 = vmatpush1.msra.mxu0 0.0
    %3404 = vmatprep.subr.mxu0 0.0
    %3405 = vmatpush1.msra.mxu0 0.0
    %3406 = vmatprep.subr.mxu0 0.0
    %3407 = vmatpush1.msra.mxu0 0.0
    %3408 = vmatprep.subr.mxu0 0.0
    %3409 = vmatpush1.msra.mxu0 0.0
    %3410 = vmatprep.subr.mxu0 0.0
    %3411 = vmatpush1.msra.mxu0 0.0
    %3412 = vmatprep.subr.mxu0 0.0
    %3413 = vmatpush1.msra.mxu0 0.0
    %3414 = vmatprep.subr.mxu0 0.0
    %3415 = vmatpush1.msra.mxu0 0.0
    %3416 = vmatprep.subr.mxu0 0.0
    %3417 = vmatpush1.msra.mxu0 0.0
    %3418 = vmatprep.subr.mxu0 0.0
    %3419 = vmatpush1.msra.mxu0 0.0
    %3420 = vmatprep.subr.mxu0 0.0
    %3421 = vmatpush1.msra.mxu0 %v3385
    %3422 = vmatprep.subr.mxu0 0.0
    %3423 = vmatpush2.msra.mxu0 0.0
    %3424 = vmatprep.subr.mxu0 0.0
    %3425 = vmatpush2.msra.mxu0 0.0
    %3426 = vmatprep.subr.mxu0 0.0
    %3427 = vmatpush2.msra.mxu0 0.0
    %3428 = vmatprep.subr.mxu0 0.0
    %3429 = vmatpush2.msra.mxu0 0.0
    %3430 = vmatprep.subr.mxu0 0.0
    %3431 = vmatpush2.msra.mxu0 0.0
    %3432 = vmatprep.subr.mxu0 0.0
    %3433 = vmatpush2.msra.mxu0 0.0
    %3434 = vmatprep.subr.mxu0 0.0
    %3435 = vmatpush2.msra.mxu0 0.0
    %3436 = vmatprep.subr.mxu0 0.0
    %3437 = vmatpush2.msra.mxu0 0.0
    %3438 = vmatprep.subr.mxu0 0.0
    %3439 = vmatpush2.msra.mxu0 0.0
    %3440 = vmatprep.subr.mxu0 0.0
    %3441 = vmatpush2.msra.mxu0 0.0
    %3442 = vmatprep.subr.mxu0 0.0
    %3443 = vmatpush2.msra.mxu0 0.0
    %3444 = vmatprep.subr.mxu0 0.0
    %3445 = vmatpush2.msra.mxu0 0.0
    %3446 = vmatprep.subr.mxu0 0.0
    %3447 = vmatpush2.msra.mxu0 0.0
    %3448 = vmatprep.subr.mxu0 0.0
    %3449 = vmatpush2.msra.mxu0 0.0
    %3450 = vmatprep.subr.mxu0 0.0
    %3451 = vmatpush2.msra.mxu0 0.0
    %3452 = vmatprep.subr.mxu0 0.0
    %3453 = vmatpush2.msra.mxu0 0.0
    %3454 = vmatprep.mubr.f32.mxu0 0.0
    %3455 = vmatmul.mubr.f32.gmra.mxu0 %v3388
    %v3456 = vpop.f32.mrf.mxu0
    %v3457 = vadd.f32 0.0, %v3456
    %v3458 = vpop.f32.mrf.mxu0
    %3459 = vdwg.mxu0
    %3460 = vrot.lane.b32.xlu0 %v2452, 104
    %v3461 = vpop.permute.xlu0 %3460
    %3462 = vrot.lane.b32.xlu0 %v2452, 72
    %v3463 = vpop.permute.xlu0 %3462
    %v3464 = vsel %vm339, %v3461, 0
    %v3466 = vsel %vm339, %v3463, 0
    %3468 = vmatprep.subr.mxu0 0.0
    %3469 = vmatpush1.xpose.msra.mxu0 0.0
    %3470 = vmatprep.subr.mxu0 0.0
    %3471 = vmatpush1.xpose.msra.mxu0 0.0
    %3472 = vmatprep.subr.mxu0 0.0
    %3473 = vmatpush1.xpose.msra.mxu0 0.0
    %3474 = vmatprep.subr.mxu0 0.0
    %3475 = vmatpush1.xpose.msra.mxu0 0.0
    %3476 = vmatprep.subr.mxu0 0.0
    %3477 = vmatpush1.xpose.msra.mxu0 0.0
    %3478 = vmatprep.subr.mxu0 0.0
    %3479 = vmatpush1.xpose.msra.mxu0 0.0
    %3480 = vmatprep.subr.mxu0 0.0
    %3481 = vmatpush1.xpose.msra.mxu0 0.0
    %3482 = vmatprep.subr.mxu0 0.0
    %3483 = vmatpush1.xpose.msra.mxu0 0.0
    %3484 = vmatprep.subr.mxu0 0.0
    %3485 = vmatpush1.xpose.msra.mxu0 0.0
    %3486 = vmatprep.subr.mxu0 0.0
    %3487 = vmatpush1.xpose.msra.mxu0 0.0
    %3488 = vmatprep.subr.mxu0 0.0
    %3489 = vmatpush1.xpose.msra.mxu0 0.0
    %3490 = vmatprep.subr.mxu0 0.0
    %3491 = vmatpush1.xpose.msra.mxu0 0.0
    %3492 = vmatprep.subr.mxu0 0.0
    %3493 = vmatpush1.xpose.msra.mxu0 0.0
    %3494 = vmatprep.subr.mxu0 0.0
    %3495 = vmatpush1.xpose.msra.mxu0 0.0
    %3496 = vmatprep.subr.mxu0 0.0
    %3497 = vmatpush1.xpose.msra.mxu0 0.0
    %3498 = vmatprep.subr.mxu0 0.0
    %3499 = vmatpush1.xpose.msra.mxu0 %v3466
    %3500 = vmatprep.subr.mxu0 0.0
    %3501 = vmatpush2.xpose.msra.mxu0 0.0
    %3502 = vmatprep.subr.mxu0 0.0
    %3503 = vmatpush2.xpose.msra.mxu0 0.0
    %3504 = vmatprep.subr.mxu0 0.0
    %3505 = vmatpush2.xpose.msra.mxu0 0.0
    %3506 = vmatprep.subr.mxu0 0.0
    %3507 = vmatpush2.xpose.msra.mxu0 0.0
    %3508 = vmatprep.subr.mxu0 0.0
    %3509 = vmatpush2.xpose.msra.mxu0 0.0
    %3510 = vmatprep.subr.mxu0 0.0
    %3511 = vmatpush2.xpose.msra.mxu0 0.0
    %3512 = vmatprep.subr.mxu0 0.0
    %3513 = vmatpush2.xpose.msra.mxu0 0.0
    %3514 = vmatprep.subr.mxu0 0.0
    %3515 = vmatpush2.xpose.msra.mxu0 0.0
    %3516 = vmatprep.subr.mxu0 0.0
    %3517 = vmatpush2.xpose.msra.mxu0 0.0
    %3518 = vmatprep.subr.mxu0 0.0
    %3519 = vmatpush2.xpose.msra.mxu0 0.0
    %3520 = vmatprep.subr.mxu0 0.0
    %3521 = vmatpush2.xpose.msra.mxu0 0.0
    %3522 = vmatprep.subr.mxu0 0.0
    %3523 = vmatpush2.xpose.msra.mxu0 0.0
    %3524 = vmatprep.subr.mxu0 0.0
    %3525 = vmatpush2.xpose.msra.mxu0 0.0
    %3526 = vmatprep.subr.mxu0 0.0
    %3527 = vmatpush2.xpose.msra.mxu0 0.0
    %3528 = vmatprep.subr.mxu0 0.0
    %3529 = vmatpush2.xpose.msra.mxu0 0.0
    %3530 = vmatprep.subr.mxu0 0.0
    %3531 = vmatpush2.xpose.msra.mxu0 0.0
    %3532 = vmatprep.mubr.f32.mxu0 0.0
    %3533 = vmatmul.mubr.f32.gmra.mxu0 %v3464
    %v3534 = vpop.f32.mrf.mxu0
    %v3535 = vadd.f32 0.0, %v3534
    %v3536 = vpop.f32.mrf.mxu0
    %3537 = vdwg.mxu0
    %3538 = vrot.lane.b32.xlu0 %v2457, 104
    %v3539 = vpop.permute.xlu0 %3538
    %3540 = vrot.lane.b32.xlu0 %v2457, 72
    %v3541 = vpop.permute.xlu0 %3540
    %v3542 = vsel %vm339, %v3539, 0
    %v3544 = vsel %vm339, %v3541, 0
    %3546 = vmatprep.subr.mxu0 0.0
    %3547 = vmatpush1.xpose.msra.mxu0 0.0
    %3548 = vmatprep.subr.mxu0 0.0
    %3549 = vmatpush1.xpose.msra.mxu0 0.0
    %3550 = vmatprep.subr.mxu0 0.0
    %3551 = vmatpush1.xpose.msra.mxu0 0.0
    %3552 = vmatprep.subr.mxu0 0.0
    %3553 = vmatpush1.xpose.msra.mxu0 0.0
    %3554 = vmatprep.subr.mxu0 0.0
    %3555 = vmatpush1.xpose.msra.mxu0 0.0
    %3556 = vmatprep.subr.mxu0 0.0
    %3557 = vmatpush1.xpose.msra.mxu0 0.0
    %3558 = vmatprep.subr.mxu0 0.0
    %3559 = vmatpush1.xpose.msra.mxu0 0.0
    %3560 = vmatprep.subr.mxu0 0.0
    %3561 = vmatpush1.xpose.msra.mxu0 0.0
    %3562 = vmatprep.subr.mxu0 0.0
    %3563 = vmatpush1.xpose.msra.mxu0 0.0
    %3564 = vmatprep.subr.mxu0 0.0
    %3565 = vmatpush1.xpose.msra.mxu0 0.0
    %3566 = vmatprep.subr.mxu0 0.0
    %3567 = vmatpush1.xpose.msra.mxu0 0.0
    %3568 = vmatprep.subr.mxu0 0.0
    %3569 = vmatpush1.xpose.msra.mxu0 0.0
    %3570 = vmatprep.subr.mxu0 0.0
    %3571 = vmatpush1.xpose.msra.mxu0 0.0
    %3572 = vmatprep.subr.mxu0 0.0
    %3573 = vmatpush1.xpose.msra.mxu0 0.0
    %3574 = vmatprep.subr.mxu0 0.0
    %3575 = vmatpush1.xpose.msra.mxu0 0.0
    %3576 = vmatprep.subr.mxu0 0.0
    %3577 = vmatpush1.xpose.msra.mxu0 %v3544
    %3578 = vmatprep.subr.mxu0 0.0
    %3579 = vmatpush2.xpose.msra.mxu0 0.0
    %3580 = vmatprep.subr.mxu0 0.0
    %3581 = vmatpush2.xpose.msra.mxu0 0.0
    %3582 = vmatprep.subr.mxu0 0.0
    %3583 = vmatpush2.xpose.msra.mxu0 0.0
    %3584 = vmatprep.subr.mxu0 0.0
    %3585 = vmatpush2.xpose.msra.mxu0 0.0
    %3586 = vmatprep.subr.mxu0 0.0
    %3587 = vmatpush2.xpose.msra.mxu0 0.0
    %3588 = vmatprep.subr.mxu0 0.0
    %3589 = vmatpush2.xpose.msra.mxu0 0.0
    %3590 = vmatprep.subr.mxu0 0.0
    %3591 = vmatpush2.xpose.msra.mxu0 0.0
    %3592 = vmatprep.subr.mxu0 0.0
    %3593 = vmatpush2.xpose.msra.mxu0 0.0
    %3594 = vmatprep.subr.mxu0 0.0
    %3595 = vmatpush2.xpose.msra.mxu0 0.0
    %3596 = vmatprep.subr.mxu0 0.0
    %3597 = vmatpush2.xpose.msra.mxu0 0.0
    %3598 = vmatprep.subr.mxu0 0.0
    %3599 = vmatpush2.xpose.msra.mxu0 0.0
    %3600 = vmatprep.subr.mxu0 0.0
    %3601 = vmatpush2.xpose.msra.mxu0 0.0
    %3602 = vmatprep.subr.mxu0 0.0
    %3603 = vmatpush2.xpose.msra.mxu0 0.0
    %3604 = vmatprep.subr.mxu0 0.0
    %3605 = vmatpush2.xpose.msra.mxu0 0.0
    %3606 = vmatprep.subr.mxu0 0.0
    %3607 = vmatpush2.xpose.msra.mxu0 0.0
    %3608 = vmatprep.subr.mxu0 0.0
    %3609 = vmatpush2.xpose.msra.mxu0 0.0
    %3610 = vmatprep.mubr.f32.mxu0 0.0
    %3611 = vmatmul.mubr.f32.gmra.mxu0 %v3542
    %v3612 = vpop.f32.mrf.mxu0
    %v3613 = vadd.f32 0.0, %v3612
    %v3614 = vpop.f32.mrf.mxu0
    %3615 = vdwg.mxu0
    %v3616 = vmul.f32 %v3535, 0.35355338
    %v3617 = vmul.f32 %v3613, 0.35355338
    %v3618 = vadd.f32 %v3616, %v153
    %v3619 = vadd.f32 %v3617, %v153
    %v3620 = vsel %vm339, %v3618, -inf
    %3621 = vmax.xlane.f32.xlu0 %v3620
    %v3622 = vpop.xlane.xlu0 %3621
    %v3623 = vsel %vm339, %v3619, -inf
    %3624 = vmax.xlane.f32.xlu0 %v3623
    %v3625 = vpop.xlane.xlu0 %3624
    %v3626 = vsub.f32 %v3618, %v3622
    %v3627 = vsub.f32 %v3619, %v3625
    %v3628 = vmul.f32 %v3626, 1.442695
    %v3629 = vpow.pop %v3628
    %v3630 = vmul.f32 %v3627, 1.442695
    %v3631 = vpow.pop %v3630
    %v3632 = vsel %vm339, %v3629, 0.0
    %3633 = vadd.xlane.f32.xlu0 %v3632
    %v3634 = vpop.xlane.xlu0 %3633
    %v3635 = vsel %vm339, %v3631, 0.0
    %3636 = vadd.xlane.f32.xlu0 %v3635
    %v3637 = vpop.xlane.xlu0 %3636
    %v3638 = vrcp.pop %v3634
    %v3639 = vmul.f32 %v3629, %v3638
    %v3640 = vrcp.pop %v3637
    %v3641 = vmul.f32 %v3631, %v3640
    %3642 = vrot.lane.b32.xlu0 %v2452, 40
    %v3643 = vpop.permute.xlu0 %3642
    %v3646 = vsel %vm339, %v3639, 0
    %3648 = vmatprep.subr.mxu0 0.0
    %3649 = vmatpush1.msra.mxu0 0.0
    %3650 = vmatprep.subr.mxu0 0.0
    %3651 = vmatpush1.msra.mxu0 0.0
    %3652 = vmatprep.subr.mxu0 0.0
    %3653 = vmatpush1.msra.mxu0 0.0
    %3654 = vmatprep.subr.mxu0 0.0
    %3655 = vmatpush1.msra.mxu0 0.0
    %3656 = vmatprep.subr.mxu0 0.0
    %3657 = vmatpush1.msra.mxu0 0.0
    %3658 = vmatprep.subr.mxu0 0.0
    %3659 = vmatpush1.msra.mxu0 0.0
    %3660 = vmatprep.subr.mxu0 0.0
    %3661 = vmatpush1.msra.mxu0 0.0
    %3662 = vmatprep.subr.mxu0 0.0
    %3663 = vmatpush1.msra.mxu0 0.0
    %3664 = vmatprep.subr.mxu0 0.0
    %3665 = vmatpush1.msra.mxu0 0.0
    %3666 = vmatprep.subr.mxu0 0.0
    %3667 = vmatpush1.msra.mxu0 0.0
    %3668 = vmatprep.subr.mxu0 0.0
    %3669 = vmatpush1.msra.mxu0 0.0
    %3670 = vmatprep.subr.mxu0 0.0
    %3671 = vmatpush1.msra.mxu0 0.0
    %3672 = vmatprep.subr.mxu0 0.0
    %3673 = vmatpush1.msra.mxu0 0.0
    %3674 = vmatprep.subr.mxu0 0.0
    %3675 = vmatpush1.msra.mxu0 0.0
    %3676 = vmatprep.subr.mxu0 0.0
    %3677 = vmatpush1.msra.mxu0 0.0
    %3678 = vmatprep.subr.mxu0 0.0
    %3679 = vmatpush1.msra.mxu0 %v3643
    %3680 = vmatprep.subr.mxu0 0.0
    %3681 = vmatpush2.msra.mxu0 0.0
    %3682 = vmatprep.subr.mxu0 0.0
    %3683 = vmatpush2.msra.mxu0 0.0
    %3684 = vmatprep.subr.mxu0 0.0
    %3685 = vmatpush2.msra.mxu0 0.0
    %3686 = vmatprep.subr.mxu0 0.0
    %3687 = vmatpush2.msra.mxu0 0.0
    %3688 = vmatprep.subr.mxu0 0.0
    %3689 = vmatpush2.msra.mxu0 0.0
    %3690 = vmatprep.subr.mxu0 0.0
    %3691 = vmatpush2.msra.mxu0 0.0
    %3692 = vmatprep.subr.mxu0 0.0
    %3693 = vmatpush2.msra.mxu0 0.0
    %3694 = vmatprep.subr.mxu0 0.0
    %3695 = vmatpush2.msra.mxu0 0.0
    %3696 = vmatprep.subr.mxu0 0.0
    %3697 = vmatpush2.msra.mxu0 0.0
    %3698 = vmatprep.subr.mxu0 0.0
    %3699 = vmatpush2.msra.mxu0 0.0
    %3700 = vmatprep.subr.mxu0 0.0
    %3701 = vmatpush2.msra.mxu0 0.0
    %3702 = vmatprep.subr.mxu0 0.0
    %3703 = vmatpush2.msra.mxu0 0.0
    %3704 = vmatprep.subr.mxu0 0.0
    %3705 = vmatpush2.msra.mxu0 0.0
    %3706 = vmatprep.subr.mxu0 0.0
    %3707 = vmatpush2.msra.mxu0 0.0
    %3708 = vmatprep.subr.mxu0 0.0
    %3709 = vmatpush2.msra.mxu0 0.0
    %3710 = vmatprep.subr.mxu0 0.0
    %3711 = vmatpush2.msra.mxu0 0.0
    %3712 = vmatprep.mubr.f32.mxu0 0.0
    %3713 = vmatmul.mubr.f32.gmra.mxu0 %v3646
    %v3714 = vpop.f32.mrf.mxu0
    %v3715 = vadd.f32 0.0, %v3714
    %v3716 = vpop.f32.mrf.mxu0
    %3717 = vdwg.mxu0
    %3718 = vrot.lane.b32.xlu0 %v2457, 40
    %v3719 = vpop.permute.xlu0 %3718
    %v3722 = vsel %vm339, %v3641, 0
    %3724 = vmatprep.subr.mxu0 0.0
    %3725 = vmatpush1.msra.mxu0 0.0
    %3726 = vmatprep.subr.mxu0 0.0
    %3727 = vmatpush1.msra.mxu0 0.0
    %3728 = vmatprep.subr.mxu0 0.0
    %3729 = vmatpush1.msra.mxu0 0.0
    %3730 = vmatprep.subr.mxu0 0.0
    %3731 = vmatpush1.msra.mxu0 0.0
    %3732 = vmatprep.subr.mxu0 0.0
    %3733 = vmatpush1.msra.mxu0 0.0
    %3734 = vmatprep.subr.mxu0 0.0
    %3735 = vmatpush1.msra.mxu0 0.0
    %3736 = vmatprep.subr.mxu0 0.0
    %3737 = vmatpush1.msra.mxu0 0.0
    %3738 = vmatprep.subr.mxu0 0.0
    %3739 = vmatpush1.msra.mxu0 0.0
    %3740 = vmatprep.subr.mxu0 0.0
    %3741 = vmatpush1.msra.mxu0 0.0
    %3742 = vmatprep.subr.mxu0 0.0
    %3743 = vmatpush1.msra.mxu0 0.0
    %3744 = vmatprep.subr.mxu0 0.0
    %3745 = vmatpush1.msra.mxu0 0.0
    %3746 = vmatprep.subr.mxu0 0.0
    %3747 = vmatpush1.msra.mxu0 0.0
    %3748 = vmatprep.subr.mxu0 0.0
    %3749 = vmatpush1.msra.mxu0 0.0
    %3750 = vmatprep.subr.mxu0 0.0
    %3751 = vmatpush1.msra.mxu0 0.0
    %3752 = vmatprep.subr.mxu0 0.0
    %3753 = vmatpush1.msra.mxu0 0.0
    %3754 = vmatprep.subr.mxu0 0.0
    %3755 = vmatpush1.msra.mxu0 %v3719
    %3756 = vmatprep.subr.mxu0 0.0
    %3757 = vmatpush2.msra.mxu0 0.0
    %3758 = vmatprep.subr.mxu0 0.0
    %3759 = vmatpush2.msra.mxu0 0.0
    %3760 = vmatprep.subr.mxu0 0.0
    %3761 = vmatpush2.msra.mxu0 0.0
    %3762 = vmatprep.subr.mxu0 0.0
    %3763 = vmatpush2.msra.mxu0 0.0
    %3764 = vmatprep.subr.mxu0 0.0
    %3765 = vmatpush2.msra.mxu0 0.0
    %3766 = vmatprep.subr.mxu0 0.0
    %3767 = vmatpush2.msra.mxu0 0.0
    %3768 = vmatprep.subr.mxu0 0.0
    %3769 = vmatpush2.msra.mxu0 0.0
    %3770 = vmatprep.subr.mxu0 0.0
    %3771 = vmatpush2.msra.mxu0 0.0
    %3772 = vmatprep.subr.mxu0 0.0
    %3773 = vmatpush2.msra.mxu0 0.0
    %3774 = vmatprep.subr.mxu0 0.0
    %3775 = vmatpush2.msra.mxu0 0.0
    %3776 = vmatprep.subr.mxu0 0.0
    %3777 = vmatpush2.msra.mxu0 0.0
    %3778 = vmatprep.subr.mxu0 0.0
    %3779 = vmatpush2.msra.mxu0 0.0
    %3780 = vmatprep.subr.mxu0 0.0
    %3781 = vmatpush2.msra.mxu0 0.0
    %3782 = vmatprep.subr.mxu0 0.0
    %3783 = vmatpush2.msra.mxu0 0.0
    %3784 = vmatprep.subr.mxu0 0.0
    %3785 = vmatpush2.msra.mxu0 0.0
    %3786 = vmatprep.subr.mxu0 0.0
    %3787 = vmatpush2.msra.mxu0 0.0
    %3788 = vmatprep.mubr.f32.mxu0 0.0
    %3789 = vmatmul.mubr.f32.gmra.mxu0 %v3722
    %v3790 = vpop.f32.mrf.mxu0
    %v3791 = vadd.f32 0.0, %v3790
    %v3792 = vpop.f32.mrf.mxu0
    %3793 = vdwg.mxu0
    %3796 = vrot.lane.b32.xlu0 %v3047, 8
    %v3797 = vpop.permute.xlu0 %3796
    %3798 = vrot.lane.b32.xlu0 %v3123, 8
    %v3799 = vpop.permute.xlu0 %3798
    %3804 = vrot.lane.b32.xlu0 %v3381, 16
    %v3805 = vpop.permute.xlu0 %3804
    %3806 = vrot.lane.b32.xlu0 %v3457, 16
    %v3807 = vpop.permute.xlu0 %3806
    %3812 = vrot.lane.b32.xlu0 %v3715, 24
    %v3813 = vpop.permute.xlu0 %3812
    %3814 = vrot.lane.b32.xlu0 %v3791, 24
    %v3815 = vpop.permute.xlu0 %3814
    %v3818 = vsel %vm339, %v2713, %v3797
    %v3819 = vsel %vm339, %v2789, %v3799
    %v3820 = vsel %vm1697, %v3818, %v3805
    %v3821 = vsel %vm1697, %v3819, %v3807
    %v3822 = vsel %vm1700, %v3820, %v3813
    %v3823 = vsel %vm1700, %v3821, %v3815
    %v3825 = vsel %vm211, %v3822, 0
    %v3828 = vsel %vm211, %v3823, 0
    %3830 = vmatprep.subr.mxu0 0.0
    %3831 = vmatpush1.msra.mxu0 0.0
    %3832 = vmatprep.subr.mxu0 0.0
    %3833 = vmatpush1.msra.mxu0 0.0
    %3834 = vmatprep.subr.mxu0 0.0
    %3835 = vmatpush1.msra.mxu0 0.0
    %3836 = vmatprep.subr.mxu0 0.0
    %3837 = vmatpush1.msra.mxu0 0.0
    %3838 = vmatprep.subr.mxu0 0.0
    %3839 = vmatpush1.msra.mxu0 0.0
    %3840 = vmatprep.subr.mxu0 0.0
    %3841 = vmatpush1.msra.mxu0 0.0
    %3842 = vmatprep.subr.mxu0 0.0
    %3843 = vmatpush1.msra.mxu0 0.0
    %3844 = vmatprep.subr.mxu0 0.0
    %3845 = vmatpush1.msra.mxu0 0.0
    %3846 = vmatprep.subr.mxu0 0.0
    %3847 = vmatpush1.msra.mxu0 0.0
    %3848 = vmatprep.subr.mxu0 0.0
    %3849 = vmatpush1.msra.mxu0 0.0
    %3850 = vmatprep.subr.mxu0 0.0
    %3851 = vmatpush1.msra.mxu0 0.0
    %3852 = vmatprep.subr.mxu0 0.0
    %3853 = vmatpush1.msra.mxu0 0.0
    %3854 = vmatprep.subr.mxu0 0.0
    %3855 = vmatpush1.msra.mxu0 %v2294
    %3856 = vmatprep.subr.mxu0 0.0
    %3857 = vmatpush1.msra.mxu0 %v2293
    %3858 = vmatprep.subr.mxu0 0.0
    %3859 = vmatpush1.msra.mxu0 %v2292
    %3860 = vmatprep.subr.mxu0 0.0
    %3861 = vmatpush1.msra.mxu0 %v2291
    %3862 = vmatprep.subr.mxu0 0.0
    %3863 = vmatpush2.msra.mxu0 0.0
    %3864 = vmatprep.subr.mxu0 0.0
    %3865 = vmatpush2.msra.mxu0 0.0
    %3866 = vmatprep.subr.mxu0 0.0
    %3867 = vmatpush2.msra.mxu0 0.0
    %3868 = vmatprep.subr.mxu0 0.0
    %3869 = vmatpush2.msra.mxu0 0.0
    %3870 = vmatprep.subr.mxu0 0.0
    %3871 = vmatpush2.msra.mxu0 0.0
    %3872 = vmatprep.subr.mxu0 0.0
    %3873 = vmatpush2.msra.mxu0 0.0
    %3874 = vmatprep.subr.mxu0 0.0
    %3875 = vmatpush2.msra.mxu0 0.0
    %3876 = vmatprep.subr.mxu0 0.0
    %3877 = vmatpush2.msra.mxu0 0.0
    %3878 = vmatprep.subr.mxu0 0.0
    %3879 = vmatpush2.msra.mxu0 0.0
    %3880 = vmatprep.subr.mxu0 0.0
    %3881 = vmatpush2.msra.mxu0 0.0
    %3882 = vmatprep.subr.mxu0 0.0
    %3883 = vmatpush2.msra.mxu0 0.0
    %3884 = vmatprep.subr.mxu0 0.0
    %3885 = vmatpush2.msra.mxu0 0.0
    %3886 = vmatprep.subr.mxu0 0.0
    %3887 = vmatpush2.msra.mxu0 0.0
    %3888 = vmatprep.subr.mxu0 0.0
    %3889 = vmatpush2.msra.mxu0 0.0
    %3890 = vmatprep.subr.mxu0 0.0
    %3891 = vmatpush2.msra.mxu0 0.0
    %3892 = vmatprep.subr.mxu0 0.0
    %3893 = vmatpush2.msra.mxu0 0.0
    %3894 = vmatprep.mubr.f32.mxu0 0.0
    %3895 = vmatmul.mubr.f32.gmra.mxu0 %v3825
    %v3896 = vpop.f32.mrf.mxu0
    %v3897 = vadd.f32 0.0, %v3896
    %v3898 = vpop.f32.mrf.mxu0
    %3899 = vmatprep.mubr.f32.mxu0 0.0
    %3900 = vmatmul.mubr.f32.gmra.mxu0 %v3828
    %v3901 = vpop.f32.mrf.mxu0
    %v3902 = vadd.f32 0.0, %v3901
    %v3903 = vpop.f32.mrf.mxu0
    %3904 = vdwg.mxu0
    %v3905 = vadd.f32 %v2273, %v3897
    %v3906 = vadd.f32 %v2274, %v3902
    %v3907 = vlaneseq
    %v3908 = vshrl.u32 %v3907, 7
    %v3909 = vsub.s32 4, %v3908
    %v3910 = vrot.slane %v2276, %v3909
    %v3911 = vadd.f32 %v3905, %v3910
    %v3912 = vadd.f32 %v3906, %v3910
    %v3913 = vsel %vm211, %v3911, 0.0
    %3914 = vadd.xlane.f32.xlu0 %v3913
    %v3915 = vpop.xlane.xlu0 %3914
    %v3916 = vsel %vm211, %v3912, 0.0
    %3917 = vadd.xlane.f32.xlu0 %v3916
    %v3918 = vpop.xlane.xlu0 %3917
    %v3919 = vmul.f32 %v3915, %v218
    %v3920 = vmul.f32 %v3918, %v218
    %v3921 = vsub.f32 %v3911, %v3919
    %v3922 = vsub.f32 %v3912, %v3920
    %v3923 = vmul.f32 %v3921, %v3921
    %v3924 = vmul.f32 %v3922, %v3922
    %v3925 = vsel %vm211, %v3923, 0.0
    %3926 = vadd.xlane.f32.xlu0 %v3925
    %v3927 = vpop.xlane.xlu0 %3926
    %v3928 = vsel %vm211, %v3924, 0.0
    %3929 = vadd.xlane.f32.xlu0 %v3928
    %v3930 = vpop.xlane.xlu0 %3929
    %v3931 = vmul.f32 %v3927, %v218
    %v3932 = vmul.f32 %v3930, %v218
    %v3933 = vadd.f32 %v3931, 1e-05
    %v3934 = vadd.f32 %v3932, 1e-05
    %v3935 = vrsqrt.pop %v3933
    %v3936 = vrsqrt.pop %v3934
    %v3937 = vmul.f32 %v3921, %v3935
    %v3938 = vmul.f32 %v3922, %v3936
    %v3939 = vlaneseq
    %v3940 = vshrl.u32 %v3939, 7
    %v3941 = vsub.s32 2, %v3940
    %v3942 = vrot.slane %v2276, %v3941
    %v3943 = vmul.f32 %v3937, %v3942
    %v3944 = vmul.f32 %v3938, %v3942
    %v3945 = vlaneseq
    %v3946 = vshrl.u32 %v3945, 7
    %v3947 = vsub.s32 3, %v3946
    %v3948 = vrot.slane %v2276, %v3947
    %v3949 = vadd.f32 %v3943, %v3948
    %v3950 = vadd.f32 %v3944, %v3948
    %v3951 = vlaneseq
    %v3952 = vshrl.u32 %v3951, 7
    %v3953 = vsub.s32 6, %v3952
    %v3954 = vrot.slane %v2276, %v3953
    %v3956 = vsel %vm211, %v3949, 0
    %v3959 = vsel %vm211, %v3950, 0
    %3961 = vmatprep.subr.mxu0 0.0
    %3962 = vmatpush1.msra.mxu0 0.0
    %3963 = vmatprep.subr.mxu0 0.0
    %3964 = vmatpush1.msra.mxu0 0.0
    %3965 = vmatprep.subr.mxu0 0.0
    %3966 = vmatpush1.msra.mxu0 0.0
    %3967 = vmatprep.subr.mxu0 0.0
    %3968 = vmatpush1.msra.mxu0 0.0
    %3969 = vmatprep.subr.mxu0 0.0
    %3970 = vmatpush1.msra.mxu0 0.0
    %3971 = vmatprep.subr.mxu0 0.0
    %3972 = vmatpush1.msra.mxu0 0.0
    %3973 = vmatprep.subr.mxu0 0.0
    %3974 = vmatpush1.msra.mxu0 0.0
    %3975 = vmatprep.subr.mxu0 0.0
    %3976 = vmatpush1.msra.mxu0 0.0
    %3977 = vmatprep.subr.mxu0 0.0
    %3978 = vmatpush1.msra.mxu0 0.0
    %3979 = vmatprep.subr.mxu0 0.0
    %3980 = vmatpush1.msra.mxu0 0.0
    %3981 = vmatprep.subr.mxu0 0.0
    %3982 = vmatpush1.msra.mxu0 0.0
    %3983 = vmatprep.subr.mxu0 0.0
    %3984 = vmatpush1.msra.mxu0 0.0
    %3985 = vmatprep.subr.mxu0 0.0
    %3986 = vmatpush1.msra.mxu0 %v2303
    %3987 = vmatprep.subr.mxu0 0.0
    %3988 = vmatpush1.msra.mxu0 %v2302
    %3989 = vmatprep.subr.mxu0 0.0
    %3990 = vmatpush1.msra.mxu0 %v2301
    %3991 = vmatprep.subr.mxu0 0.0
    %3992 = vmatpush1.msra.mxu0 %v2300
    %3993 = vmatprep.subr.mxu0 0.0
    %3994 = vmatpush2.msra.mxu0 0.0
    %3995 = vmatprep.subr.mxu0 0.0
    %3996 = vmatpush2.msra.mxu0 0.0
    %3997 = vmatprep.subr.mxu0 0.0
    %3998 = vmatpush2.msra.mxu0 0.0
    %3999 = vmatprep.subr.mxu0 0.0
    %4000 = vmatpush2.msra.mxu0 0.0
    %4001 = vmatprep.subr.mxu0 0.0
    %4002 = vmatpush2.msra.mxu0 0.0
    %4003 = vmatprep.subr.mxu0 0.0
    %4004 = vmatpush2.msra.mxu0 0.0
    %4005 = vmatprep.subr.mxu0 0.0
    %4006 = vmatpush2.msra.mxu0 0.0
    %4007 = vmatprep.subr.mxu0 0.0
    %4008 = vmatpush2.msra.mxu0 0.0
    %4009 = vmatprep.subr.mxu0 0.0
    %4010 = vmatpush2.msra.mxu0 0.0
    %4011 = vmatprep.subr.mxu0 0.0
    %4012 = vmatpush2.msra.mxu0 0.0
    %4013 = vmatprep.subr.mxu0 0.0
    %4014 = vmatpush2.msra.mxu0 0.0
    %4015 = vmatprep.subr.mxu0 0.0
    %4016 = vmatpush2.msra.mxu0 0.0
    %4017 = vmatprep.subr.mxu0 0.0
    %4018 = vmatpush2.msra.mxu0 0.0
    %4019 = vmatprep.subr.mxu0 0.0
    %4020 = vmatpush2.msra.mxu0 0.0
    %4021 = vmatprep.subr.mxu0 0.0
    %4022 = vmatpush2.msra.mxu0 0.0
    %4023 = vmatprep.subr.mxu0 0.0
    %4024 = vmatpush2.msra.mxu0 0.0
    %4025 = vmatprep.mubr.f32.mxu0 0.0
    %4026 = vmatmul.mubr.f32.gmra.mxu0 %v3956
    %v4027 = vpop.f32.mrf.mxu0
    %v4028 = vadd.f32 %v3954, %v4027
    %v4029 = vpop.f32.mrf.mxu0
    %4030 = vmatprep.mubr.f32.mxu0 0.0
    %4031 = vmatmul.mubr.f32.gmra.mxu0 %v3959
    %v4032 = vpop.f32.mrf.mxu0
    %v4033 = vadd.f32 %v3954, %v4032
    %v4034 = vpop.f32.mrf.mxu0
    %4035 = vdwg.mxu0
    %4036 = vmax.xlane.f32.xlu0 %v4028
    %v4037 = vpop.xlane.xlu0 %4036
    %4038 = vmax.xlane.f32.xlu0 %v4033
    %v4039 = vpop.xlane.xlu0 %4038
    %vm4040 = vcmp.ge.f32.partialorder %v4028, %v4037
    %vm4041 = vcmp.ge.f32.partialorder %v4033, %v4039
    %v4042 = vsel %vm4040, -1e+30, %v4028
    %v4043 = vsel %vm4041, -1e+30, %v4033
    %4044 = vmax.xlane.f32.xlu0 %v4042
    %v4045 = vpop.xlane.xlu0 %4044
    %4046 = vmax.xlane.f32.xlu0 %v4043
    %v4047 = vpop.xlane.xlu0 %4046
    %vm4048 = vcmp.ge.f32.partialorder %v4042, %v4045
    %vm4049 = vcmp.ge.f32.partialorder %v4043, %v4047
    %v4050 = vsel %vm4048, -1e+30, %v4042
    %v4051 = vsel %vm4049, -1e+30, %v4043
    %4052 = vmax.xlane.f32.xlu0 %v4050
    %v4053 = vpop.xlane.xlu0 %4052
    %4054 = vmax.xlane.f32.xlu0 %v4051
    %v4055 = vpop.xlane.xlu0 %4054
    %vm4056 = vcmp.ge.f32.partialorder %v4050, %v4053
    %vm4057 = vcmp.ge.f32.partialorder %v4051, %v4055
    %v4058 = vsel %vm4056, -1e+30, %v4050
    %v4059 = vsel %vm4057, -1e+30, %v4051
    %4060 = vmax.xlane.f32.xlu0 %v4058
    %v4061 = vpop.xlane.xlu0 %4060
    %4062 = vmax.xlane.f32.xlu0 %v4059
    %v4063 = vpop.xlane.xlu0 %4062
    %vm4064 = vcmp.ge.f32.partialorder %v4058, %v4061
    %vm4065 = vcmp.ge.f32.partialorder %v4059, %v4063
    %v4066 = vsel %vm4064, -1e+30, %v4058
    %v4067 = vsel %vm4065, -1e+30, %v4059
    %4068 = vmax.xlane.f32.xlu0 %v4066
    %v4069 = vpop.xlane.xlu0 %4068
    %4070 = vmax.xlane.f32.xlu0 %v4067
    %v4071 = vpop.xlane.xlu0 %4070
    %vm4072 = vcmp.ge.f32.partialorder %v4066, %v4069
    %vm4073 = vcmp.ge.f32.partialorder %v4067, %v4071
    %v4074 = vsel %vm4072, -1e+30, %v4066
    %v4075 = vsel %vm4073, -1e+30, %v4067
    %4076 = vmax.xlane.f32.xlu0 %v4074
    %v4077 = vpop.xlane.xlu0 %4076
    %4078 = vmax.xlane.f32.xlu0 %v4075
    %v4079 = vpop.xlane.xlu0 %4078
    %vm4080 = vcmp.ge.f32.partialorder %v4074, %v4077
    %vm4081 = vcmp.ge.f32.partialorder %v4075, %v4079
    %v4082 = vsel %vm4080, -1e+30, %v4074
    %v4083 = vsel %vm4081, -1e+30, %v4075
    %4084 = vmax.xlane.f32.xlu0 %v4082
    %v4085 = vpop.xlane.xlu0 %4084
    %4086 = vmax.xlane.f32.xlu0 %v4083
    %v4087 = vpop.xlane.xlu0 %4086
    %vm4088 = vcmp.ge.f32.partialorder %v4082, %v4085
    %vm4089 = vcmp.ge.f32.partialorder %v4083, %v4087
    %v4090 = vsel %vm4088, -1e+30, %v4082
    %v4091 = vsel %vm4089, -1e+30, %v4083
    %4092 = vmax.xlane.f32.xlu0 %v4090
    %v4093 = vpop.xlane.xlu0 %4092
    %4094 = vmax.xlane.f32.xlu0 %v4091
    %v4095 = vpop.xlane.xlu0 %4094
    %vm4096 = vcmp.ge.f32.partialorder %v4090, %v4093
    %vm4097 = vcmp.ge.f32.partialorder %v4091, %v4095
    %v4098 = vsel %vm4096, -1e+30, %v4090
    %v4099 = vsel %vm4097, -1e+30, %v4091
    %4100 = vmax.xlane.f32.xlu0 %v4098
    %v4101 = vpop.xlane.xlu0 %4100
    %4102 = vmax.xlane.f32.xlu0 %v4099
    %v4103 = vpop.xlane.xlu0 %4102
    %vm4104 = vcmp.ge.f32.partialorder %v4098, %v4101
    %vm4105 = vcmp.ge.f32.partialorder %v4099, %v4103
    %v4106 = vsel %vm4104, -1e+30, %v4098
    %v4107 = vsel %vm4105, -1e+30, %v4099
    %4108 = vmax.xlane.f32.xlu0 %v4106
    %v4109 = vpop.xlane.xlu0 %4108
    %4110 = vmax.xlane.f32.xlu0 %v4107
    %v4111 = vpop.xlane.xlu0 %4110
    %vm4112 = vcmp.ge.f32.partialorder %v4106, %v4109
    %vm4113 = vcmp.ge.f32.partialorder %v4107, %v4111
    %v4114 = vsel %vm4112, -1e+30, %v4106
    %v4115 = vsel %vm4113, -1e+30, %v4107
    %4116 = vmax.xlane.f32.xlu0 %v4114
    %v4117 = vpop.xlane.xlu0 %4116
    %4118 = vmax.xlane.f32.xlu0 %v4115
    %v4119 = vpop.xlane.xlu0 %4118
    %vm4120 = vcmp.ge.f32.partialorder %v4114, %v4117
    %vm4121 = vcmp.ge.f32.partialorder %v4115, %v4119
    %v4122 = vsel %vm4120, -1e+30, %v4114
    %v4123 = vsel %vm4121, -1e+30, %v4115
    %4124 = vmax.xlane.f32.xlu0 %v4122
    %v4125 = vpop.xlane.xlu0 %4124
    %4126 = vmax.xlane.f32.xlu0 %v4123
    %v4127 = vpop.xlane.xlu0 %4126
    %vm4128 = vcmp.ge.f32.partialorder %v4122, %v4125
    %vm4129 = vcmp.ge.f32.partialorder %v4123, %v4127
    %v4130 = vsel %vm4128, -1e+30, %v4122
    %v4131 = vsel %vm4129, -1e+30, %v4123
    %4132 = vmax.xlane.f32.xlu0 %v4130
    %v4133 = vpop.xlane.xlu0 %4132
    %4134 = vmax.xlane.f32.xlu0 %v4131
    %v4135 = vpop.xlane.xlu0 %4134
    %vm4136 = vcmp.ge.f32.partialorder %v4130, %v4133
    %vm4137 = vcmp.ge.f32.partialorder %v4131, %v4135
    %v4138 = vsel %vm4136, -1e+30, %v4130
    %v4139 = vsel %vm4137, -1e+30, %v4131
    %4140 = vmax.xlane.f32.xlu0 %v4138
    %v4141 = vpop.xlane.xlu0 %4140
    %4142 = vmax.xlane.f32.xlu0 %v4139
    %v4143 = vpop.xlane.xlu0 %4142
    %vm4144 = vcmp.ge.f32.partialorder %v4138, %v4141
    %vm4145 = vcmp.ge.f32.partialorder %v4139, %v4143
    %v4146 = vsel %vm4144, -1e+30, %v4138
    %v4147 = vsel %vm4145, -1e+30, %v4139
    %4148 = vmax.xlane.f32.xlu0 %v4146
    %v4149 = vpop.xlane.xlu0 %4148
    %4150 = vmax.xlane.f32.xlu0 %v4147
    %v4151 = vpop.xlane.xlu0 %4150
    %vm4152 = vcmp.ge.f32.partialorder %v4146, %v4149
    %vm4153 = vcmp.ge.f32.partialorder %v4147, %v4151
    %v4154 = vsel %vm4152, -1e+30, %v4146
    %v4155 = vsel %vm4153, -1e+30, %v4147
    %4156 = vmax.xlane.f32.xlu0 %v4154
    %v4157 = vpop.xlane.xlu0 %4156
    %4158 = vmax.xlane.f32.xlu0 %v4155
    %v4159 = vpop.xlane.xlu0 %4158
    %vm4160 = vcmp.ge.f32.partialorder %v4154, %v4157
    %vm4161 = vcmp.ge.f32.partialorder %v4155, %v4159
    %v4162 = vsel %vm4160, -1e+30, %v4154
    %v4163 = vsel %vm4161, -1e+30, %v4155
    %4164 = vmax.xlane.f32.xlu0 %v4162
    %v4165 = vpop.xlane.xlu0 %4164
    %4166 = vmax.xlane.f32.xlu0 %v4163
    %v4167 = vpop.xlane.xlu0 %4166
    %vm4168 = vcmp.ge.f32.partialorder %v4162, %v4165
    %vm4169 = vcmp.ge.f32.partialorder %v4163, %v4167
    %v4170 = vsel %vm4168, -1e+30, %v4162
    %v4171 = vsel %vm4169, -1e+30, %v4163
    %4172 = vmax.xlane.f32.xlu0 %v4170
    %v4173 = vpop.xlane.xlu0 %4172
    %4174 = vmax.xlane.f32.xlu0 %v4171
    %v4175 = vpop.xlane.xlu0 %4174
    %vm4176 = vcmp.ge.f32.partialorder %v4170, %v4173
    %vm4177 = vcmp.ge.f32.partialorder %v4171, %v4175
    %v4178 = vsel %vm4176, -1e+30, %v4170
    %v4179 = vsel %vm4177, -1e+30, %v4171
    %4180 = vmax.xlane.f32.xlu0 %v4178
    %v4181 = vpop.xlane.xlu0 %4180
    %4182 = vmax.xlane.f32.xlu0 %v4179
    %v4183 = vpop.xlane.xlu0 %4182
    %vm4184 = vcmp.ge.f32.partialorder %v4178, %v4181
    %vm4185 = vcmp.ge.f32.partialorder %v4179, %v4183
    %v4186 = vsel %vm4184, -1e+30, %v4178
    %v4187 = vsel %vm4185, -1e+30, %v4179
    %4188 = vmax.xlane.f32.xlu0 %v4186
    %v4189 = vpop.xlane.xlu0 %4188
    %4190 = vmax.xlane.f32.xlu0 %v4187
    %v4191 = vpop.xlane.xlu0 %4190
    %vm4192 = vcmp.ge.f32.partialorder %v4186, %v4189
    %vm4193 = vcmp.ge.f32.partialorder %v4187, %v4191
    %v4194 = vsel %vm4192, -1e+30, %v4186
    %v4195 = vsel %vm4193, -1e+30, %v4187
    %4196 = vmax.xlane.f32.xlu0 %v4194
    %v4197 = vpop.xlane.xlu0 %4196
    %4198 = vmax.xlane.f32.xlu0 %v4195
    %v4199 = vpop.xlane.xlu0 %4198
    %vm4200 = vcmp.ge.f32.partialorder %v4194, %v4197
    %vm4201 = vcmp.ge.f32.partialorder %v4195, %v4199
    %v4202 = vsel %vm4200, -1e+30, %v4194
    %v4203 = vsel %vm4201, -1e+30, %v4195
    %4204 = vmax.xlane.f32.xlu0 %v4202
    %v4205 = vpop.xlane.xlu0 %4204
    %4206 = vmax.xlane.f32.xlu0 %v4203
    %v4207 = vpop.xlane.xlu0 %4206
    %vm4208 = vcmp.ge.f32.partialorder %v4202, %v4205
    %vm4209 = vcmp.ge.f32.partialorder %v4203, %v4207
    %v4210 = vsel %vm4208, -1e+30, %v4202
    %v4211 = vsel %vm4209, -1e+30, %v4203
    %4212 = vmax.xlane.f32.xlu0 %v4210
    %v4213 = vpop.xlane.xlu0 %4212
    %4214 = vmax.xlane.f32.xlu0 %v4211
    %v4215 = vpop.xlane.xlu0 %4214
    %vm4216 = vcmp.ge.f32.partialorder %v4210, %v4213
    %vm4217 = vcmp.ge.f32.partialorder %v4211, %v4215
    %v4218 = vsel %vm4216, -1e+30, %v4210
    %v4219 = vsel %vm4217, -1e+30, %v4211
    %4220 = vmax.xlane.f32.xlu0 %v4218
    %v4221 = vpop.xlane.xlu0 %4220
    %4222 = vmax.xlane.f32.xlu0 %v4219
    %v4223 = vpop.xlane.xlu0 %4222
    %vm4224 = vcmp.ge.f32.partialorder %v4218, %v4221
    %vm4225 = vcmp.ge.f32.partialorder %v4219, %v4223
    %v4226 = vsel %vm4224, -1e+30, %v4218
    %v4227 = vsel %vm4225, -1e+30, %v4219
    %4228 = vmax.xlane.f32.xlu0 %v4226
    %v4229 = vpop.xlane.xlu0 %4228
    %4230 = vmax.xlane.f32.xlu0 %v4227
    %v4231 = vpop.xlane.xlu0 %4230
    %vm4232 = vcmp.ge.f32.partialorder %v4226, %v4229
    %vm4233 = vcmp.ge.f32.partialorder %v4227, %v4231
    %v4234 = vsel %vm4232, -1e+30, %v4226
    %v4235 = vsel %vm4233, -1e+30, %v4227
    %4236 = vmax.xlane.f32.xlu0 %v4234
    %v4237 = vpop.xlane.xlu0 %4236
    %4238 = vmax.xlane.f32.xlu0 %v4235
    %v4239 = vpop.xlane.xlu0 %4238
    %vm4240 = vcmp.ge.f32.partialorder %v4028, %v4237
    %vm4241 = vcmp.ge.f32.partialorder %v4033, %v4239
    %v4242 = vsel %vm4240, %v4028, 0.0
    %v4243 = vsel %vm4241, %v4033, 0.0
    %v4244 = vmul.f32 %v4242, 0.5
    %v4245 = vmul.f32 %v4243, 0.5
    %v4246 = vmul.f32 %v4242, %v2125
    %v4247 = vmul.f32 %v4243, %v2125
    %v4248 = verf.f32.pop %v4246
    %v4249 = verf.f32.pop %v4247
    %v4250 = vadd.f32 %v4248, 1.0
    %v4251 = vadd.f32 %v4249, 1.0
    %v4252 = vmul.f32 %v4244, %v4250
    %v4253 = vmul.f32 %v4245, %v4251
    %v4254 = vlaneseq
    %v4255 = vshrl.u32 %v4254, 7
    %v4256 = vsub.s32 5, %v4255
    %v4257 = vrot.slane %v2276, %v4256
    %4258 = vmatprep.subr.mxu0 0.0
    %4259 = vmatpush1.msra.mxu0 %v2336
    %4260 = vmatprep.subr.mxu0 0.0
    %4261 = vmatpush1.msra.mxu0 %v2335
    %4262 = vmatprep.subr.mxu0 0.0
    %4263 = vmatpush1.msra.mxu0 %v2334
    %4264 = vmatprep.subr.mxu0 0.0
    %4265 = vmatpush1.msra.mxu0 %v2333
    %4266 = vmatprep.subr.mxu0 0.0
    %4267 = vmatpush1.msra.mxu0 %v2332
    %4268 = vmatprep.subr.mxu0 0.0
    %4269 = vmatpush1.msra.mxu0 %v2331
    %4270 = vmatprep.subr.mxu0 0.0
    %4271 = vmatpush1.msra.mxu0 %v2330
    %4272 = vmatprep.subr.mxu0 0.0
    %4273 = vmatpush1.msra.mxu0 %v2329
    %4274 = vmatprep.subr.mxu0 0.0
    %4275 = vmatpush1.msra.mxu0 %v2328
    %4276 = vmatprep.subr.mxu0 0.0
    %4277 = vmatpush1.msra.mxu0 %v2327
    %4278 = vmatprep.subr.mxu0 0.0
    %4279 = vmatpush1.msra.mxu0 %v2326
    %4280 = vmatprep.subr.mxu0 0.0
    %4281 = vmatpush1.msra.mxu0 %v2325
    %4282 = vmatprep.subr.mxu0 0.0
    %4283 = vmatpush1.msra.mxu0 %v2324
    %4284 = vmatprep.subr.mxu0 0.0
    %4285 = vmatpush1.msra.mxu0 %v2323
    %4286 = vmatprep.subr.mxu0 0.0
    %4287 = vmatpush1.msra.mxu0 %v2322
    %4288 = vmatprep.subr.mxu0 0.0
    %4289 = vmatpush1.msra.mxu0 %v2321
    %4290 = vmatprep.subr.mxu0 0.0
    %4291 = vmatpush2.msra.mxu0 0.0
    %4292 = vmatprep.subr.mxu0 0.0
    %4293 = vmatpush2.msra.mxu0 0.0
    %4294 = vmatprep.subr.mxu0 0.0
    %4295 = vmatpush2.msra.mxu0 0.0
    %4296 = vmatprep.subr.mxu0 0.0
    %4297 = vmatpush2.msra.mxu0 0.0
    %4298 = vmatprep.subr.mxu0 0.0
    %4299 = vmatpush2.msra.mxu0 0.0
    %4300 = vmatprep.subr.mxu0 0.0
    %4301 = vmatpush2.msra.mxu0 0.0
    %4302 = vmatprep.subr.mxu0 0.0
    %4303 = vmatpush2.msra.mxu0 0.0
    %4304 = vmatprep.subr.mxu0 0.0
    %4305 = vmatpush2.msra.mxu0 0.0
    %4306 = vmatprep.subr.mxu0 0.0
    %4307 = vmatpush2.msra.mxu0 0.0
    %4308 = vmatprep.subr.mxu0 0.0
    %4309 = vmatpush2.msra.mxu0 0.0
    %4310 = vmatprep.subr.mxu0 0.0
    %4311 = vmatpush2.msra.mxu0 0.0
    %4312 = vmatprep.subr.mxu0 0.0
    %4313 = vmatpush2.msra.mxu0 0.0
    %4314 = vmatprep.subr.mxu0 0.0
    %4315 = vmatpush2.msra.mxu0 0.0
    %4316 = vmatprep.subr.mxu0 0.0
    %4317 = vmatpush2.msra.mxu0 0.0
    %4318 = vmatprep.subr.mxu0 0.0
    %4319 = vmatpush2.msra.mxu0 0.0
    %4320 = vmatprep.subr.mxu0 0.0
    %4321 = vmatpush2.msra.mxu0 0.0
    %4322 = vmatprep.mubr.f32.mxu0 0.0
    %4323 = vmatmul.mubr.f32.gmra.mxu0 %v4252
    %v4324 = vpop.f32.mrf.mxu0
    %v4325 = vadd.f32 %v4257, %v4324
    %v4326 = vpop.f32.mrf.mxu0
    %4327 = vmatprep.mubr.f32.mxu0 0.0
    %4328 = vmatmul.mubr.f32.gmra.mxu0 %v4253
    %v4329 = vpop.f32.mrf.mxu0
    %v4330 = vadd.f32 %v4257, %v4329
    %v4331 = vpop.f32.mrf.mxu0
    %4332 = vdwg.mxu0
    %v4333 = vsel %vm211, %v4325, -inf
    %4334 = vmax.xlane.f32.xlu0 %v4333
    %v4335 = vpop.xlane.xlu0 %4334
    %v4336 = vsel %vm211, %v4330, -inf
    %4337 = vmax.xlane.f32.xlu0 %v4336
    %v4338 = vpop.xlane.xlu0 %4337
    %vm4339 = vcmp.ge.f32.partialorder %v4325, %v4335
    %vm4340 = vcmp.ge.f32.partialorder %v4330, %v4338
    %v4341 = vsel %vm4339, -1e+30, %v4325
    %v4342 = vsel %vm4340, -1e+30, %v4330
    %v4343 = vsel %vm211, %v4341, -inf
    %4344 = vmax.xlane.f32.xlu0 %v4343
    %v4345 = vpop.xlane.xlu0 %4344
    %v4346 = vsel %vm211, %v4342, -inf
    %4347 = vmax.xlane.f32.xlu0 %v4346
    %v4348 = vpop.xlane.xlu0 %4347
    %vm4349 = vcmp.ge.f32.partialorder %v4341, %v4345
    %vm4350 = vcmp.ge.f32.partialorder %v4342, %v4348
    %v4351 = vsel %vm4349, -1e+30, %v4341
    %v4352 = vsel %vm4350, -1e+30, %v4342
    %v4353 = vsel %vm211, %v4351, -inf
    %4354 = vmax.xlane.f32.xlu0 %v4353
    %v4355 = vpop.xlane.xlu0 %4354
    %v4356 = vsel %vm211, %v4352, -inf
    %4357 = vmax.xlane.f32.xlu0 %v4356
    %v4358 = vpop.xlane.xlu0 %4357
    %vm4359 = vcmp.ge.f32.partialorder %v4351, %v4355
    %vm4360 = vcmp.ge.f32.partialorder %v4352, %v4358
    %v4361 = vsel %vm4359, -1e+30, %v4351
    %v4362 = vsel %vm4360, -1e+30, %v4352
    %v4363 = vsel %vm211, %v4361, -inf
    %4364 = vmax.xlane.f32.xlu0 %v4363
    %v4365 = vpop.xlane.xlu0 %4364
    %v4366 = vsel %vm211, %v4362, -inf
    %4367 = vmax.xlane.f32.xlu0 %v4366
    %v4368 = vpop.xlane.xlu0 %4367
    %vm4369 = vcmp.ge.f32.partialorder %v4361, %v4365
    %vm4370 = vcmp.ge.f32.partialorder %v4362, %v4368
    %v4371 = vsel %vm4369, -1e+30, %v4361
    %v4372 = vsel %vm4370, -1e+30, %v4362
    %v4373 = vsel %vm211, %v4371, -inf
    %4374 = vmax.xlane.f32.xlu0 %v4373
    %v4375 = vpop.xlane.xlu0 %4374
    %v4376 = vsel %vm211, %v4372, -inf
    %4377 = vmax.xlane.f32.xlu0 %v4376
    %v4378 = vpop.xlane.xlu0 %4377
    %vm4379 = vcmp.ge.f32.partialorder %v4371, %v4375
    %vm4380 = vcmp.ge.f32.partialorder %v4372, %v4378
    %v4381 = vsel %vm4379, -1e+30, %v4371
    %v4382 = vsel %vm4380, -1e+30, %v4372
    %v4383 = vsel %vm211, %v4381, -inf
    %4384 = vmax.xlane.f32.xlu0 %v4383
    %v4385 = vpop.xlane.xlu0 %4384
    %v4386 = vsel %vm211, %v4382, -inf
    %4387 = vmax.xlane.f32.xlu0 %v4386
    %v4388 = vpop.xlane.xlu0 %4387
    %vm4389 = vcmp.ge.f32.partialorder %v4325, %v4385
    %vm4390 = vcmp.ge.f32.partialorder %v4330, %v4388
    %v4391 = vsel %vm4389, %v4325, 0.0
    %v4392 = vsel %vm4390, %v4330, 0.0
    %v4393 = vadd.f32 %v3911, %v4391
    %v4394 = vadd.f32 %v3912, %v4392
    %s4395 = scalar_lea.vmem %s3, 16
    %v4396 = vld [vmem:[%s4395] sm:$0xff]
    %v4397 = vsel %vm211, %v4393, 0.0
    %4398 = vadd.xlane.f32.xlu0 %v4397
    %v4399 = vpop.xlane.xlu0 %4398
    %v4400 = vsel %vm211, %v4394, 0.0
    %4401 = vadd.xlane.f32.xlu0 %v4400
    %v4402 = vpop.xlane.xlu0 %4401
    %v4403 = vmul.f32 %v4399, %v218
    %v4404 = vmul.f32 %v4402, %v218
    %v4405 = vsub.f32 %v4393, %v4403
    %v4406 = vsub.f32 %v4394, %v4404
    %v4407 = vmul.f32 %v4405, %v4405
    %v4408 = vmul.f32 %v4406, %v4406
    %v4409 = vsel %vm211, %v4407, 0.0
    %4410 = vadd.xlane.f32.xlu0 %v4409
    %v4411 = vpop.xlane.xlu0 %4410
    %v4412 = vsel %vm211, %v4408, 0.0
    %4413 = vadd.xlane.f32.xlu0 %v4412
    %v4414 = vpop.xlane.xlu0 %4413
    %v4415 = vmul.f32 %v4411, %v218
    %v4416 = vmul.f32 %v4414, %v218
    %v4417 = vadd.f32 %v4415, 1e-05
    %v4418 = vadd.f32 %v4416, 1e-05
    %v4419 = vrsqrt.pop %v4417
    %v4420 = vrsqrt.pop %v4418
    %v4421 = vmul.f32 %v4405, %v4419
    %v4422 = vmul.f32 %v4406, %v4420
    %v4423 = vlaneseq
    %v4424 = vshrl.u32 %v4423, 7
    %v4425 = vsub.s32 0, %v4424
    %v4426 = vrot.slane %v4396, %v4425
    %v4427 = vmul.f32 %v4421, %v4426
    %v4428 = vmul.f32 %v4422, %v4426
    %v4429 = vlaneseq
    %v4430 = vshrl.u32 %v4429, 7
    %v4431 = vsub.s32 1, %v4430
    %v4432 = vrot.slane %v4396, %v4431
    %v4433 = vadd.f32 %v4427, %v4432
    %v4434 = vadd.f32 %v4428, %v4432
    %v4435 = vld [vmem:[%s8] sm:$0xf]
    %v4436 = vld [vmem:[%s8 + $0x4] sm:$0xf]
    %v4437 = vld [vmem:[%s8 + $0x8] sm:$0xf]
    %v4438 = vld [vmem:[%s8 + $0xc] sm:$0xf]
    %v4439 = vunpack.c.l.bf16 %v4435
    %v4440 = vunpack.c.l.bf16 %v4436
    %v4441 = vunpack.c.l.bf16 %v4437
    %v4442 = vunpack.c.l.bf16 %v4438
    %v4444 = vsel %vm211, %v4433, 0
    %v4447 = vsel %vm211, %v4434, 0
    %4449 = vmatprep.subr.mxu0 0.0
    %4450 = vmatpush1.msra.mxu0 0.0
    %4451 = vmatprep.subr.mxu0 0.0
    %4452 = vmatpush1.msra.mxu0 0.0
    %4453 = vmatprep.subr.mxu0 0.0
    %4454 = vmatpush1.msra.mxu0 0.0
    %4455 = vmatprep.subr.mxu0 0.0
    %4456 = vmatpush1.msra.mxu0 0.0
    %4457 = vmatprep.subr.mxu0 0.0
    %4458 = vmatpush1.msra.mxu0 0.0
    %4459 = vmatprep.subr.mxu0 0.0
    %4460 = vmatpush1.msra.mxu0 0.0
    %4461 = vmatprep.subr.mxu0 0.0
    %4462 = vmatpush1.msra.mxu0 0.0
    %4463 = vmatprep.subr.mxu0 0.0
    %4464 = vmatpush1.msra.mxu0 0.0
    %4465 = vmatprep.subr.mxu0 0.0
    %4466 = vmatpush1.msra.mxu0 0.0
    %4467 = vmatprep.subr.mxu0 0.0
    %4468 = vmatpush1.msra.mxu0 0.0
    %4469 = vmatprep.subr.mxu0 0.0
    %4470 = vmatpush1.msra.mxu0 0.0
    %4471 = vmatprep.subr.mxu0 0.0
    %4472 = vmatpush1.msra.mxu0 0.0
    %4473 = vmatprep.subr.mxu0 0.0
    %4474 = vmatpush1.msra.mxu0 %v4442
    %4475 = vmatprep.subr.mxu0 0.0
    %4476 = vmatpush1.msra.mxu0 %v4441
    %4477 = vmatprep.subr.mxu0 0.0
    %4478 = vmatpush1.msra.mxu0 %v4440
    %4479 = vmatprep.subr.mxu0 0.0
    %4480 = vmatpush1.msra.mxu0 %v4439
    %4481 = vmatprep.subr.mxu0 0.0
    %4482 = vmatpush2.msra.mxu0 0.0
    %4483 = vmatprep.subr.mxu0 0.0
    %4484 = vmatpush2.msra.mxu0 0.0
    %4485 = vmatprep.subr.mxu0 0.0
    %4486 = vmatpush2.msra.mxu0 0.0
    %4487 = vmatprep.subr.mxu0 0.0
    %4488 = vmatpush2.msra.mxu0 0.0
    %4489 = vmatprep.subr.mxu0 0.0
    %4490 = vmatpush2.msra.mxu0 0.0
    %4491 = vmatprep.subr.mxu0 0.0
    %4492 = vmatpush2.msra.mxu0 0.0
    %4493 = vmatprep.subr.mxu0 0.0
    %4494 = vmatpush2.msra.mxu0 0.0
    %4495 = vmatprep.subr.mxu0 0.0
    %4496 = vmatpush2.msra.mxu0 0.0
    %4497 = vmatprep.subr.mxu0 0.0
    %4498 = vmatpush2.msra.mxu0 0.0
    %4499 = vmatprep.subr.mxu0 0.0
    %4500 = vmatpush2.msra.mxu0 0.0
    %4501 = vmatprep.subr.mxu0 0.0
    %4502 = vmatpush2.msra.mxu0 0.0
    %4503 = vmatprep.subr.mxu0 0.0
    %4504 = vmatpush2.msra.mxu0 0.0
    %4505 = vmatprep.subr.mxu0 0.0
    %4506 = vmatpush2.msra.mxu0 0.0
    %4507 = vmatprep.subr.mxu0 0.0
    %4508 = vmatpush2.msra.mxu0 0.0
    %4509 = vmatprep.subr.mxu0 0.0
    %4510 = vmatpush2.msra.mxu0 0.0
    %4511 = vmatprep.subr.mxu0 0.0
    %4512 = vmatpush2.msra.mxu0 0.0
    %4513 = vmatprep.mubr.f32.mxu0 0.0
    %4514 = vmatmul.mubr.f32.gmra.mxu0 %v4444
    %v4515 = vpop.f32.mrf.mxu0
    %v4516 = vadd.f32 0.0, %v4515
    %v4517 = vpop.f32.mrf.mxu0
    %4518 = vmatprep.mubr.f32.mxu0 0.0
    %4519 = vmatmul.mubr.f32.gmra.mxu0 %v4447
    %v4520 = vpop.f32.mrf.mxu0
    %v4521 = vadd.f32 0.0, %v4520
    %v4522 = vpop.f32.mrf.mxu0
    %4523 = vdwg.mxu0
    %4524 = vst [vmem:[#allocation2] sm:$0xff] %v4516
    %4525 = vst [vmem:[#allocation2 + $0x8] sm:$0xff] %v4521
    // Predicated region
    $region38: #{tpu_custom_call.1} parent=1 // pred_check
      _
    $region39: #{tpu_custom_call.1} parent=1 // pred_check_branch
      %4527 = sbr.rel (0) target = $region41
    $region40: #{tpu_custom_call.1} parent=1 // pred_region
      %s4529 = ssub.s32 256, 256
      %4530 = vsyncadd [#allocation3], %s4529
      %s4531 = sshll.u32 [#allocation2], 4
      %s4532 = int_to_ptr.vmem [resolvable:$true] %s4531
      %4537 = dma.vmem_to_hbm [thread:$0]  %s4532, 256, %s9, [#allocation3], 128, 128, 8
    $region41: #{tpu_custom_call.1} parent=1 // pred_fallthru
      _
    // Predicated region
    $region42: #{tpu_custom_call.1} parent=1 // pred_check
      _
    $region43: #{tpu_custom_call.1} parent=1 // pred_check_branch
      %4539 = sbr.rel (0) target = $region45
    $region44: #{tpu_custom_call.1} parent=1 // pred_region
      %4540 = dma.done [#allocation3], 256
    $region45: #{tpu_custom_call.1} parent=1 // pred_fallthru
      _
    %4541 = vsyncpa [#allocation3], 1

</llo_original>
